<compile_context>
chip_gen: v7x
topology: tpu7x:2x2x1
jax: 0.10.0
libtpu: 0.0.40
codegen_flags: <defaults>
</compile_context>

<pallas_src>
import functools

import jax
import jax.numpy as jnp
from jax import lax
from jax.experimental import pallas as pl
from jax.experimental.pallas import tpu as pltpu


def _inverted_residual_kernel(x_ref, w1_ref, b1_ref, wd_ref, b2_ref,
                              w3_ref, b3_ref, o_ref, buf_ref,
                              *, stride, use_res, expand):
    Bt, H, W, Cin = x_ref.shape
    Chid = wd_ref.shape[2]
    oup = w3_ref.shape[1]
    Ho, Wo = (H, W) if stride == 1 else (H // 2, W // 2)
    f32 = jnp.float32

    x = x_ref[...]                                   # (Bt, H, W, Cin)
    x2 = x.reshape(Bt * H * W, Cin)                  # major-dim merge only

    # ---- Stage 1: 1x1 expand conv (MXU) + folded-BN bias + ReLU6 -----------
    if expand:
        h2 = jnp.dot(x2.astype(w1_ref.dtype), w1_ref[...],
                     preferred_element_type=f32)
        h2 = jnp.clip(h2 + b1_ref[...], 0.0, 6.0)
        h = h2.reshape(Bt, H, W, Chid)
    else:
        h = x.astype(f32)

    # ---- Stage 2: 3x3 depthwise conv (pad=1, stride) + bias + ReLU6 --------
    # Zero-pad along H only (major axis: cheap, layout preserving).
    zrow = jnp.zeros((Bt, 1, W, Chid), h.dtype)
    hp = jnp.concatenate([zrow, h, zrow], axis=1)    # (Bt, H+2, W, Chid)

    wd = wd_ref[...]                                 # (3, 3, Chid), BN folded

    if stride == 1:
        rows = [hp[:, kh:kh + H] for kh in range(3)]          # major-axis slices
    else:
        # Only even output rows are needed: split padded rows by parity
        # (a pure major-dim regrouping, no relayout of the (W, C) tiles).
        hpr = hp.reshape(Bt, (H + 2) // 2, 2, W, Chid)
        hp_even = hpr[:, :, 0]                       # padded rows 0,2,...,H
        hp_odd = hpr[:, :, 1]                        # padded rows 1,3,...,H+1
        rows = [hp_even[:, 0:Ho], hp_odd[:, 0:Ho], hp_even[:, 1:Ho + 1]]

    # Combine the three vertical taps for each kernel column kw (per-channel FMA).
    g = [wd[0, kw] * rows[0] + wd[1, kw] * rows[1] + wd[2, kw] * rows[2]
         for kw in range(3)]                         # each (Bt, Ho, W, Chid)

    # Horizontal +/-1 taps (and the stride-2 column subsample) via a
    # zero-bordered VMEM scratch buffer: the slab sits in columns 1..W,
    # columns 0 and W+1 stay zero, so reading at offset 0/1/2 (stride 1 or 2)
    # yields the shifted / subsampled slab with correct zero boundaries.
    buf_ref[:, :, 0:1, :] = jnp.zeros((Bt, Ho, 1, Chid), f32)
    buf_ref[:, :, W + 1:W + 2, :] = jnp.zeros((Bt, Ho, 1, Chid), f32)

    if stride == 1:
        acc = g[1]                                   # center tap: no shift
        buf_ref[:, :, 1:W + 1, :] = g[0]
        acc = acc + buf_ref[:, :, 0:W, :]            # out[j] += g0[j-1]
        buf_ref[:, :, 1:W + 1, :] = g[2]
        acc = acc + buf_ref[:, :, 2:W + 2, :]        # out[j] += g2[j+1]
    else:
        # out[j] = g0[2j-1] + g1[2j] + g2[2j+1]; with buf[c] = slab[c-1] these
        # are strided sublane reads at offsets 0 / 1 / 2.
        buf_ref[:, :, 1:W + 1, :] = g[0]
        acc = buf_ref[:, :, pl.ds(0, Wo, 2), :]
        buf_ref[:, :, 1:W + 1, :] = g[1]
        acc = acc + buf_ref[:, :, pl.ds(1, Wo, 2), :]
        buf_ref[:, :, 1:W + 1, :] = g[2]
        acc = acc + buf_ref[:, :, pl.ds(2, Wo, 2), :]

    acc = jnp.clip(acc + b2_ref[...], 0.0, 6.0)      # (Bt, Ho, Wo, Chid)

    # ---- Stage 3: 1x1 pointwise (linear) conv (MXU) + bias ------------------
    acc2 = acc.reshape(Bt * Ho * Wo, Chid)
    y2 = jnp.dot(acc2.astype(w3_ref.dtype), w3_ref[...],
                 preferred_element_type=f32) + b3_ref[...]
    if use_res:
        y2 = y2 + x2.astype(f32)

    o_ref[...] = y2.reshape(Bt, Ho, Wo, oup).astype(o_ref.dtype)


def _fold_bn(gamma, beta, mean, var, eps=1e-5):
    scale = gamma / jnp.sqrt(var + eps)
    bias = beta - mean * scale
    return scale, bias


def _pick_batch_tile(n, max_tile=8):
    for bt in range(min(n, max_tile), 0, -1):
        if n % bt == 0:
            return bt
    return 1


def make_inverted_residual_params(key, inp, oup, expand_ratio):
    """Deterministic synthetic params matching the PyTorch module's shapes."""
    hidden = int(round(inp * expand_ratio))
    ks = jax.random.split(key, 6)

    def bn(k, c):
        kg, kb, km, kv = jax.random.split(k, 4)
        gamma = 1.0 + 0.1 * jax.random.normal(kg, (c,), jnp.float32)
        beta = 0.1 * jax.random.normal(kb, (c,), jnp.float32)
        mean = 0.1 * jax.random.normal(km, (c,), jnp.float32)
        var = 1.0 + 0.05 * jnp.abs(jax.random.normal(kv, (c,), jnp.float32))
        return gamma, beta, mean, var

    return {
        # expand 1x1: PyTorch (hidden, inp, 1, 1) -> (inp, hidden)
        "w1": 0.1 * jax.random.normal(ks[0], (inp, hidden), jnp.float32),
        "bn1": bn(ks[1], hidden),
        # depthwise 3x3: PyTorch (hidden, 1, 3, 3) -> (3, 3, hidden)
        "wd": 0.1 * jax.random.normal(ks[2], (3, 3, hidden), jnp.float32),
        "bn2": bn(ks[3], hidden),
        # pointwise 1x1: PyTorch (oup, hidden, 1, 1) -> (hidden, oup)
        "w3": 0.1 * jax.random.normal(ks[4], (hidden, oup), jnp.float32),
        "bn3": bn(ks[5], oup),
        "hidden": hidden,
    }


def inverted_residual(x_nchw, params, *, inp, oup, stride, expand_ratio,
                      matmul_dtype=jnp.float32):
    assert stride in (1, 2)
    hidden = params["hidden"]
    expand = expand_ratio != 1
    use_res = (stride == 1) and (inp == oup)

    N, Cin, H, W = x_nchw.shape
    assert Cin == inp
    if stride == 2:
        # PyTorch would produce (H+1)//2 for odd sizes; this kernel handles the
        # (standard MobileNetV2) even case.
        assert H % 2 == 0 and W % 2 == 0, "stride-2 path requires even H, W"
    Ho, Wo = (H, W) if stride == 1 else (H // 2, W // 2)

    x = jnp.transpose(x_nchw, (0, 2, 3, 1)).astype(jnp.float32)  # NHWC

    # Fold BN scales into conv weights (per output channel); only bias adds
    # remain in the kernel.
    s1, b1 = _fold_bn(*params["bn1"])
    s2, b2 = _fold_bn(*params["bn2"])
    s3, b3 = _fold_bn(*params["bn3"])
    w1 = (params["w1"] * s1[None, :]).astype(matmul_dtype)       # (inp, hidden)
    wd = (params["wd"] * s2[None, None, :]).astype(jnp.float32)  # (3, 3, hidden)
    w3 = (params["w3"] * s3[None, :]).astype(matmul_dtype)       # (hidden, oup)
    b1 = b1.reshape(1, hidden).astype(jnp.float32)
    b2 = b2.reshape(1, hidden).astype(jnp.float32)
    b3 = b3.reshape(1, oup).astype(jnp.float32)

    bt = _pick_batch_tile(N)
    kernel = functools.partial(_inverted_residual_kernel,
                               stride=stride, use_res=use_res, expand=expand)

    full2 = lambda n: (0, 0)
    full3 = lambda n: (0, 0, 0)

    mm1_flops = 2 * N * H * W * inp * hidden if expand else 0
    dw_flops = 2 * 9 * N * Ho * Wo * hidden
    mm3_flops = 2 * N * Ho * Wo * hidden * oup
    bytes_accessed = 4 * (x.size + N * Ho * Wo * oup
                          + w1.size + wd.size + w3.size)
    cost = pl.CostEstimate(flops=int(mm1_flops + dw_flops + mm3_flops),
                           transcendentals=0,
                           bytes_accessed=int(bytes_accessed))

    out_nhwc = pl.pallas_call(
        kernel,
        out_shape=jax.ShapeDtypeStruct((N, Ho, Wo, oup), jnp.float32),
        grid_spec=pltpu.PrefetchScalarGridSpec(
            num_scalar_prefetch=0,
            grid=(N // bt,),
            in_specs=[
                pl.BlockSpec((bt, H, W, inp), lambda n: (n, 0, 0, 0)),
                pl.BlockSpec((inp, hidden), full2),
                pl.BlockSpec((1, hidden), full2),
                pl.BlockSpec((3, 3, hidden), full3),
                pl.BlockSpec((1, hidden), full2),
                pl.BlockSpec((hidden, oup), full2),
                pl.BlockSpec((1, oup), full2),
            ],
            out_specs=pl.BlockSpec((bt, Ho, Wo, oup), lambda n: (n, 0, 0, 0)),
            # zero-bordered column-shift buffer for the depthwise conv
            scratch_shapes=[pltpu.VMEM((bt, Ho, W + 2, hidden), jnp.float32)],
        ),
        compiler_params=pltpu.CompilerParams(
            dimension_semantics=("parallel",),
            vmem_limit_bytes=32 * 1024 * 1024),
        cost_estimate=cost,
    )(x, w1, b1, wd, b2, w3, b3)

    return jnp.transpose(out_nhwc, (0, 3, 1, 2))  # back to NCHW


# ---------------- pure-JAX reference (NHWC convs) for correctness check ------
def _reference(x_nchw, params, *, inp, oup, stride, expand_ratio):
    hidden = params["hidden"]
    use_res = (stride == 1) and (inp == oup)
    x = jnp.transpose(x_nchw, (0, 2, 3, 1)).astype(jnp.float32)

    s1, b1 = _fold_bn(*params["bn1"])
    s2, b2 = _fold_bn(*params["bn2"])
    s3, b3 = _fold_bn(*params["bn3"])
    dn = ("NHWC", "HWIO", "NHWC")

    h = x
    if expand_ratio != 1:
        w = params["w1"].reshape(1, 1, inp, hidden)
        h = lax.conv_general_dilated(h, w, (1, 1), "VALID",
                                     dimension_numbers=dn)
        h = jnp.clip(h * s1 + b1, 0.0, 6.0)

    wd = params["wd"].reshape(3, 3, 1, hidden)
    h = lax.conv_general_dilated(h, wd, (stride, stride), ((1, 1), (1, 1)),
                                 dimension_numbers=dn,
                                 feature_group_count=hidden)
    h = jnp.clip(h * s2 + b2, 0.0, 6.0)

    w3 = params["w3"].reshape(1, 1, hidden, oup)
    y = lax.conv_general_dilated(h, w3, (1, 1), "VALID",
                                 dimension_numbers=dn)
    y = y * s3 + b3
    if use_res:
        y = y + x
    return jnp.transpose(y, (0, 3, 1, 2))


if __name__ == "__main__":
    key = jax.random.PRNGKey(0)

    configs = [
        # (N, inp, oup, H, W, stride, expand_ratio)
        (2, 8, 8, 16, 16, 1, 4),    # expansion + residual connection
        (2, 8, 16, 16, 16, 2, 6),   # stride-2 downsampling block
        (2, 16, 16, 16, 16, 1, 1),  # expand_ratio == 1 (no expand conv) + residual
    ]
    for i, (N, inp, oup, H, W, stride, er) in enumerate(configs):
        k_x, k_p = jax.random.split(jax.random.fold_in(key, i))
        x = jax.random.normal(k_x, (N, inp, H, W), jnp.float32)  # NCHW like PyTorch
        params = make_inverted_residual_params(k_p, inp, oup, er)

        out = inverted_residual(x, params, inp=inp, oup=oup,
                                stride=stride, expand_ratio=er)
        out = jax.block_until_ready(out)

        ref = _reference(x, params, inp=inp, oup=oup,
                         stride=stride, expand_ratio=er)
        ref = jax.block_until_ready(ref)

        Ho, Wo = (H, W) if stride == 1 else (H // 2, W // 2)
        assert out.shape == (N, oup, Ho, Wo)
        assert jnp.allclose(out, ref, atol=1e-3, rtol=1e-3), \
            f"config {i}: max err {jnp.max(jnp.abs(out - ref))}"

    print("KERNEL_OK")
</pallas_src>

<mosaic_0001>
module attributes {stable_mosaic.version = 11 : i64} {
  func.func @_inverted_residual_kernel(%arg0: i32, %arg1: memref<2x16x16x8xf32, #tpu.memory_space<vmem>>, %arg2: memref<8x32xf32, #tpu.memory_space<vmem>>, %arg3: memref<1x32xf32, #tpu.memory_space<vmem>>, %arg4: memref<3x3x32xf32, #tpu.memory_space<vmem>>, %arg5: memref<1x32xf32, #tpu.memory_space<vmem>>, %arg6: memref<32x8xf32, #tpu.memory_space<vmem>>, %arg7: memref<1x8xf32, #tpu.memory_space<vmem>>, %arg8: memref<2x16x16x8xf32, #tpu.memory_space<vmem>>, %arg9: memref<2x16x18x32xf32, #tpu.memory_space<vmem>>) attributes {dimension_semantics = [#tpu.dimension_semantics<parallel>], iteration_bounds = array<i64: 1>, scalar_prefetch = 0 : i64, scratch_operands = 1 : i64, tpu.core_type = #tpu.core_type<tc>, window_params = [{transform_indices = @transform_0, window_bounds = array<i64: 2, 16, 16, 8>}, {pipeline_mode = #tpu.pipeline_mode<synchronous>, transform_indices = @transform_1, window_bounds = array<i64: 8, 32>}, {pipeline_mode = #tpu.pipeline_mode<synchronous>, transform_indices = @transform_2, window_bounds = array<i64: 1, 32>}, {pipeline_mode = #tpu.pipeline_mode<synchronous>, transform_indices = @transform_3, window_bounds = array<i64: 3, 3, 32>}, {pipeline_mode = #tpu.pipeline_mode<synchronous>, transform_indices = @transform_4, window_bounds = array<i64: 1, 32>}, {pipeline_mode = #tpu.pipeline_mode<synchronous>, transform_indices = @transform_5, window_bounds = array<i64: 32, 8>}, {pipeline_mode = #tpu.pipeline_mode<synchronous>, transform_indices = @transform_6, window_bounds = array<i64: 1, 8>}, {transform_indices = @transform_7, window_bounds = array<i64: 2, 16, 16, 8>}]} {
    %c0 = arith.constant 0 : index
    %c0_0 = arith.constant 0 : index
    %c0_1 = arith.constant 0 : index
    %c0_2 = arith.constant 0 : index
    %0 = vector.load %arg1[%c0, %c0_0, %c0_1, %c0_2] : memref<2x16x16x8xf32, #tpu.memory_space<vmem>>, vector<2x16x16x8xf32>
    %1 = vector.shape_cast %0 : vector<2x16x16x8xf32> to vector<512x8xf32>
    %c0_3 = arith.constant 0 : index
    %c0_4 = arith.constant 0 : index
    %2 = vector.load %arg2[%c0_3, %c0_4] : memref<8x32xf32, #tpu.memory_space<vmem>>, vector<8x32xf32>
    %cst = arith.constant dense<0.000000e+00> : vector<512x32xf32>
    %3 = tpu.matmul %1, %2, %cst {dimension_numbers = #tpu.dot_dimension_numbers<[1], [0], [0], [1], [0, 0, 1, 1], [], []>} : vector<512x8xf32>, vector<8x32xf32>, vector<512x32xf32> -> vector<512x32xf32>
    %c0_5 = arith.constant 0 : index
    %c0_6 = arith.constant 0 : index
    %4 = vector.load %arg3[%c0_5, %c0_6] : memref<1x32xf32, #tpu.memory_space<vmem>>, vector<1x32xf32>
    %5 = vector.broadcast %4 : vector<1x32xf32> to vector<512x32xf32>
    %6 = arith.addf %3, %5 : vector<512x32xf32>
    %cst_7 = arith.constant 0.000000e+00 : f32
    %cst_8 = arith.constant 6.000000e+00 : f32
    %7 = vector.broadcast %cst_7 : f32 to vector<512x32xf32>
    %8 = arith.maximumf %7, %6 : vector<512x32xf32>
    %9 = vector.broadcast %cst_8 : f32 to vector<512x32xf32>
    %10 = arith.minimumf %9, %8 : vector<512x32xf32>
    %11 = vector.shape_cast %10 : vector<512x32xf32> to vector<2x16x16x32xf32>
    %cst_9 = arith.constant 0.000000e+00 : f32
    %12 = vector.broadcast %cst_9 : f32 to vector<2x1x16x32xf32>
    %13 = tpu.concatenate %12, %11, %12 in 1 : vector<2x1x16x32xf32>, vector<2x16x16x32xf32>, vector<2x1x16x32xf32> -> vector<2x18x16x32xf32>
    %c0_10 = arith.constant 0 : index
    %c0_11 = arith.constant 0 : index
    %c0_12 = arith.constant 0 : index
    %14 = vector.load %arg4[%c0_10, %c0_11, %c0_12] : memref<3x3x32xf32, #tpu.memory_space<vmem>>, vector<3x3x32xf32>
    %15 = vector.extract_strided_slice %13 {offsets = [0, 0, 0, 0], sizes = [2, 16, 16, 32], strides = [1, 1, 1, 1]} : vector<2x18x16x32xf32> to vector<2x16x16x32xf32>
    %16 = vector.extract_strided_slice %13 {offsets = [0, 1, 0, 0], sizes = [2, 16, 16, 32], strides = [1, 1, 1, 1]} : vector<2x18x16x32xf32> to vector<2x16x16x32xf32>
    %17 = vector.extract_strided_slice %13 {offsets = [0, 2, 0, 0], sizes = [2, 16, 16, 32], strides = [1, 1, 1, 1]} : vector<2x18x16x32xf32> to vector<2x16x16x32xf32>
    %18 = vector.extract_strided_slice %14 {offsets = [0, 0, 0], sizes = [1, 1, 32], strides = [1, 1, 1]} : vector<3x3x32xf32> to vector<1x1x32xf32>
    %19 = vector.shape_cast %18 : vector<1x1x32xf32> to vector<32xf32>
    %20 = vector.shape_cast %19 : vector<32xf32> to vector<1x1x1x32xf32>
    %21 = vector.broadcast %20 : vector<1x1x1x32xf32> to vector<2x16x16x32xf32>
    %22 = arith.mulf %21, %15 : vector<2x16x16x32xf32>
    %23 = vector.extract_strided_slice %14 {offsets = [1, 0, 0], sizes = [1, 1, 32], strides = [1, 1, 1]} : vector<3x3x32xf32> to vector<1x1x32xf32>
    %24 = vector.shape_cast %23 : vector<1x1x32xf32> to vector<32xf32>
    %25 = vector.shape_cast %24 : vector<32xf32> to vector<1x1x1x32xf32>
    %26 = vector.broadcast %25 : vector<1x1x1x32xf32> to vector<2x16x16x32xf32>
    %27 = arith.mulf %26, %16 : vector<2x16x16x32xf32>
    %28 = arith.addf %22, %27 : vector<2x16x16x32xf32>
    %29 = vector.extract_strided_slice %14 {offsets = [2, 0, 0], sizes = [1, 1, 32], strides = [1, 1, 1]} : vector<3x3x32xf32> to vector<1x1x32xf32>
    %30 = vector.shape_cast %29 : vector<1x1x32xf32> to vector<32xf32>
    %31 = vector.shape_cast %30 : vector<32xf32> to vector<1x1x1x32xf32>
    %32 = vector.broadcast %31 : vector<1x1x1x32xf32> to vector<2x16x16x32xf32>
    %33 = arith.mulf %32, %17 : vector<2x16x16x32xf32>
    %34 = arith.addf %28, %33 : vector<2x16x16x32xf32>
    %35 = vector.extract_strided_slice %14 {offsets = [0, 1, 0], sizes = [1, 1, 32], strides = [1, 1, 1]} : vector<3x3x32xf32> to vector<1x1x32xf32>
    %36 = vector.shape_cast %35 : vector<1x1x32xf32> to vector<32xf32>
    %37 = vector.shape_cast %36 : vector<32xf32> to vector<1x1x1x32xf32>
    %38 = vector.broadcast %37 : vector<1x1x1x32xf32> to vector<2x16x16x32xf32>
    %39 = arith.mulf %38, %15 : vector<2x16x16x32xf32>
    %40 = vector.extract_strided_slice %14 {offsets = [1, 1, 0], sizes = [1, 1, 32], strides = [1, 1, 1]} : vector<3x3x32xf32> to vector<1x1x32xf32>
    %41 = vector.shape_cast %40 : vector<1x1x32xf32> to vector<32xf32>
    %42 = vector.shape_cast %41 : vector<32xf32> to vector<1x1x1x32xf32>
    %43 = vector.broadcast %42 : vector<1x1x1x32xf32> to vector<2x16x16x32xf32>
    %44 = arith.mulf %43, %16 : vector<2x16x16x32xf32>
    %45 = arith.addf %39, %44 : vector<2x16x16x32xf32>
    %46 = vector.extract_strided_slice %14 {offsets = [2, 1, 0], sizes = [1, 1, 32], strides = [1, 1, 1]} : vector<3x3x32xf32> to vector<1x1x32xf32>
    %47 = vector.shape_cast %46 : vector<1x1x32xf32> to vector<32xf32>
    %48 = vector.shape_cast %47 : vector<32xf32> to vector<1x1x1x32xf32>
    %49 = vector.broadcast %48 : vector<1x1x1x32xf32> to vector<2x16x16x32xf32>
    %50 = arith.mulf %49, %17 : vector<2x16x16x32xf32>
    %51 = arith.addf %45, %50 : vector<2x16x16x32xf32>
    %52 = vector.extract_strided_slice %14 {offsets = [0, 2, 0], sizes = [1, 1, 32], strides = [1, 1, 1]} : vector<3x3x32xf32> to vector<1x1x32xf32>
    %53 = vector.shape_cast %52 : vector<1x1x32xf32> to vector<32xf32>
    %54 = vector.shape_cast %53 : vector<32xf32> to vector<1x1x1x32xf32>
    %55 = vector.broadcast %54 : vector<1x1x1x32xf32> to vector<2x16x16x32xf32>
    %56 = arith.mulf %55, %15 : vector<2x16x16x32xf32>
    %57 = vector.extract_strided_slice %14 {offsets = [1, 2, 0], sizes = [1, 1, 32], strides = [1, 1, 1]} : vector<3x3x32xf32> to vector<1x1x32xf32>
    %58 = vector.shape_cast %57 : vector<1x1x32xf32> to vector<32xf32>
    %59 = vector.shape_cast %58 : vector<32xf32> to vector<1x1x1x32xf32>
    %60 = vector.broadcast %59 : vector<1x1x1x32xf32> to vector<2x16x16x32xf32>
    %61 = arith.mulf %60, %16 : vector<2x16x16x32xf32>
    %62 = arith.addf %56, %61 : vector<2x16x16x32xf32>
    %63 = vector.extract_strided_slice %14 {offsets = [2, 2, 0], sizes = [1, 1, 32], strides = [1, 1, 1]} : vector<3x3x32xf32> to vector<1x1x32xf32>
    %64 = vector.shape_cast %63 : vector<1x1x32xf32> to vector<32xf32>
    %65 = vector.shape_cast %64 : vector<32xf32> to vector<1x1x1x32xf32>
    %66 = vector.broadcast %65 : vector<1x1x1x32xf32> to vector<2x16x16x32xf32>
    %67 = arith.mulf %66, %17 : vector<2x16x16x32xf32>
    %68 = arith.addf %62, %67 : vector<2x16x16x32xf32>
    %cst_13 = arith.constant 0.000000e+00 : f32
    %69 = vector.broadcast %cst_13 : f32 to vector<2x16x1x32xf32>
    %c0_14 = arith.constant 0 : index
    %c0_15 = arith.constant 0 : index
    %c0_16 = arith.constant 0 : index
    %c0_17 = arith.constant 0 : index
    %70 = vector.load %arg9[%c0_14, %c0_15, %c0_16, %c0_17] : memref<2x16x18x32xf32, #tpu.memory_space<vmem>>, vector<2x16x1x32xf32>
    tpu.vector_store %arg9[%c0_14, %c0_15, %c0_16, %c0_17], %69 {strides = array<i32>} : memref<2x16x18x32xf32, #tpu.memory_space<vmem>>, vector<2x16x1x32xf32>,
    %cst_18 = arith.constant 0.000000e+00 : f32
    %71 = vector.broadcast %cst_18 : f32 to vector<2x16x1x32xf32>
    %c0_19 = arith.constant 0 : index
    %c0_20 = arith.constant 0 : index
    %c17 = arith.constant 17 : index
    %c0_21 = arith.constant 0 : index
    %72 = vector.load %arg9[%c0_19, %c0_20, %c17, %c0_21] : memref<2x16x18x32xf32, #tpu.memory_space<vmem>>, vector<2x16x1x32xf32>
    tpu.vector_store %arg9[%c0_19, %c0_20, %c17, %c0_21], %71 {strides = array<i32>} : memref<2x16x18x32xf32, #tpu.memory_space<vmem>>, vector<2x16x1x32xf32>,
    %c0_22 = arith.constant 0 : index
    %c0_23 = arith.constant 0 : index
    %c1 = arith.constant 1 : index
    %c0_24 = arith.constant 0 : index
    %73 = vector.load %arg9[%c0_22, %c0_23, %c1, %c0_24] : memref<2x16x18x32xf32, #tpu.memory_space<vmem>>, vector<2x16x16x32xf32>
    tpu.vector_store %arg9[%c0_22, %c0_23, %c1, %c0_24], %34 {strides = array<i32>} : memref<2x16x18x32xf32, #tpu.memory_space<vmem>>, vector<2x16x16x32xf32>,
    %c0_25 = arith.constant 0 : index
    %c0_26 = arith.constant 0 : index
    %c0_27 = arith.constant 0 : index
    %c0_28 = arith.constant 0 : index
    %74 = vector.load %arg9[%c0_25, %c0_26, %c0_27, %c0_28] : memref<2x16x18x32xf32, #tpu.memory_space<vmem>>, vector<2x16x16x32xf32>
    %75 = arith.addf %51, %74 : vector<2x16x16x32xf32>
    %c0_29 = arith.constant 0 : index
    %c0_30 = arith.constant 0 : index
    %c1_31 = arith.constant 1 : index
    %c0_32 = arith.constant 0 : index
    %76 = vector.load %arg9[%c0_29, %c0_30, %c1_31, %c0_32] : memref<2x16x18x32xf32, #tpu.memory_space<vmem>>, vector<2x16x16x32xf32>
    tpu.vector_store %arg9[%c0_29, %c0_30, %c1_31, %c0_32], %68 {strides = array<i32>} : memref<2x16x18x32xf32, #tpu.memory_space<vmem>>, vector<2x16x16x32xf32>,
    %c0_33 = arith.constant 0 : index
    %c0_34 = arith.constant 0 : index
    %c2 = arith.constant 2 : index
    %c0_35 = arith.constant 0 : index
    %77 = vector.load %arg9[%c0_33, %c0_34, %c2, %c0_35] : memref<2x16x18x32xf32, #tpu.memory_space<vmem>>, vector<2x16x16x32xf32>
    %78 = arith.addf %75, %77 : vector<2x16x16x32xf32>
    %c0_36 = arith.constant 0 : index
    %c0_37 = arith.constant 0 : index
    %79 = vector.load %arg5[%c0_36, %c0_37] : memref<1x32xf32, #tpu.memory_space<vmem>>, vector<1x32xf32>
    %80 = vector.shape_cast %79 : vector<1x32xf32> to vector<1x1x1x32xf32>
    %81 = vector.broadcast %80 : vector<1x1x1x32xf32> to vector<2x16x16x32xf32>
    %82 = arith.addf %78, %81 : vector<2x16x16x32xf32>
    %cst_38 = arith.constant 0.000000e+00 : f32
    %cst_39 = arith.constant 6.000000e+00 : f32
    %83 = vector.broadcast %cst_38 : f32 to vector<2x16x16x32xf32>
    %84 = arith.maximumf %83, %82 : vector<2x16x16x32xf32>
    %85 = vector.broadcast %cst_39 : f32 to vector<2x16x16x32xf32>
    %86 = arith.minimumf %85, %84 : vector<2x16x16x32xf32>
    %87 = vector.shape_cast %86 : vector<2x16x16x32xf32> to vector<512x32xf32>
    %c0_40 = arith.constant 0 : index
    %c0_41 = arith.constant 0 : index
    %88 = vector.load %arg6[%c0_40, %c0_41] : memref<32x8xf32, #tpu.memory_space<vmem>>, vector<32x8xf32>
    %cst_42 = arith.constant dense<0.000000e+00> : vector<512x8xf32>
    %89 = tpu.matmul %87, %88, %cst_42 {dimension_numbers = #tpu.dot_dimension_numbers<[1], [0], [0], [1], [0, 0, 1, 1], [], []>} : vector<512x32xf32>, vector<32x8xf32>, vector<512x8xf32> -> vector<512x8xf32>
    %c0_43 = arith.constant 0 : index
    %c0_44 = arith.constant 0 : index
    %90 = vector.load %arg7[%c0_43, %c0_44] : memref<1x8xf32, #tpu.memory_space<vmem>>, vector<1x8xf32>
    %91 = vector.broadcast %90 : vector<1x8xf32> to vector<512x8xf32>
    %92 = arith.addf %89, %91 : vector<512x8xf32>
    %93 = arith.addf %92, %1 : vector<512x8xf32>
    %94 = vector.shape_cast %93 : vector<512x8xf32> to vector<2x16x16x8xf32>
    %c0_45 = arith.constant 0 : index
    %c0_46 = arith.constant 0 : index
    %c0_47 = arith.constant 0 : index
    %c0_48 = arith.constant 0 : index
    %95 = vector.load %arg8[%c0_45, %c0_46, %c0_47, %c0_48] : memref<2x16x16x8xf32, #tpu.memory_space<vmem>>, vector<2x16x16x8xf32>
    tpu.vector_store %arg8[%c0_45, %c0_46, %c0_47, %c0_48], %94 {strides = array<i32>} : memref<2x16x16x8xf32, #tpu.memory_space<vmem>>, vector<2x16x16x8xf32>,
    return
  }
  func.func @transform_0(%arg0: i32) -> (i32, i32, i32, i32) {
    %c0_i32 = arith.constant 0 : i32
    %c0_i32_0 = arith.constant 0 : i32
    %c0_i32_1 = arith.constant 0 : i32
    %c0_i32_2 = arith.constant 0 : i32
    return %arg0, %c0_i32, %c0_i32_0, %c0_i32_1 : i32, i32, i32, i32
  }
  func.func @transform_1(%arg0: i32) -> (i32, i32) {
    %c0_i32 = arith.constant 0 : i32
    %c0_i32_0 = arith.constant 0 : i32
    %c0_i32_1 = arith.constant 0 : i32
    return %c0_i32, %c0_i32_0 : i32, i32
  }
  func.func @transform_2(%arg0: i32) -> (i32, i32) {
    %c0_i32 = arith.constant 0 : i32
    %c0_i32_0 = arith.constant 0 : i32
    %c0_i32_1 = arith.constant 0 : i32
    return %c0_i32, %c0_i32_0 : i32, i32
  }
  func.func @transform_3(%arg0: i32) -> (i32, i32, i32) {
    %c0_i32 = arith.constant 0 : i32
    %c0_i32_0 = arith.constant 0 : i32
    %c0_i32_1 = arith.constant 0 : i32
    %c0_i32_2 = arith.constant 0 : i32
    return %c0_i32, %c0_i32_0, %c0_i32_1 : i32, i32, i32
  }
  func.func @transform_4(%arg0: i32) -> (i32, i32) {
    %c0_i32 = arith.constant 0 : i32
    %c0_i32_0 = arith.constant 0 : i32
    %c0_i32_1 = arith.constant 0 : i32
    return %c0_i32, %c0_i32_0 : i32, i32
  }
  func.func @transform_5(%arg0: i32) -> (i32, i32) {
    %c0_i32 = arith.constant 0 : i32
    %c0_i32_0 = arith.constant 0 : i32
    %c0_i32_1 = arith.constant 0 : i32
    return %c0_i32, %c0_i32_0 : i32, i32
  }
  func.func @transform_6(%arg0: i32) -> (i32, i32) {
    %c0_i32 = arith.constant 0 : i32
    %c0_i32_0 = arith.constant 0 : i32
    %c0_i32_1 = arith.constant 0 : i32
    return %c0_i32, %c0_i32_0 : i32, i32
  }
  func.func @transform_7(%arg0: i32) -> (i32, i32, i32, i32) {
    %c0_i32 = arith.constant 0 : i32
    %c0_i32_0 = arith.constant 0 : i32
    %c0_i32_1 = arith.constant 0 : i32
    %c0_i32_2 = arith.constant 0 : i32
    return %arg0, %c0_i32, %c0_i32_0, %c0_i32_1 : i32, i32, i32, i32
  }
}

</mosaic_0001>

<llo_original>
// kernel: tpu_custom_call.1
$region0: #{tpu_custom_call.1}
  #allocation0 [shape = 'u32[]', space=smem, size = 0x4, offset = 0x4, fixed_abs, tag = 'smem constant byte address 0x4 - core index']
  #allocation1 [shape = 'u32[144,128]{1,0:T(1,128)}', space=vmem, size = 0x12000, scoped, tag = 'internal scratch']
  #allocation2 [shape = 'f32[2,16,18,32]{3,2,1,0:T(8,128)}', space=vmem, size = 0x60000, scoped, tag = 'scratch operand']
  %s0 = inlined_call_operand.vmem [shape: f32[2,16,16,8], index: 0, kind: input, shape index: {}]
  %s1 = inlined_call_operand.vmem [shape: f32[8,32], index: 1, kind: input, shape index: {}]
  %s2 = inlined_call_operand.vmem [shape: f32[1,32], index: 2, kind: input, shape index: {}]
  %s3 = inlined_call_operand.vmem [shape: f32[3,3,32], index: 3, kind: input, shape index: {}]
  %s4 = inlined_call_operand.vmem [shape: f32[1,32], index: 4, kind: input, shape index: {}]
  %s5 = inlined_call_operand.vmem [shape: f32[32,8], index: 5, kind: input, shape index: {}]
  %s6 = inlined_call_operand.vmem [shape: f32[1,8], index: 6, kind: input, shape index: {}]
  %s7 = inlined_call_operand.vmem [shape: f32[2,16,16,8], index: 7, kind: output, shape index: {}]
  %s8 = sld [smem:[#allocation0]]
  $region38: #{tpu_custom_call.1} parent=0
    _
  %s10 = ssub.s32 1, %s8
  %s11 = scalar_select 0, %s10, %s8
  // Predicated region
  $region2: #{tpu_custom_call.1} parent=0 // pred_check
    _
  $region3: #{tpu_custom_call.1} parent=0 // pred_check_branch
    %13 = sbr.rel (0) target = $region5
  $region4: #{tpu_custom_call.1} parent=0 // pred_region
    _
  $region5: #{tpu_custom_call.1} parent=0 // pred_fallthru
    _
  // Predicated region
  $region6: #{tpu_custom_call.1} parent=0 // pred_check
    _
  $region7: #{tpu_custom_call.1} parent=0 // pred_check_branch
    %15 = sbr.rel (0) target = $region9
  $region8: #{tpu_custom_call.1} parent=0 // pred_region
    _
  $region9: #{tpu_custom_call.1} parent=0 // pred_fallthru
    _
  // Predicated region
  $region10: #{tpu_custom_call.1} parent=0 // pred_check
    _
  $region11: #{tpu_custom_call.1} parent=0 // pred_check_branch
    %17 = sbr.rel (0) target = $region13
  $region12: #{tpu_custom_call.1} parent=0 // pred_region
    _
  $region13: #{tpu_custom_call.1} parent=0 // pred_fallthru
    _
  // Predicated region
  $region14: #{tpu_custom_call.1} parent=0 // pred_check
    _
  $region15: #{tpu_custom_call.1} parent=0 // pred_check_branch
    %19 = sbr.rel (0) target = $region17
  $region16: #{tpu_custom_call.1} parent=0 // pred_region
    _
  $region17: #{tpu_custom_call.1} parent=0 // pred_fallthru
    _
  // Predicated region
  $region18: #{tpu_custom_call.1} parent=0 // pred_check
    _
  $region19: #{tpu_custom_call.1} parent=0 // pred_check_branch
    %21 = sbr.rel (0) target = $region21
  $region20: #{tpu_custom_call.1} parent=0 // pred_region
    _
  $region21: #{tpu_custom_call.1} parent=0 // pred_fallthru
    _
  // Predicated region
  $region22: #{tpu_custom_call.1} parent=0 // pred_check
    _
  $region23: #{tpu_custom_call.1} parent=0 // pred_check_branch
    %23 = sbr.rel (0) target = $region25
  $region24: #{tpu_custom_call.1} parent=0 // pred_region
    _
  $region25: #{tpu_custom_call.1} parent=0 // pred_fallthru
    _
  // Predicated region
  $region26: #{tpu_custom_call.1} parent=0 // pred_check
    _
  $region27: #{tpu_custom_call.1} parent=0 // pred_check_branch
    %25 = sbr.rel (0) target = $region29
  $region28: #{tpu_custom_call.1} parent=0 // pred_region
    _
  $region29: #{tpu_custom_call.1} parent=0 // pred_fallthru
    _
  %v26 = vld [vmem:[%s0] sm:$0xff]
  %v27 = vld [vmem:[%s0 + $0x8] sm:$0xff]
  %v28 = vld [vmem:[%s0 + $0x10] sm:$0xff]
  %v29 = vld [vmem:[%s0 + $0x18] sm:$0xff]
  %v30 = vld [vmem:[%s0 + $0x20] sm:$0xff]
  %v31 = vld [vmem:[%s0 + $0x28] sm:$0xff]
  %v32 = vld [vmem:[%s0 + $0x30] sm:$0xff]
  %v33 = vld [vmem:[%s0 + $0x38] sm:$0xff]
  %v34 = vld [vmem:[%s0 + $0x40] sm:$0xff]
  %v35 = vld [vmem:[%s0 + $0x48] sm:$0xff]
  %v36 = vld [vmem:[%s0 + $0x50] sm:$0xff]
  %v37 = vld [vmem:[%s0 + $0x58] sm:$0xff]
  %v38 = vld [vmem:[%s0 + $0x60] sm:$0xff]
  %v39 = vld [vmem:[%s0 + $0x68] sm:$0xff]
  %v40 = vld [vmem:[%s0 + $0x70] sm:$0xff]
  %v41 = vld [vmem:[%s0 + $0x78] sm:$0xff]
  %v42 = vld [vmem:[%s0 + $0x80] sm:$0xff]
  %v43 = vld [vmem:[%s0 + $0x88] sm:$0xff]
  %v44 = vld [vmem:[%s0 + $0x90] sm:$0xff]
  %v45 = vld [vmem:[%s0 + $0x98] sm:$0xff]
  %v46 = vld [vmem:[%s0 + $0xa0] sm:$0xff]
  %v47 = vld [vmem:[%s0 + $0xa8] sm:$0xff]
  %v48 = vld [vmem:[%s0 + $0xb0] sm:$0xff]
  %v49 = vld [vmem:[%s0 + $0xb8] sm:$0xff]
  %v50 = vld [vmem:[%s0 + $0xc0] sm:$0xff]
  %v51 = vld [vmem:[%s0 + $0xc8] sm:$0xff]
  %v52 = vld [vmem:[%s0 + $0xd0] sm:$0xff]
  %v53 = vld [vmem:[%s0 + $0xd8] sm:$0xff]
  %v54 = vld [vmem:[%s0 + $0xe0] sm:$0xff]
  %v55 = vld [vmem:[%s0 + $0xe8] sm:$0xff]
  %v56 = vld [vmem:[%s0 + $0xf0] sm:$0xff]
  %v57 = vld [vmem:[%s0 + $0xf8] sm:$0xff]
  %v58 = vld [vmem:[%s0 + $0x100] sm:$0xff]
  %v59 = vld [vmem:[%s0 + $0x108] sm:$0xff]
  %v60 = vld [vmem:[%s0 + $0x110] sm:$0xff]
  %v61 = vld [vmem:[%s0 + $0x118] sm:$0xff]
  %v62 = vld [vmem:[%s0 + $0x120] sm:$0xff]
  %v63 = vld [vmem:[%s0 + $0x128] sm:$0xff]
  %v64 = vld [vmem:[%s0 + $0x130] sm:$0xff]
  %v65 = vld [vmem:[%s0 + $0x138] sm:$0xff]
  %v66 = vld [vmem:[%s0 + $0x140] sm:$0xff]
  %v67 = vld [vmem:[%s0 + $0x148] sm:$0xff]
  %v68 = vld [vmem:[%s0 + $0x150] sm:$0xff]
  %v69 = vld [vmem:[%s0 + $0x158] sm:$0xff]
  %v70 = vld [vmem:[%s0 + $0x160] sm:$0xff]
  %v71 = vld [vmem:[%s0 + $0x168] sm:$0xff]
  %v72 = vld [vmem:[%s0 + $0x170] sm:$0xff]
  %v73 = vld [vmem:[%s0 + $0x178] sm:$0xff]
  %v74 = vld [vmem:[%s0 + $0x180] sm:$0xff]
  %v75 = vld [vmem:[%s0 + $0x188] sm:$0xff]
  %v76 = vld [vmem:[%s0 + $0x190] sm:$0xff]
  %v77 = vld [vmem:[%s0 + $0x198] sm:$0xff]
  %v78 = vld [vmem:[%s0 + $0x1a0] sm:$0xff]
  %v79 = vld [vmem:[%s0 + $0x1a8] sm:$0xff]
  %v80 = vld [vmem:[%s0 + $0x1b0] sm:$0xff]
  %v81 = vld [vmem:[%s0 + $0x1b8] sm:$0xff]
  %v82 = vld [vmem:[%s0 + $0x1c0] sm:$0xff]
  %v83 = vld [vmem:[%s0 + $0x1c8] sm:$0xff]
  %v84 = vld [vmem:[%s0 + $0x1d0] sm:$0xff]
  %v85 = vld [vmem:[%s0 + $0x1d8] sm:$0xff]
  %v86 = vld [vmem:[%s0 + $0x1e0] sm:$0xff]
  %v87 = vld [vmem:[%s0 + $0x1e8] sm:$0xff]
  %v88 = vld [vmem:[%s0 + $0x1f0] sm:$0xff]
  %v89 = vld [vmem:[%s0 + $0x1f8] sm:$0xff]
  %v90 = vld [vmem:[%s1] sm:$0xff]
  %v91 = vld [vmem:[%s2] sm:$0x1]
  %v93 = vlaneseq
  %v94 = vshrl.u32 %v93, 7
  %v95 = vsub.s32 0, %v94
  %v96 = vrot.slane %v91, %v95
  %vm98 = vcmask 64512
  %v100 = vsel %vm98, %v26, 0
  %v103 = vsel %vm98, %v27, 0
  %v106 = vsel %vm98, %v28, 0
  %v109 = vsel %vm98, %v29, 0
  %v112 = vsel %vm98, %v30, 0
  %v115 = vsel %vm98, %v31, 0
  %v118 = vsel %vm98, %v32, 0
  %v121 = vsel %vm98, %v33, 0
  %v124 = vsel %vm98, %v34, 0
  %v127 = vsel %vm98, %v35, 0
  %v130 = vsel %vm98, %v36, 0
  %v133 = vsel %vm98, %v37, 0
  %v136 = vsel %vm98, %v38, 0
  %v139 = vsel %vm98, %v39, 0
  %v142 = vsel %vm98, %v40, 0
  %v145 = vsel %vm98, %v41, 0
  %v148 = vsel %vm98, %v42, 0
  %v151 = vsel %vm98, %v43, 0
  %v154 = vsel %vm98, %v44, 0
  %v157 = vsel %vm98, %v45, 0
  %v160 = vsel %vm98, %v46, 0
  %v163 = vsel %vm98, %v47, 0
  %v166 = vsel %vm98, %v48, 0
  %v169 = vsel %vm98, %v49, 0
  %v172 = vsel %vm98, %v50, 0
  %v175 = vsel %vm98, %v51, 0
  %v178 = vsel %vm98, %v52, 0
  %v181 = vsel %vm98, %v53, 0
  %v184 = vsel %vm98, %v54, 0
  %v187 = vsel %vm98, %v55, 0
  %v190 = vsel %vm98, %v56, 0
  %v193 = vsel %vm98, %v57, 0
  %v196 = vsel %vm98, %v58, 0
  %v199 = vsel %vm98, %v59, 0
  %v202 = vsel %vm98, %v60, 0
  %v205 = vsel %vm98, %v61, 0
  %v208 = vsel %vm98, %v62, 0
  %v211 = vsel %vm98, %v63, 0
  %v214 = vsel %vm98, %v64, 0
  %v217 = vsel %vm98, %v65, 0
  %v220 = vsel %vm98, %v66, 0
  %v223 = vsel %vm98, %v67, 0
  %v226 = vsel %vm98, %v68, 0
  %v229 = vsel %vm98, %v69, 0
  %v232 = vsel %vm98, %v70, 0
  %v235 = vsel %vm98, %v71, 0
  %v238 = vsel %vm98, %v72, 0
  %v241 = vsel %vm98, %v73, 0
  %v244 = vsel %vm98, %v74, 0
  %v247 = vsel %vm98, %v75, 0
  %v250 = vsel %vm98, %v76, 0
  %v253 = vsel %vm98, %v77, 0
  %v256 = vsel %vm98, %v78, 0
  %v259 = vsel %vm98, %v79, 0
  %v262 = vsel %vm98, %v80, 0
  %v265 = vsel %vm98, %v81, 0
  %v268 = vsel %vm98, %v82, 0
  %v271 = vsel %vm98, %v83, 0
  %v274 = vsel %vm98, %v84, 0
  %v277 = vsel %vm98, %v85, 0
  %v280 = vsel %vm98, %v86, 0
  %v283 = vsel %vm98, %v87, 0
  %v286 = vsel %vm98, %v88, 0
  %v289 = vsel %vm98, %v89, 0
  %291 = vmatprep.subr.mxu0 0.0
  %292 = vmatpush1.msra.mxu0 %v90
  %293 = vmatprep.subr.mxu0 0.0
  %294 = vmatpush1.msra.mxu0 0.0
  %295 = vmatprep.subr.mxu0 0.0
  %296 = vmatpush1.msra.mxu0 0.0
  %297 = vmatprep.subr.mxu0 0.0
  %298 = vmatpush1.msra.mxu0 0.0
  %299 = vmatprep.subr.mxu0 0.0
  %300 = vmatpush1.msra.mxu0 0.0
  %301 = vmatprep.subr.mxu0 0.0
  %302 = vmatpush1.msra.mxu0 0.0
  %303 = vmatprep.subr.mxu0 0.0
  %304 = vmatpush1.msra.mxu0 0.0
  %305 = vmatprep.subr.mxu0 0.0
  %306 = vmatpush1.msra.mxu0 0.0
  %307 = vmatprep.subr.mxu0 0.0
  %308 = vmatpush1.msra.mxu0 0.0
  %309 = vmatprep.subr.mxu0 0.0
  %310 = vmatpush1.msra.mxu0 0.0
  %311 = vmatprep.subr.mxu0 0.0
  %312 = vmatpush1.msra.mxu0 0.0
  %313 = vmatprep.subr.mxu0 0.0
  %314 = vmatpush1.msra.mxu0 0.0
  %315 = vmatprep.subr.mxu0 0.0
  %316 = vmatpush1.msra.mxu0 0.0
  %317 = vmatprep.subr.mxu0 0.0
  %318 = vmatpush1.msra.mxu0 0.0
  %319 = vmatprep.subr.mxu0 0.0
  %320 = vmatpush1.msra.mxu0 0.0
  %321 = vmatprep.subr.mxu0 0.0
  %322 = vmatpush1.msra.mxu0 0.0
  %323 = vmatprep.subr.mxu0 0.0
  %324 = vmatpush1.msra.mxu0 0.0
  %325 = vmatprep.subr.mxu0 0.0
  %326 = vmatpush1.msra.mxu0 0.0
  %327 = vmatprep.subr.mxu0 0.0
  %328 = vmatpush1.msra.mxu0 0.0
  %329 = vmatprep.subr.mxu0 0.0
  %330 = vmatpush1.msra.mxu0 0.0
  %331 = vmatprep.subr.mxu0 0.0
  %332 = vmatpush1.msra.mxu0 0.0
  %333 = vmatprep.subr.mxu0 0.0
  %334 = vmatpush1.msra.mxu0 0.0
  %335 = vmatprep.subr.mxu0 0.0
  %336 = vmatpush1.msra.mxu0 0.0
  %337 = vmatprep.subr.mxu0 0.0
  %338 = vmatpush1.msra.mxu0 0.0
  %339 = vmatprep.subr.mxu0 0.0
  %340 = vmatpush1.msra.mxu0 0.0
  %341 = vmatprep.subr.mxu0 0.0
  %342 = vmatpush1.msra.mxu0 0.0
  %343 = vmatprep.subr.mxu0 0.0
  %344 = vmatpush1.msra.mxu0 0.0
  %345 = vmatprep.subr.mxu0 0.0
  %346 = vmatpush1.msra.mxu0 0.0
  %347 = vmatprep.subr.mxu0 0.0
  %348 = vmatpush1.msra.mxu0 0.0
  %349 = vmatprep.subr.mxu0 0.0
  %350 = vmatpush1.msra.mxu0 0.0
  %351 = vmatprep.subr.mxu0 0.0
  %352 = vmatpush1.msra.mxu0 0.0
  %353 = vmatprep.subr.mxu0 0.0
  %354 = vmatpush1.msra.mxu0 0.0
  %355 = vmatprep.mubr.f32.mxu0 0.0
  %356 = vmatmul.mubr.f32.gmra.mrb[0].mxu0 %v100
  %v357 = vpop.f32.mrb[0].mxu0
  %v358 = vadd.f32 %v96, %v357
  %v359 = vpop.f32.mrb[0].mxu0
  %360 = vmatprep.mubr.f32.mxu0 0.0
  %361 = vmatmul.mubr.f32.gmra.mrb[0].mxu0 %v103
  %v362 = vpop.f32.mrb[0].mxu0
  %v363 = vadd.f32 %v96, %v362
  %v364 = vpop.f32.mrb[0].mxu0
  %365 = vmatprep.mubr.f32.mxu0 0.0
  %366 = vmatmul.mubr.f32.gmra.mrb[0].mxu0 %v106
  %v367 = vpop.f32.mrb[0].mxu0
  %v368 = vadd.f32 %v96, %v367
  %v369 = vpop.f32.mrb[0].mxu0
  %370 = vmatprep.mubr.f32.mxu0 0.0
  %371 = vmatmul.mubr.f32.gmra.mrb[0].mxu0 %v109
  %v372 = vpop.f32.mrb[0].mxu0
  %v373 = vadd.f32 %v96, %v372
  %v374 = vpop.f32.mrb[0].mxu0
  %375 = vmatprep.mubr.f32.mxu0 0.0
  %376 = vmatmul.mubr.f32.gmra.mrb[0].mxu0 %v112
  %v377 = vpop.f32.mrb[0].mxu0
  %v378 = vadd.f32 %v96, %v377
  %v379 = vpop.f32.mrb[0].mxu0
  %380 = vmatprep.mubr.f32.mxu0 0.0
  %381 = vmatmul.mubr.f32.gmra.mrb[0].mxu0 %v115
  %v382 = vpop.f32.mrb[0].mxu0
  %v383 = vadd.f32 %v96, %v382
  %v384 = vpop.f32.mrb[0].mxu0
  %385 = vmatprep.mubr.f32.mxu0 0.0
  %386 = vmatmul.mubr.f32.gmra.mrb[0].mxu0 %v118
  %v387 = vpop.f32.mrb[0].mxu0
  %v388 = vadd.f32 %v96, %v387
  %v389 = vpop.f32.mrb[0].mxu0
  %390 = vmatprep.mubr.f32.mxu0 0.0
  %391 = vmatmul.mubr.f32.gmra.mrb[0].mxu0 %v121
  %v392 = vpop.f32.mrb[0].mxu0
  %v393 = vadd.f32 %v96, %v392
  %v394 = vpop.f32.mrb[0].mxu0
  %395 = vmatprep.mubr.f32.mxu0 0.0
  %396 = vmatmul.mubr.f32.gmra.mrb[0].mxu0 %v124
  %v397 = vpop.f32.mrb[0].mxu0
  %v398 = vadd.f32 %v96, %v397
  %v399 = vpop.f32.mrb[0].mxu0
  %400 = vmatprep.mubr.f32.mxu0 0.0
  %401 = vmatmul.mubr.f32.gmra.mrb[0].mxu0 %v127
  %v402 = vpop.f32.mrb[0].mxu0
  %v403 = vadd.f32 %v96, %v402
  %v404 = vpop.f32.mrb[0].mxu0
  %405 = vmatprep.mubr.f32.mxu0 0.0
  %406 = vmatmul.mubr.f32.gmra.mrb[0].mxu0 %v130
  %v407 = vpop.f32.mrb[0].mxu0
  %v408 = vadd.f32 %v96, %v407
  %v409 = vpop.f32.mrb[0].mxu0
  %410 = vmatprep.mubr.f32.mxu0 0.0
  %411 = vmatmul.mubr.f32.gmra.mrb[0].mxu0 %v133
  %v412 = vpop.f32.mrb[0].mxu0
  %v413 = vadd.f32 %v96, %v412
  %v414 = vpop.f32.mrb[0].mxu0
  %415 = vmatprep.mubr.f32.mxu0 0.0
  %416 = vmatmul.mubr.f32.gmra.mrb[0].mxu0 %v136
  %v417 = vpop.f32.mrb[0].mxu0
  %v418 = vadd.f32 %v96, %v417
  %v419 = vpop.f32.mrb[0].mxu0
  %420 = vmatprep.mubr.f32.mxu0 0.0
  %421 = vmatmul.mubr.f32.gmra.mrb[0].mxu0 %v139
  %v422 = vpop.f32.mrb[0].mxu0
  %v423 = vadd.f32 %v96, %v422
  %v424 = vpop.f32.mrb[0].mxu0
  %425 = vmatprep.mubr.f32.mxu0 0.0
  %426 = vmatmul.mubr.f32.gmra.mrb[0].mxu0 %v142
  %v427 = vpop.f32.mrb[0].mxu0
  %v428 = vadd.f32 %v96, %v427
  %v429 = vpop.f32.mrb[0].mxu0
  %430 = vmatprep.mubr.f32.mxu0 0.0
  %431 = vmatmul.mubr.f32.gmra.mrb[0].mxu0 %v145
  %v432 = vpop.f32.mrb[0].mxu0
  %v433 = vadd.f32 %v96, %v432
  %v434 = vpop.f32.mrb[0].mxu0
  %435 = vmatprep.mubr.f32.mxu0 0.0
  %436 = vmatmul.mubr.f32.gmra.mrb[0].mxu0 %v148
  %v437 = vpop.f32.mrb[0].mxu0
  %v438 = vadd.f32 %v96, %v437
  %v439 = vpop.f32.mrb[0].mxu0
  %440 = vmatprep.mubr.f32.mxu0 0.0
  %441 = vmatmul.mubr.f32.gmra.mrb[0].mxu0 %v151
  %v442 = vpop.f32.mrb[0].mxu0
  %v443 = vadd.f32 %v96, %v442
  %v444 = vpop.f32.mrb[0].mxu0
  %445 = vmatprep.mubr.f32.mxu0 0.0
  %446 = vmatmul.mubr.f32.gmra.mrb[0].mxu0 %v154
  %v447 = vpop.f32.mrb[0].mxu0
  %v448 = vadd.f32 %v96, %v447
  %v449 = vpop.f32.mrb[0].mxu0
  %450 = vmatprep.mubr.f32.mxu0 0.0
  %451 = vmatmul.mubr.f32.gmra.mrb[0].mxu0 %v157
  %v452 = vpop.f32.mrb[0].mxu0
  %v453 = vadd.f32 %v96, %v452
  %v454 = vpop.f32.mrb[0].mxu0
  %455 = vmatprep.mubr.f32.mxu0 0.0
  %456 = vmatmul.mubr.f32.gmra.mrb[0].mxu0 %v160
  %v457 = vpop.f32.mrb[0].mxu0
  %v458 = vadd.f32 %v96, %v457
  %v459 = vpop.f32.mrb[0].mxu0
  %460 = vmatprep.mubr.f32.mxu0 0.0
  %461 = vmatmul.mubr.f32.gmra.mrb[0].mxu0 %v163
  %v462 = vpop.f32.mrb[0].mxu0
  %v463 = vadd.f32 %v96, %v462
  %v464 = vpop.f32.mrb[0].mxu0
  %465 = vmatprep.mubr.f32.mxu0 0.0
  %466 = vmatmul.mubr.f32.gmra.mrb[0].mxu0 %v166
  %v467 = vpop.f32.mrb[0].mxu0
  %v468 = vadd.f32 %v96, %v467
  %v469 = vpop.f32.mrb[0].mxu0
  %470 = vmatprep.mubr.f32.mxu0 0.0
  %471 = vmatmul.mubr.f32.gmra.mrb[0].mxu0 %v169
  %v472 = vpop.f32.mrb[0].mxu0
  %v473 = vadd.f32 %v96, %v472
  %v474 = vpop.f32.mrb[0].mxu0
  %475 = vmatprep.mubr.f32.mxu0 0.0
  %476 = vmatmul.mubr.f32.gmra.mrb[0].mxu0 %v172
  %v477 = vpop.f32.mrb[0].mxu0
  %v478 = vadd.f32 %v96, %v477
  %v479 = vpop.f32.mrb[0].mxu0
  %480 = vmatprep.mubr.f32.mxu0 0.0
  %481 = vmatmul.mubr.f32.gmra.mrb[0].mxu0 %v175
  %v482 = vpop.f32.mrb[0].mxu0
  %v483 = vadd.f32 %v96, %v482
  %v484 = vpop.f32.mrb[0].mxu0
  %485 = vmatprep.mubr.f32.mxu0 0.0
  %486 = vmatmul.mubr.f32.gmra.mrb[0].mxu0 %v178
  %v487 = vpop.f32.mrb[0].mxu0
  %v488 = vadd.f32 %v96, %v487
  %v489 = vpop.f32.mrb[0].mxu0
  %490 = vmatprep.mubr.f32.mxu0 0.0
  %491 = vmatmul.mubr.f32.gmra.mrb[0].mxu0 %v181
  %v492 = vpop.f32.mrb[0].mxu0
  %v493 = vadd.f32 %v96, %v492
  %v494 = vpop.f32.mrb[0].mxu0
  %495 = vmatprep.mubr.f32.mxu0 0.0
  %496 = vmatmul.mubr.f32.gmra.mrb[0].mxu0 %v184
  %v497 = vpop.f32.mrb[0].mxu0
  %v498 = vadd.f32 %v96, %v497
  %v499 = vpop.f32.mrb[0].mxu0
  %500 = vmatprep.mubr.f32.mxu0 0.0
  %501 = vmatmul.mubr.f32.gmra.mrb[0].mxu0 %v187
  %v502 = vpop.f32.mrb[0].mxu0
  %v503 = vadd.f32 %v96, %v502
  %v504 = vpop.f32.mrb[0].mxu0
  %505 = vmatprep.mubr.f32.mxu0 0.0
  %506 = vmatmul.mubr.f32.gmra.mrb[0].mxu0 %v190
  %v507 = vpop.f32.mrb[0].mxu0
  %v508 = vadd.f32 %v96, %v507
  %v509 = vpop.f32.mrb[0].mxu0
  %510 = vmatprep.mubr.f32.mxu0 0.0
  %511 = vmatmul.mubr.f32.gmra.mrb[0].mxu0 %v193
  %v512 = vpop.f32.mrb[0].mxu0
  %v513 = vadd.f32 %v96, %v512
  %v514 = vpop.f32.mrb[0].mxu0
  %515 = vmatprep.mubr.f32.mxu0 0.0
  %516 = vmatmul.mubr.f32.gmra.mrb[0].mxu0 %v196
  %v517 = vpop.f32.mrb[0].mxu0
  %v518 = vadd.f32 %v96, %v517
  %v519 = vpop.f32.mrb[0].mxu0
  %520 = vmatprep.mubr.f32.mxu0 0.0
  %521 = vmatmul.mubr.f32.gmra.mrb[0].mxu0 %v199
  %v522 = vpop.f32.mrb[0].mxu0
  %v523 = vadd.f32 %v96, %v522
  %v524 = vpop.f32.mrb[0].mxu0
  %525 = vmatprep.mubr.f32.mxu0 0.0
  %526 = vmatmul.mubr.f32.gmra.mrb[0].mxu0 %v202
  %v527 = vpop.f32.mrb[0].mxu0
  %v528 = vadd.f32 %v96, %v527
  %v529 = vpop.f32.mrb[0].mxu0
  %530 = vmatprep.mubr.f32.mxu0 0.0
  %531 = vmatmul.mubr.f32.gmra.mrb[0].mxu0 %v205
  %v532 = vpop.f32.mrb[0].mxu0
  %v533 = vadd.f32 %v96, %v532
  %v534 = vpop.f32.mrb[0].mxu0
  %535 = vmatprep.mubr.f32.mxu0 0.0
  %536 = vmatmul.mubr.f32.gmra.mrb[0].mxu0 %v208
  %v537 = vpop.f32.mrb[0].mxu0
  %v538 = vadd.f32 %v96, %v537
  %v539 = vpop.f32.mrb[0].mxu0
  %540 = vmatprep.mubr.f32.mxu0 0.0
  %541 = vmatmul.mubr.f32.gmra.mrb[0].mxu0 %v211
  %v542 = vpop.f32.mrb[0].mxu0
  %v543 = vadd.f32 %v96, %v542
  %v544 = vpop.f32.mrb[0].mxu0
  %545 = vmatprep.mubr.f32.mxu0 0.0
  %546 = vmatmul.mubr.f32.gmra.mrb[0].mxu0 %v214
  %v547 = vpop.f32.mrb[0].mxu0
  %v548 = vadd.f32 %v96, %v547
  %v549 = vpop.f32.mrb[0].mxu0
  %550 = vmatprep.mubr.f32.mxu0 0.0
  %551 = vmatmul.mubr.f32.gmra.mrb[0].mxu0 %v217
  %v552 = vpop.f32.mrb[0].mxu0
  %v553 = vadd.f32 %v96, %v552
  %v554 = vpop.f32.mrb[0].mxu0
  %555 = vmatprep.mubr.f32.mxu0 0.0
  %556 = vmatmul.mubr.f32.gmra.mrb[0].mxu0 %v220
  %v557 = vpop.f32.mrb[0].mxu0
  %v558 = vadd.f32 %v96, %v557
  %v559 = vpop.f32.mrb[0].mxu0
  %560 = vmatprep.mubr.f32.mxu0 0.0
  %561 = vmatmul.mubr.f32.gmra.mrb[0].mxu0 %v223
  %v562 = vpop.f32.mrb[0].mxu0
  %v563 = vadd.f32 %v96, %v562
  %v564 = vpop.f32.mrb[0].mxu0
  %565 = vmatprep.mubr.f32.mxu0 0.0
  %566 = vmatmul.mubr.f32.gmra.mrb[0].mxu0 %v226
  %v567 = vpop.f32.mrb[0].mxu0
  %v568 = vadd.f32 %v96, %v567
  %v569 = vpop.f32.mrb[0].mxu0
  %570 = vmatprep.mubr.f32.mxu0 0.0
  %571 = vmatmul.mubr.f32.gmra.mrb[0].mxu0 %v229
  %v572 = vpop.f32.mrb[0].mxu0
  %v573 = vadd.f32 %v96, %v572
  %v574 = vpop.f32.mrb[0].mxu0
  %575 = vmatprep.mubr.f32.mxu0 0.0
  %576 = vmatmul.mubr.f32.gmra.mrb[0].mxu0 %v232
  %v577 = vpop.f32.mrb[0].mxu0
  %v578 = vadd.f32 %v96, %v577
  %v579 = vpop.f32.mrb[0].mxu0
  %580 = vmatprep.mubr.f32.mxu0 0.0
  %581 = vmatmul.mubr.f32.gmra.mrb[0].mxu0 %v235
  %v582 = vpop.f32.mrb[0].mxu0
  %v583 = vadd.f32 %v96, %v582
  %v584 = vpop.f32.mrb[0].mxu0
  %585 = vmatprep.mubr.f32.mxu0 0.0
  %586 = vmatmul.mubr.f32.gmra.mrb[0].mxu0 %v238
  %v587 = vpop.f32.mrb[0].mxu0
  %v588 = vadd.f32 %v96, %v587
  %v589 = vpop.f32.mrb[0].mxu0
  %590 = vmatprep.mubr.f32.mxu0 0.0
  %591 = vmatmul.mubr.f32.gmra.mrb[0].mxu0 %v241
  %v592 = vpop.f32.mrb[0].mxu0
  %v593 = vadd.f32 %v96, %v592
  %v594 = vpop.f32.mrb[0].mxu0
  %595 = vmatprep.mubr.f32.mxu0 0.0
  %596 = vmatmul.mubr.f32.gmra.mrb[0].mxu0 %v244
  %v597 = vpop.f32.mrb[0].mxu0
  %v598 = vadd.f32 %v96, %v597
  %v599 = vpop.f32.mrb[0].mxu0
  %600 = vmatprep.mubr.f32.mxu0 0.0
  %601 = vmatmul.mubr.f32.gmra.mrb[0].mxu0 %v247
  %v602 = vpop.f32.mrb[0].mxu0
  %v603 = vadd.f32 %v96, %v602
  %v604 = vpop.f32.mrb[0].mxu0
  %605 = vmatprep.mubr.f32.mxu0 0.0
  %606 = vmatmul.mubr.f32.gmra.mrb[0].mxu0 %v250
  %v607 = vpop.f32.mrb[0].mxu0
  %v608 = vadd.f32 %v96, %v607
  %v609 = vpop.f32.mrb[0].mxu0
  %610 = vmatprep.mubr.f32.mxu0 0.0
  %611 = vmatmul.mubr.f32.gmra.mrb[0].mxu0 %v253
  %v612 = vpop.f32.mrb[0].mxu0
  %v613 = vadd.f32 %v96, %v612
  %v614 = vpop.f32.mrb[0].mxu0
  %615 = vmatprep.mubr.f32.mxu0 0.0
  %616 = vmatmul.mubr.f32.gmra.mrb[0].mxu0 %v256
  %v617 = vpop.f32.mrb[0].mxu0
  %v618 = vadd.f32 %v96, %v617
  %v619 = vpop.f32.mrb[0].mxu0
  %620 = vmatprep.mubr.f32.mxu0 0.0
  %621 = vmatmul.mubr.f32.gmra.mrb[0].mxu0 %v259
  %v622 = vpop.f32.mrb[0].mxu0
  %v623 = vadd.f32 %v96, %v622
  %v624 = vpop.f32.mrb[0].mxu0
  %625 = vmatprep.mubr.f32.mxu0 0.0
  %626 = vmatmul.mubr.f32.gmra.mrb[0].mxu0 %v262
  %v627 = vpop.f32.mrb[0].mxu0
  %v628 = vadd.f32 %v96, %v627
  %v629 = vpop.f32.mrb[0].mxu0
  %630 = vmatprep.mubr.f32.mxu0 0.0
  %631 = vmatmul.mubr.f32.gmra.mrb[0].mxu0 %v265
  %v632 = vpop.f32.mrb[0].mxu0
  %v633 = vadd.f32 %v96, %v632
  %v634 = vpop.f32.mrb[0].mxu0
  %635 = vmatprep.mubr.f32.mxu0 0.0
  %636 = vmatmul.mubr.f32.gmra.mrb[0].mxu0 %v268
  %v637 = vpop.f32.mrb[0].mxu0
  %v638 = vadd.f32 %v96, %v637
  %v639 = vpop.f32.mrb[0].mxu0
  %640 = vmatprep.mubr.f32.mxu0 0.0
  %641 = vmatmul.mubr.f32.gmra.mrb[0].mxu0 %v271
  %v642 = vpop.f32.mrb[0].mxu0
  %v643 = vadd.f32 %v96, %v642
  %v644 = vpop.f32.mrb[0].mxu0
  %645 = vmatprep.mubr.f32.mxu0 0.0
  %646 = vmatmul.mubr.f32.gmra.mrb[0].mxu0 %v274
  %v647 = vpop.f32.mrb[0].mxu0
  %v648 = vadd.f32 %v96, %v647
  %v649 = vpop.f32.mrb[0].mxu0
  %650 = vmatprep.mubr.f32.mxu0 0.0
  %651 = vmatmul.mubr.f32.gmra.mrb[0].mxu0 %v277
  %v652 = vpop.f32.mrb[0].mxu0
  %v653 = vadd.f32 %v96, %v652
  %v654 = vpop.f32.mrb[0].mxu0
  %655 = vmatprep.mubr.f32.mxu0 0.0
  %656 = vmatmul.mubr.f32.gmra.mrb[0].mxu0 %v280
  %v657 = vpop.f32.mrb[0].mxu0
  %v658 = vadd.f32 %v96, %v657
  %v659 = vpop.f32.mrb[0].mxu0
  %660 = vmatprep.mubr.f32.mxu0 0.0
  %661 = vmatmul.mubr.f32.gmra.mrb[0].mxu0 %v283
  %v662 = vpop.f32.mrb[0].mxu0
  %v663 = vadd.f32 %v96, %v662
  %v664 = vpop.f32.mrb[0].mxu0
  %665 = vmatprep.mubr.f32.mxu0 0.0
  %666 = vmatmul.mubr.f32.gmra.mrb[0].mxu0 %v286
  %v667 = vpop.f32.mrb[0].mxu0
  %v668 = vadd.f32 %v96, %v667
  %v669 = vpop.f32.mrb[0].mxu0
  %670 = vmatprep.mubr.f32.mxu0 0.0
  %671 = vmatmul.mubr.f32.gmra.mrb[0].mxu0 %v289
  %v672 = vpop.f32.mrb[0].mxu0
  %v673 = vadd.f32 %v96, %v672
  %v674 = vpop.f32.mrb[0].mxu0
  %675 = vdwg.mxu0
  %v676 = vmax.f32 %v358, 0.0
  %v677 = vmax.f32 %v363, 0.0
  %v678 = vmax.f32 %v368, 0.0
  %v679 = vmax.f32 %v373, 0.0
  %v680 = vmax.f32 %v378, 0.0
  %v681 = vmax.f32 %v383, 0.0
  %v682 = vmax.f32 %v388, 0.0
  %v683 = vmax.f32 %v393, 0.0
  %v684 = vmax.f32 %v398, 0.0
  %v685 = vmax.f32 %v403, 0.0
  %v686 = vmax.f32 %v408, 0.0
  %v687 = vmax.f32 %v413, 0.0
  %v688 = vmax.f32 %v418, 0.0
  %v689 = vmax.f32 %v423, 0.0
  %v690 = vmax.f32 %v428, 0.0
  %v691 = vmax.f32 %v433, 0.0
  %v692 = vmax.f32 %v438, 0.0
  %v693 = vmax.f32 %v443, 0.0
  %v694 = vmax.f32 %v448, 0.0
  %v695 = vmax.f32 %v453, 0.0
  %v696 = vmax.f32 %v458, 0.0
  %v697 = vmax.f32 %v463, 0.0
  %v698 = vmax.f32 %v468, 0.0
  %v699 = vmax.f32 %v473, 0.0
  %v700 = vmax.f32 %v478, 0.0
  %v701 = vmax.f32 %v483, 0.0
  %v702 = vmax.f32 %v488, 0.0
  %v703 = vmax.f32 %v493, 0.0
  %v704 = vmax.f32 %v498, 0.0
  %v705 = vmax.f32 %v503, 0.0
  %v706 = vmax.f32 %v508, 0.0
  %v707 = vmax.f32 %v513, 0.0
  %v708 = vmax.f32 %v518, 0.0
  %v709 = vmax.f32 %v523, 0.0
  %v710 = vmax.f32 %v528, 0.0
  %v711 = vmax.f32 %v533, 0.0
  %v712 = vmax.f32 %v538, 0.0
  %v713 = vmax.f32 %v543, 0.0
  %v714 = vmax.f32 %v548, 0.0
  %v715 = vmax.f32 %v553, 0.0
  %v716 = vmax.f32 %v558, 0.0
  %v717 = vmax.f32 %v563, 0.0
  %v718 = vmax.f32 %v568, 0.0
  %v719 = vmax.f32 %v573, 0.0
  %v720 = vmax.f32 %v578, 0.0
  %v721 = vmax.f32 %v583, 0.0
  %v722 = vmax.f32 %v588, 0.0
  %v723 = vmax.f32 %v593, 0.0
  %v724 = vmax.f32 %v598, 0.0
  %v725 = vmax.f32 %v603, 0.0
  %v726 = vmax.f32 %v608, 0.0
  %v727 = vmax.f32 %v613, 0.0
  %v728 = vmax.f32 %v618, 0.0
  %v729 = vmax.f32 %v623, 0.0
  %v730 = vmax.f32 %v628, 0.0
  %v731 = vmax.f32 %v633, 0.0
  %v732 = vmax.f32 %v638, 0.0
  %v733 = vmax.f32 %v643, 0.0
  %v734 = vmax.f32 %v648, 0.0
  %v735 = vmax.f32 %v653, 0.0
  %v736 = vmax.f32 %v658, 0.0
  %v737 = vmax.f32 %v663, 0.0
  %v738 = vmax.f32 %v668, 0.0
  %v739 = vmax.f32 %v673, 0.0
  %v740 = vmin.f32 %v676, 6.0
  %v741 = vmin.f32 %v677, 6.0
  %v742 = vmin.f32 %v678, 6.0
  %v743 = vmin.f32 %v679, 6.0
  %v744 = vmin.f32 %v680, 6.0
  %v745 = vmin.f32 %v681, 6.0
  %v746 = vmin.f32 %v682, 6.0
  %v747 = vmin.f32 %v683, 6.0
  %v748 = vmin.f32 %v684, 6.0
  %v749 = vmin.f32 %v685, 6.0
  %v750 = vmin.f32 %v686, 6.0
  %v751 = vmin.f32 %v687, 6.0
  %v752 = vmin.f32 %v688, 6.0
  %v753 = vmin.f32 %v689, 6.0
  %v754 = vmin.f32 %v690, 6.0
  %v755 = vmin.f32 %v691, 6.0
  %v756 = vmin.f32 %v692, 6.0
  %v757 = vmin.f32 %v693, 6.0
  %v758 = vmin.f32 %v694, 6.0
  %v759 = vmin.f32 %v695, 6.0
  %v760 = vmin.f32 %v696, 6.0
  %v761 = vmin.f32 %v697, 6.0
  %v762 = vmin.f32 %v698, 6.0
  %v763 = vmin.f32 %v699, 6.0
  %v764 = vmin.f32 %v700, 6.0
  %v765 = vmin.f32 %v701, 6.0
  %v766 = vmin.f32 %v702, 6.0
  %v767 = vmin.f32 %v703, 6.0
  %v768 = vmin.f32 %v704, 6.0
  %v769 = vmin.f32 %v705, 6.0
  %v770 = vmin.f32 %v706, 6.0
  %v771 = vmin.f32 %v707, 6.0
  %v772 = vmin.f32 %v708, 6.0
  %v773 = vmin.f32 %v709, 6.0
  %v774 = vmin.f32 %v710, 6.0
  %v775 = vmin.f32 %v711, 6.0
  %v776 = vmin.f32 %v712, 6.0
  %v777 = vmin.f32 %v713, 6.0
  %v778 = vmin.f32 %v714, 6.0
  %v779 = vmin.f32 %v715, 6.0
  %v780 = vmin.f32 %v716, 6.0
  %v781 = vmin.f32 %v717, 6.0
  %v782 = vmin.f32 %v718, 6.0
  %v783 = vmin.f32 %v719, 6.0
  %v784 = vmin.f32 %v720, 6.0
  %v785 = vmin.f32 %v721, 6.0
  %v786 = vmin.f32 %v722, 6.0
  %v787 = vmin.f32 %v723, 6.0
  %v788 = vmin.f32 %v724, 6.0
  %v789 = vmin.f32 %v725, 6.0
  %v790 = vmin.f32 %v726, 6.0
  %v791 = vmin.f32 %v727, 6.0
  %v792 = vmin.f32 %v728, 6.0
  %v793 = vmin.f32 %v729, 6.0
  %v794 = vmin.f32 %v730, 6.0
  %v795 = vmin.f32 %v731, 6.0
  %v796 = vmin.f32 %v732, 6.0
  %v797 = vmin.f32 %v733, 6.0
  %v798 = vmin.f32 %v734, 6.0
  %v799 = vmin.f32 %v735, 6.0
  %v800 = vmin.f32 %v736, 6.0
  %v801 = vmin.f32 %v737, 6.0
  %v802 = vmin.f32 %v738, 6.0
  %v803 = vmin.f32 %v739, 6.0
  %v804 = vld [vmem:[%s3] sm:$0x7]
  %v805 = vld [vmem:[%s3 + $0x4] sm:$0x7]
  %v806 = vld [vmem:[%s3 + $0x8] sm:$0x7]
  %v807 = vlaneseq
  %v808 = vshrl.u32 %v807, 7
  %v809 = vsub.s32 0, %v808
  %v810 = vrot.slane %v804, %v809
  %v811 = vmul.f32 %v810, 0.0
  %v812 = vmul.f32 %v810, %v740
  %v813 = vmul.f32 %v810, %v741
  %v814 = vmul.f32 %v810, %v742
  %v815 = vmul.f32 %v810, %v743
  %v816 = vmul.f32 %v810, %v744
  %v817 = vmul.f32 %v810, %v745
  %v818 = vmul.f32 %v810, %v746
  %v819 = vmul.f32 %v810, %v747
  %v820 = vmul.f32 %v810, %v748
  %v821 = vmul.f32 %v810, %v749
  %v822 = vmul.f32 %v810, %v750
  %v823 = vmul.f32 %v810, %v751
  %v824 = vmul.f32 %v810, %v752
  %v825 = vmul.f32 %v810, %v753
  %v826 = vmul.f32 %v810, %v754
  %v827 = vmul.f32 %v810, %v755
  %v828 = vmul.f32 %v810, %v756
  %v829 = vmul.f32 %v810, %v757
  %v830 = vmul.f32 %v810, %v758
  %v831 = vmul.f32 %v810, %v759
  %v832 = vmul.f32 %v810, %v760
  %v833 = vmul.f32 %v810, %v761
  %v834 = vmul.f32 %v810, %v762
  %v835 = vmul.f32 %v810, %v763
  %v836 = vmul.f32 %v810, %v764
  %v837 = vmul.f32 %v810, %v765
  %v838 = vmul.f32 %v810, %v766
  %v839 = vmul.f32 %v810, %v767
  %v840 = vmul.f32 %v810, %v768
  %v841 = vmul.f32 %v810, %v769
  %v842 = vmul.f32 %v810, %v772
  %v843 = vmul.f32 %v810, %v773
  %v844 = vmul.f32 %v810, %v774
  %v845 = vmul.f32 %v810, %v775
  %v846 = vmul.f32 %v810, %v776
  %v847 = vmul.f32 %v810, %v777
  %v848 = vmul.f32 %v810, %v778
  %v849 = vmul.f32 %v810, %v779
  %v850 = vmul.f32 %v810, %v780
  %v851 = vmul.f32 %v810, %v781
  %v852 = vmul.f32 %v810, %v782
  %v853 = vmul.f32 %v810, %v783
  %v854 = vmul.f32 %v810, %v784
  %v855 = vmul.f32 %v810, %v785
  %v856 = vmul.f32 %v810, %v786
  %v857 = vmul.f32 %v810, %v787
  %v858 = vmul.f32 %v810, %v788
  %v859 = vmul.f32 %v810, %v789
  %v860 = vmul.f32 %v810, %v790
  %v861 = vmul.f32 %v810, %v791
  %v862 = vmul.f32 %v810, %v792
  %v863 = vmul.f32 %v810, %v793
  %v864 = vmul.f32 %v810, %v794
  %v865 = vmul.f32 %v810, %v795
  %v866 = vmul.f32 %v810, %v796
  %v867 = vmul.f32 %v810, %v797
  %v868 = vmul.f32 %v810, %v798
  %v869 = vmul.f32 %v810, %v799
  %v870 = vmul.f32 %v810, %v800
  %v871 = vmul.f32 %v810, %v801
  %v872 = vlaneseq
  %v873 = vshrl.u32 %v872, 7
  %v874 = vsub.s32 0, %v873
  %v875 = vrot.slane %v805, %v874
  %v876 = vmul.f32 %v875, %v740
  %v877 = vmul.f32 %v875, %v741
  %v878 = vmul.f32 %v875, %v742
  %v879 = vmul.f32 %v875, %v743
  %v880 = vmul.f32 %v875, %v744
  %v881 = vmul.f32 %v875, %v745
  %v882 = vmul.f32 %v875, %v746
  %v883 = vmul.f32 %v875, %v747
  %v884 = vmul.f32 %v875, %v748
  %v885 = vmul.f32 %v875, %v749
  %v886 = vmul.f32 %v875, %v750
  %v887 = vmul.f32 %v875, %v751
  %v888 = vmul.f32 %v875, %v752
  %v889 = vmul.f32 %v875, %v753
  %v890 = vmul.f32 %v875, %v754
  %v891 = vmul.f32 %v875, %v755
  %v892 = vmul.f32 %v875, %v756
  %v893 = vmul.f32 %v875, %v757
  %v894 = vmul.f32 %v875, %v758
  %v895 = vmul.f32 %v875, %v759
  %v896 = vmul.f32 %v875, %v760
  %v897 = vmul.f32 %v875, %v761
  %v898 = vmul.f32 %v875, %v762
  %v899 = vmul.f32 %v875, %v763
  %v900 = vmul.f32 %v875, %v764
  %v901 = vmul.f32 %v875, %v765
  %v902 = vmul.f32 %v875, %v766
  %v903 = vmul.f32 %v875, %v767
  %v904 = vmul.f32 %v875, %v768
  %v905 = vmul.f32 %v875, %v769
  %v906 = vmul.f32 %v875, %v770
  %v907 = vmul.f32 %v875, %v771
  %v908 = vmul.f32 %v875, %v772
  %v909 = vmul.f32 %v875, %v773
  %v910 = vmul.f32 %v875, %v774
  %v911 = vmul.f32 %v875, %v775
  %v912 = vmul.f32 %v875, %v776
  %v913 = vmul.f32 %v875, %v777
  %v914 = vmul.f32 %v875, %v778
  %v915 = vmul.f32 %v875, %v779
  %v916 = vmul.f32 %v875, %v780
  %v917 = vmul.f32 %v875, %v781
  %v918 = vmul.f32 %v875, %v782
  %v919 = vmul.f32 %v875, %v783
  %v920 = vmul.f32 %v875, %v784
  %v921 = vmul.f32 %v875, %v785
  %v922 = vmul.f32 %v875, %v786
  %v923 = vmul.f32 %v875, %v787
  %v924 = vmul.f32 %v875, %v788
  %v925 = vmul.f32 %v875, %v789
  %v926 = vmul.f32 %v875, %v790
  %v927 = vmul.f32 %v875, %v791
  %v928 = vmul.f32 %v875, %v792
  %v929 = vmul.f32 %v875, %v793
  %v930 = vmul.f32 %v875, %v794
  %v931 = vmul.f32 %v875, %v795
  %v932 = vmul.f32 %v875, %v796
  %v933 = vmul.f32 %v875, %v797
  %v934 = vmul.f32 %v875, %v798
  %v935 = vmul.f32 %v875, %v799
  %v936 = vmul.f32 %v875, %v800
  %v937 = vmul.f32 %v875, %v801
  %v938 = vmul.f32 %v875, %v802
  %v939 = vmul.f32 %v875, %v803
  %v940 = vadd.f32 %v811, %v876
  %v941 = vadd.f32 %v811, %v877
  %v942 = vadd.f32 %v812, %v878
  %v943 = vadd.f32 %v813, %v879
  %v944 = vadd.f32 %v814, %v880
  %v945 = vadd.f32 %v815, %v881
  %v946 = vadd.f32 %v816, %v882
  %v947 = vadd.f32 %v817, %v883
  %v948 = vadd.f32 %v818, %v884
  %v949 = vadd.f32 %v819, %v885
  %v950 = vadd.f32 %v820, %v886
  %v951 = vadd.f32 %v821, %v887
  %v952 = vadd.f32 %v822, %v888
  %v953 = vadd.f32 %v823, %v889
  %v954 = vadd.f32 %v824, %v890
  %v955 = vadd.f32 %v825, %v891
  %v956 = vadd.f32 %v826, %v892
  %v957 = vadd.f32 %v827, %v893
  %v958 = vadd.f32 %v828, %v894
  %v959 = vadd.f32 %v829, %v895
  %v960 = vadd.f32 %v830, %v896
  %v961 = vadd.f32 %v831, %v897
  %v962 = vadd.f32 %v832, %v898
  %v963 = vadd.f32 %v833, %v899
  %v964 = vadd.f32 %v834, %v900
  %v965 = vadd.f32 %v835, %v901
  %v966 = vadd.f32 %v836, %v902
  %v967 = vadd.f32 %v837, %v903
  %v968 = vadd.f32 %v838, %v904
  %v969 = vadd.f32 %v839, %v905
  %v970 = vadd.f32 %v840, %v906
  %v971 = vadd.f32 %v841, %v907
  %v972 = vadd.f32 %v811, %v908
  %v973 = vadd.f32 %v811, %v909
  %v974 = vadd.f32 %v842, %v910
  %v975 = vadd.f32 %v843, %v911
  %v976 = vadd.f32 %v844, %v912
  %v977 = vadd.f32 %v845, %v913
  %v978 = vadd.f32 %v846, %v914
  %v979 = vadd.f32 %v847, %v915
  %v980 = vadd.f32 %v848, %v916
  %v981 = vadd.f32 %v849, %v917
  %v982 = vadd.f32 %v850, %v918
  %v983 = vadd.f32 %v851, %v919
  %v984 = vadd.f32 %v852, %v920
  %v985 = vadd.f32 %v853, %v921
  %v986 = vadd.f32 %v854, %v922
  %v987 = vadd.f32 %v855, %v923
  %v988 = vadd.f32 %v856, %v924
  %v989 = vadd.f32 %v857, %v925
  %v990 = vadd.f32 %v858, %v926
  %v991 = vadd.f32 %v859, %v927
  %v992 = vadd.f32 %v860, %v928
  %v993 = vadd.f32 %v861, %v929
  %v994 = vadd.f32 %v862, %v930
  %v995 = vadd.f32 %v863, %v931
  %v996 = vadd.f32 %v864, %v932
  %v997 = vadd.f32 %v865, %v933
  %v998 = vadd.f32 %v866, %v934
  %v999 = vadd.f32 %v867, %v935
  %v1000 = vadd.f32 %v868, %v936
  %v1001 = vadd.f32 %v869, %v937
  %v1002 = vadd.f32 %v870, %v938
  %v1003 = vadd.f32 %v871, %v939
  %v1004 = vlaneseq
  %v1005 = vshrl.u32 %v1004, 7
  %v1006 = vsub.s32 0, %v1005
  %v1007 = vrot.slane %v806, %v1006
  %v1008 = vmul.f32 %v1007, %v742
  %v1009 = vmul.f32 %v1007, %v743
  %v1010 = vmul.f32 %v1007, %v744
  %v1011 = vmul.f32 %v1007, %v745
  %v1012 = vmul.f32 %v1007, %v746
  %v1013 = vmul.f32 %v1007, %v747
  %v1014 = vmul.f32 %v1007, %v748
  %v1015 = vmul.f32 %v1007, %v749
  %v1016 = vmul.f32 %v1007, %v750
  %v1017 = vmul.f32 %v1007, %v751
  %v1018 = vmul.f32 %v1007, %v752
  %v1019 = vmul.f32 %v1007, %v753
  %v1020 = vmul.f32 %v1007, %v754
  %v1021 = vmul.f32 %v1007, %v755
  %v1022 = vmul.f32 %v1007, %v756
  %v1023 = vmul.f32 %v1007, %v757
  %v1024 = vmul.f32 %v1007, %v758
  %v1025 = vmul.f32 %v1007, %v759
  %v1026 = vmul.f32 %v1007, %v760
  %v1027 = vmul.f32 %v1007, %v761
  %v1028 = vmul.f32 %v1007, %v762
  %v1029 = vmul.f32 %v1007, %v763
  %v1030 = vmul.f32 %v1007, %v764
  %v1031 = vmul.f32 %v1007, %v765
  %v1032 = vmul.f32 %v1007, %v766
  %v1033 = vmul.f32 %v1007, %v767
  %v1034 = vmul.f32 %v1007, %v768
  %v1035 = vmul.f32 %v1007, %v769
  %v1036 = vmul.f32 %v1007, %v770
  %v1037 = vmul.f32 %v1007, %v771
  %v1038 = vmul.f32 %v1007, 0.0
  %v1039 = vmul.f32 %v1007, %v774
  %v1040 = vmul.f32 %v1007, %v775
  %v1041 = vmul.f32 %v1007, %v776
  %v1042 = vmul.f32 %v1007, %v777
  %v1043 = vmul.f32 %v1007, %v778
  %v1044 = vmul.f32 %v1007, %v779
  %v1045 = vmul.f32 %v1007, %v780
  %v1046 = vmul.f32 %v1007, %v781
  %v1047 = vmul.f32 %v1007, %v782
  %v1048 = vmul.f32 %v1007, %v783
  %v1049 = vmul.f32 %v1007, %v784
  %v1050 = vmul.f32 %v1007, %v785
  %v1051 = vmul.f32 %v1007, %v786
  %v1052 = vmul.f32 %v1007, %v787
  %v1053 = vmul.f32 %v1007, %v788
  %v1054 = vmul.f32 %v1007, %v789
  %v1055 = vmul.f32 %v1007, %v790
  %v1056 = vmul.f32 %v1007, %v791
  %v1057 = vmul.f32 %v1007, %v792
  %v1058 = vmul.f32 %v1007, %v793
  %v1059 = vmul.f32 %v1007, %v794
  %v1060 = vmul.f32 %v1007, %v795
  %v1061 = vmul.f32 %v1007, %v796
  %v1062 = vmul.f32 %v1007, %v797
  %v1063 = vmul.f32 %v1007, %v798
  %v1064 = vmul.f32 %v1007, %v799
  %v1065 = vmul.f32 %v1007, %v800
  %v1066 = vmul.f32 %v1007, %v801
  %v1067 = vmul.f32 %v1007, %v802
  %v1068 = vmul.f32 %v1007, %v803
  %v1069 = vadd.f32 %v940, %v1008
  %v1070 = vadd.f32 %v941, %v1009
  %v1071 = vadd.f32 %v942, %v1010
  %v1072 = vadd.f32 %v943, %v1011
  %v1073 = vadd.f32 %v944, %v1012
  %v1074 = vadd.f32 %v945, %v1013
  %v1075 = vadd.f32 %v946, %v1014
  %v1076 = vadd.f32 %v947, %v1015
  %v1077 = vadd.f32 %v948, %v1016
  %v1078 = vadd.f32 %v949, %v1017
  %v1079 = vadd.f32 %v950, %v1018
  %v1080 = vadd.f32 %v951, %v1019
  %v1081 = vadd.f32 %v952, %v1020
  %v1082 = vadd.f32 %v953, %v1021
  %v1083 = vadd.f32 %v954, %v1022
  %v1084 = vadd.f32 %v955, %v1023
  %v1085 = vadd.f32 %v956, %v1024
  %v1086 = vadd.f32 %v957, %v1025
  %v1087 = vadd.f32 %v958, %v1026
  %v1088 = vadd.f32 %v959, %v1027
  %v1089 = vadd.f32 %v960, %v1028
  %v1090 = vadd.f32 %v961, %v1029
  %v1091 = vadd.f32 %v962, %v1030
  %v1092 = vadd.f32 %v963, %v1031
  %v1093 = vadd.f32 %v964, %v1032
  %v1094 = vadd.f32 %v965, %v1033
  %v1095 = vadd.f32 %v966, %v1034
  %v1096 = vadd.f32 %v967, %v1035
  %v1097 = vadd.f32 %v968, %v1036
  %v1098 = vadd.f32 %v969, %v1037
  %v1099 = vadd.f32 %v970, %v1038
  %v1100 = vadd.f32 %v971, %v1038
  %v1101 = vadd.f32 %v972, %v1039
  %v1102 = vadd.f32 %v973, %v1040
  %v1103 = vadd.f32 %v974, %v1041
  %v1104 = vadd.f32 %v975, %v1042
  %v1105 = vadd.f32 %v976, %v1043
  %v1106 = vadd.f32 %v977, %v1044
  %v1107 = vadd.f32 %v978, %v1045
  %v1108 = vadd.f32 %v979, %v1046
  %v1109 = vadd.f32 %v980, %v1047
  %v1110 = vadd.f32 %v981, %v1048
  %v1111 = vadd.f32 %v982, %v1049
  %v1112 = vadd.f32 %v983, %v1050
  %v1113 = vadd.f32 %v984, %v1051
  %v1114 = vadd.f32 %v985, %v1052
  %v1115 = vadd.f32 %v986, %v1053
  %v1116 = vadd.f32 %v987, %v1054
  %v1117 = vadd.f32 %v988, %v1055
  %v1118 = vadd.f32 %v989, %v1056
  %v1119 = vadd.f32 %v990, %v1057
  %v1120 = vadd.f32 %v991, %v1058
  %v1121 = vadd.f32 %v992, %v1059
  %v1122 = vadd.f32 %v993, %v1060
  %v1123 = vadd.f32 %v994, %v1061
  %v1124 = vadd.f32 %v995, %v1062
  %v1125 = vadd.f32 %v996, %v1063
  %v1126 = vadd.f32 %v997, %v1064
  %v1127 = vadd.f32 %v998, %v1065
  %v1128 = vadd.f32 %v999, %v1066
  %v1129 = vadd.f32 %v1000, %v1067
  %v1130 = vadd.f32 %v1001, %v1068
  %v1131 = vadd.f32 %v1002, %v1038
  %v1132 = vadd.f32 %v1003, %v1038
  %v1133 = vlaneseq
  %v1134 = vshrl.u32 %v1133, 7
  %v1135 = vsub.s32 1, %v1134
  %v1136 = vrot.slane %v804, %v1135
  %v1137 = vmul.f32 %v1136, 0.0
  %v1138 = vmul.f32 %v1136, %v740
  %v1139 = vmul.f32 %v1136, %v741
  %v1140 = vmul.f32 %v1136, %v742
  %v1141 = vmul.f32 %v1136, %v743
  %v1142 = vmul.f32 %v1136, %v744
  %v1143 = vmul.f32 %v1136, %v745
  %v1144 = vmul.f32 %v1136, %v746
  %v1145 = vmul.f32 %v1136, %v747
  %v1146 = vmul.f32 %v1136, %v748
  %v1147 = vmul.f32 %v1136, %v749
  %v1148 = vmul.f32 %v1136, %v750
  %v1149 = vmul.f32 %v1136, %v751
  %v1150 = vmul.f32 %v1136, %v752
  %v1151 = vmul.f32 %v1136, %v753
  %v1152 = vmul.f32 %v1136, %v754
  %v1153 = vmul.f32 %v1136, %v755
  %v1154 = vmul.f32 %v1136, %v756
  %v1155 = vmul.f32 %v1136, %v757
  %v1156 = vmul.f32 %v1136, %v758
  %v1157 = vmul.f32 %v1136, %v759
  %v1158 = vmul.f32 %v1136, %v760
  %v1159 = vmul.f32 %v1136, %v761
  %v1160 = vmul.f32 %v1136, %v762
  %v1161 = vmul.f32 %v1136, %v763
  %v1162 = vmul.f32 %v1136, %v764
  %v1163 = vmul.f32 %v1136, %v765
  %v1164 = vmul.f32 %v1136, %v766
  %v1165 = vmul.f32 %v1136, %v767
  %v1166 = vmul.f32 %v1136, %v768
  %v1167 = vmul.f32 %v1136, %v769
  %v1168 = vmul.f32 %v1136, %v772
  %v1169 = vmul.f32 %v1136, %v773
  %v1170 = vmul.f32 %v1136, %v774
  %v1171 = vmul.f32 %v1136, %v775
  %v1172 = vmul.f32 %v1136, %v776
  %v1173 = vmul.f32 %v1136, %v777
  %v1174 = vmul.f32 %v1136, %v778
  %v1175 = vmul.f32 %v1136, %v779
  %v1176 = vmul.f32 %v1136, %v780
  %v1177 = vmul.f32 %v1136, %v781
  %v1178 = vmul.f32 %v1136, %v782
  %v1179 = vmul.f32 %v1136, %v783
  %v1180 = vmul.f32 %v1136, %v784
  %v1181 = vmul.f32 %v1136, %v785
  %v1182 = vmul.f32 %v1136, %v786
  %v1183 = vmul.f32 %v1136, %v787
  %v1184 = vmul.f32 %v1136, %v788
  %v1185 = vmul.f32 %v1136, %v789
  %v1186 = vmul.f32 %v1136, %v790
  %v1187 = vmul.f32 %v1136, %v791
  %v1188 = vmul.f32 %v1136, %v792
  %v1189 = vmul.f32 %v1136, %v793
  %v1190 = vmul.f32 %v1136, %v794
  %v1191 = vmul.f32 %v1136, %v795
  %v1192 = vmul.f32 %v1136, %v796
  %v1193 = vmul.f32 %v1136, %v797
  %v1194 = vmul.f32 %v1136, %v798
  %v1195 = vmul.f32 %v1136, %v799
  %v1196 = vmul.f32 %v1136, %v800
  %v1197 = vmul.f32 %v1136, %v801
  %v1198 = vlaneseq
  %v1199 = vshrl.u32 %v1198, 7
  %v1200 = vsub.s32 1, %v1199
  %v1201 = vrot.slane %v805, %v1200
  %v1202 = vmul.f32 %v1201, %v740
  %v1203 = vmul.f32 %v1201, %v741
  %v1204 = vmul.f32 %v1201, %v742
  %v1205 = vmul.f32 %v1201, %v743
  %v1206 = vmul.f32 %v1201, %v744
  %v1207 = vmul.f32 %v1201, %v745
  %v1208 = vmul.f32 %v1201, %v746
  %v1209 = vmul.f32 %v1201, %v747
  %v1210 = vmul.f32 %v1201, %v748
  %v1211 = vmul.f32 %v1201, %v749
  %v1212 = vmul.f32 %v1201, %v750
  %v1213 = vmul.f32 %v1201, %v751
  %v1214 = vmul.f32 %v1201, %v752
  %v1215 = vmul.f32 %v1201, %v753
  %v1216 = vmul.f32 %v1201, %v754
  %v1217 = vmul.f32 %v1201, %v755
  %v1218 = vmul.f32 %v1201, %v756
  %v1219 = vmul.f32 %v1201, %v757
  %v1220 = vmul.f32 %v1201, %v758
  %v1221 = vmul.f32 %v1201, %v759
  %v1222 = vmul.f32 %v1201, %v760
  %v1223 = vmul.f32 %v1201, %v761
  %v1224 = vmul.f32 %v1201, %v762
  %v1225 = vmul.f32 %v1201, %v763
  %v1226 = vmul.f32 %v1201, %v764
  %v1227 = vmul.f32 %v1201, %v765
  %v1228 = vmul.f32 %v1201, %v766
  %v1229 = vmul.f32 %v1201, %v767
  %v1230 = vmul.f32 %v1201, %v768
  %v1231 = vmul.f32 %v1201, %v769
  %v1232 = vmul.f32 %v1201, %v770
  %v1233 = vmul.f32 %v1201, %v771
  %v1234 = vmul.f32 %v1201, %v772
  %v1235 = vmul.f32 %v1201, %v773
  %v1236 = vmul.f32 %v1201, %v774
  %v1237 = vmul.f32 %v1201, %v775
  %v1238 = vmul.f32 %v1201, %v776
  %v1239 = vmul.f32 %v1201, %v777
  %v1240 = vmul.f32 %v1201, %v778
  %v1241 = vmul.f32 %v1201, %v779
  %v1242 = vmul.f32 %v1201, %v780
  %v1243 = vmul.f32 %v1201, %v781
  %v1244 = vmul.f32 %v1201, %v782
  %v1245 = vmul.f32 %v1201, %v783
  %v1246 = vmul.f32 %v1201, %v784
  %v1247 = vmul.f32 %v1201, %v785
  %v1248 = vmul.f32 %v1201, %v786
  %v1249 = vmul.f32 %v1201, %v787
  %v1250 = vmul.f32 %v1201, %v788
  %v1251 = vmul.f32 %v1201, %v789
  %v1252 = vmul.f32 %v1201, %v790
  %v1253 = vmul.f32 %v1201, %v791
  %v1254 = vmul.f32 %v1201, %v792
  %v1255 = vmul.f32 %v1201, %v793
  %v1256 = vmul.f32 %v1201, %v794
  %v1257 = vmul.f32 %v1201, %v795
  %v1258 = vmul.f32 %v1201, %v796
  %v1259 = vmul.f32 %v1201, %v797
  %v1260 = vmul.f32 %v1201, %v798
  %v1261 = vmul.f32 %v1201, %v799
  %v1262 = vmul.f32 %v1201, %v800
  %v1263 = vmul.f32 %v1201, %v801
  %v1264 = vmul.f32 %v1201, %v802
  %v1265 = vmul.f32 %v1201, %v803
  %v1266 = vadd.f32 %v1137, %v1202
  %v1267 = vadd.f32 %v1137, %v1203
  %v1268 = vadd.f32 %v1138, %v1204
  %v1269 = vadd.f32 %v1139, %v1205
  %v1270 = vadd.f32 %v1140, %v1206
  %v1271 = vadd.f32 %v1141, %v1207
  %v1272 = vadd.f32 %v1142, %v1208
  %v1273 = vadd.f32 %v1143, %v1209
  %v1274 = vadd.f32 %v1144, %v1210
  %v1275 = vadd.f32 %v1145, %v1211
  %v1276 = vadd.f32 %v1146, %v1212
  %v1277 = vadd.f32 %v1147, %v1213
  %v1278 = vadd.f32 %v1148, %v1214
  %v1279 = vadd.f32 %v1149, %v1215
  %v1280 = vadd.f32 %v1150, %v1216
  %v1281 = vadd.f32 %v1151, %v1217
  %v1282 = vadd.f32 %v1152, %v1218
  %v1283 = vadd.f32 %v1153, %v1219
  %v1284 = vadd.f32 %v1154, %v1220
  %v1285 = vadd.f32 %v1155, %v1221
  %v1286 = vadd.f32 %v1156, %v1222
  %v1287 = vadd.f32 %v1157, %v1223
  %v1288 = vadd.f32 %v1158, %v1224
  %v1289 = vadd.f32 %v1159, %v1225
  %v1290 = vadd.f32 %v1160, %v1226
  %v1291 = vadd.f32 %v1161, %v1227
  %v1292 = vadd.f32 %v1162, %v1228
  %v1293 = vadd.f32 %v1163, %v1229
  %v1294 = vadd.f32 %v1164, %v1230
  %v1295 = vadd.f32 %v1165, %v1231
  %v1296 = vadd.f32 %v1166, %v1232
  %v1297 = vadd.f32 %v1167, %v1233
  %v1298 = vadd.f32 %v1137, %v1234
  %v1299 = vadd.f32 %v1137, %v1235
  %v1300 = vadd.f32 %v1168, %v1236
  %v1301 = vadd.f32 %v1169, %v1237
  %v1302 = vadd.f32 %v1170, %v1238
  %v1303 = vadd.f32 %v1171, %v1239
  %v1304 = vadd.f32 %v1172, %v1240
  %v1305 = vadd.f32 %v1173, %v1241
  %v1306 = vadd.f32 %v1174, %v1242
  %v1307 = vadd.f32 %v1175, %v1243
  %v1308 = vadd.f32 %v1176, %v1244
  %v1309 = vadd.f32 %v1177, %v1245
  %v1310 = vadd.f32 %v1178, %v1246
  %v1311 = vadd.f32 %v1179, %v1247
  %v1312 = vadd.f32 %v1180, %v1248
  %v1313 = vadd.f32 %v1181, %v1249
  %v1314 = vadd.f32 %v1182, %v1250
  %v1315 = vadd.f32 %v1183, %v1251
  %v1316 = vadd.f32 %v1184, %v1252
  %v1317 = vadd.f32 %v1185, %v1253
  %v1318 = vadd.f32 %v1186, %v1254
  %v1319 = vadd.f32 %v1187, %v1255
  %v1320 = vadd.f32 %v1188, %v1256
  %v1321 = vadd.f32 %v1189, %v1257
  %v1322 = vadd.f32 %v1190, %v1258
  %v1323 = vadd.f32 %v1191, %v1259
  %v1324 = vadd.f32 %v1192, %v1260
  %v1325 = vadd.f32 %v1193, %v1261
  %v1326 = vadd.f32 %v1194, %v1262
  %v1327 = vadd.f32 %v1195, %v1263
  %v1328 = vadd.f32 %v1196, %v1264
  %v1329 = vadd.f32 %v1197, %v1265
  %v1330 = vlaneseq
  %v1331 = vshrl.u32 %v1330, 7
  %v1332 = vsub.s32 1, %v1331
  %v1333 = vrot.slane %v806, %v1332
  %v1334 = vmul.f32 %v1333, %v742
  %v1335 = vmul.f32 %v1333, %v743
  %v1336 = vmul.f32 %v1333, %v744
  %v1337 = vmul.f32 %v1333, %v745
  %v1338 = vmul.f32 %v1333, %v746
  %v1339 = vmul.f32 %v1333, %v747
  %v1340 = vmul.f32 %v1333, %v748
  %v1341 = vmul.f32 %v1333, %v749
  %v1342 = vmul.f32 %v1333, %v750
  %v1343 = vmul.f32 %v1333, %v751
  %v1344 = vmul.f32 %v1333, %v752
  %v1345 = vmul.f32 %v1333, %v753
  %v1346 = vmul.f32 %v1333, %v754
  %v1347 = vmul.f32 %v1333, %v755
  %v1348 = vmul.f32 %v1333, %v756
  %v1349 = vmul.f32 %v1333, %v757
  %v1350 = vmul.f32 %v1333, %v758
  %v1351 = vmul.f32 %v1333, %v759
  %v1352 = vmul.f32 %v1333, %v760
  %v1353 = vmul.f32 %v1333, %v761
  %v1354 = vmul.f32 %v1333, %v762
  %v1355 = vmul.f32 %v1333, %v763
  %v1356 = vmul.f32 %v1333, %v764
  %v1357 = vmul.f32 %v1333, %v765
  %v1358 = vmul.f32 %v1333, %v766
  %v1359 = vmul.f32 %v1333, %v767
  %v1360 = vmul.f32 %v1333, %v768
  %v1361 = vmul.f32 %v1333, %v769
  %v1362 = vmul.f32 %v1333, %v770
  %v1363 = vmul.f32 %v1333, %v771
  %v1364 = vmul.f32 %v1333, 0.0
  %v1365 = vmul.f32 %v1333, %v774
  %v1366 = vmul.f32 %v1333, %v775
  %v1367 = vmul.f32 %v1333, %v776
  %v1368 = vmul.f32 %v1333, %v777
  %v1369 = vmul.f32 %v1333, %v778
  %v1370 = vmul.f32 %v1333, %v779
  %v1371 = vmul.f32 %v1333, %v780
  %v1372 = vmul.f32 %v1333, %v781
  %v1373 = vmul.f32 %v1333, %v782
  %v1374 = vmul.f32 %v1333, %v783
  %v1375 = vmul.f32 %v1333, %v784
  %v1376 = vmul.f32 %v1333, %v785
  %v1377 = vmul.f32 %v1333, %v786
  %v1378 = vmul.f32 %v1333, %v787
  %v1379 = vmul.f32 %v1333, %v788
  %v1380 = vmul.f32 %v1333, %v789
  %v1381 = vmul.f32 %v1333, %v790
  %v1382 = vmul.f32 %v1333, %v791
  %v1383 = vmul.f32 %v1333, %v792
  %v1384 = vmul.f32 %v1333, %v793
  %v1385 = vmul.f32 %v1333, %v794
  %v1386 = vmul.f32 %v1333, %v795
  %v1387 = vmul.f32 %v1333, %v796
  %v1388 = vmul.f32 %v1333, %v797
  %v1389 = vmul.f32 %v1333, %v798
  %v1390 = vmul.f32 %v1333, %v799
  %v1391 = vmul.f32 %v1333, %v800
  %v1392 = vmul.f32 %v1333, %v801
  %v1393 = vmul.f32 %v1333, %v802
  %v1394 = vmul.f32 %v1333, %v803
  %v1395 = vadd.f32 %v1266, %v1334
  %v1396 = vadd.f32 %v1267, %v1335
  %v1397 = vadd.f32 %v1268, %v1336
  %v1398 = vadd.f32 %v1269, %v1337
  %v1399 = vadd.f32 %v1270, %v1338
  %v1400 = vadd.f32 %v1271, %v1339
  %v1401 = vadd.f32 %v1272, %v1340
  %v1402 = vadd.f32 %v1273, %v1341
  %v1403 = vadd.f32 %v1274, %v1342
  %v1404 = vadd.f32 %v1275, %v1343
  %v1405 = vadd.f32 %v1276, %v1344
  %v1406 = vadd.f32 %v1277, %v1345
  %v1407 = vadd.f32 %v1278, %v1346
  %v1408 = vadd.f32 %v1279, %v1347
  %v1409 = vadd.f32 %v1280, %v1348
  %v1410 = vadd.f32 %v1281, %v1349
  %v1411 = vadd.f32 %v1282, %v1350
  %v1412 = vadd.f32 %v1283, %v1351
  %v1413 = vadd.f32 %v1284, %v1352
  %v1414 = vadd.f32 %v1285, %v1353
  %v1415 = vadd.f32 %v1286, %v1354
  %v1416 = vadd.f32 %v1287, %v1355
  %v1417 = vadd.f32 %v1288, %v1356
  %v1418 = vadd.f32 %v1289, %v1357
  %v1419 = vadd.f32 %v1290, %v1358
  %v1420 = vadd.f32 %v1291, %v1359
  %v1421 = vadd.f32 %v1292, %v1360
  %v1422 = vadd.f32 %v1293, %v1361
  %v1423 = vadd.f32 %v1294, %v1362
  %v1424 = vadd.f32 %v1295, %v1363
  %v1425 = vadd.f32 %v1296, %v1364
  %v1426 = vadd.f32 %v1297, %v1364
  %v1427 = vadd.f32 %v1298, %v1365
  %v1428 = vadd.f32 %v1299, %v1366
  %v1429 = vadd.f32 %v1300, %v1367
  %v1430 = vadd.f32 %v1301, %v1368
  %v1431 = vadd.f32 %v1302, %v1369
  %v1432 = vadd.f32 %v1303, %v1370
  %v1433 = vadd.f32 %v1304, %v1371
  %v1434 = vadd.f32 %v1305, %v1372
  %v1435 = vadd.f32 %v1306, %v1373
  %v1436 = vadd.f32 %v1307, %v1374
  %v1437 = vadd.f32 %v1308, %v1375
  %v1438 = vadd.f32 %v1309, %v1376
  %v1439 = vadd.f32 %v1310, %v1377
  %v1440 = vadd.f32 %v1311, %v1378
  %v1441 = vadd.f32 %v1312, %v1379
  %v1442 = vadd.f32 %v1313, %v1380
  %v1443 = vadd.f32 %v1314, %v1381
  %v1444 = vadd.f32 %v1315, %v1382
  %v1445 = vadd.f32 %v1316, %v1383
  %v1446 = vadd.f32 %v1317, %v1384
  %v1447 = vadd.f32 %v1318, %v1385
  %v1448 = vadd.f32 %v1319, %v1386
  %v1449 = vadd.f32 %v1320, %v1387
  %v1450 = vadd.f32 %v1321, %v1388
  %v1451 = vadd.f32 %v1322, %v1389
  %v1452 = vadd.f32 %v1323, %v1390
  %v1453 = vadd.f32 %v1324, %v1391
  %v1454 = vadd.f32 %v1325, %v1392
  %v1455 = vadd.f32 %v1326, %v1393
  %v1456 = vadd.f32 %v1327, %v1394
  %v1457 = vadd.f32 %v1328, %v1364
  %v1458 = vadd.f32 %v1329, %v1364
  %v1459 = vlaneseq
  %v1460 = vshrl.u32 %v1459, 7
  %v1461 = vsub.s32 2, %v1460
  %v1462 = vrot.slane %v804, %v1461
  %v1463 = vmul.f32 %v1462, 0.0
  %v1464 = vmul.f32 %v1462, %v740
  %v1465 = vmul.f32 %v1462, %v741
  %v1466 = vmul.f32 %v1462, %v742
  %v1467 = vmul.f32 %v1462, %v743
  %v1468 = vmul.f32 %v1462, %v744
  %v1469 = vmul.f32 %v1462, %v745
  %v1470 = vmul.f32 %v1462, %v746
  %v1471 = vmul.f32 %v1462, %v747
  %v1472 = vmul.f32 %v1462, %v748
  %v1473 = vmul.f32 %v1462, %v749
  %v1474 = vmul.f32 %v1462, %v750
  %v1475 = vmul.f32 %v1462, %v751
  %v1476 = vmul.f32 %v1462, %v752
  %v1477 = vmul.f32 %v1462, %v753
  %v1478 = vmul.f32 %v1462, %v754
  %v1479 = vmul.f32 %v1462, %v755
  %v1480 = vmul.f32 %v1462, %v756
  %v1481 = vmul.f32 %v1462, %v757
  %v1482 = vmul.f32 %v1462, %v758
  %v1483 = vmul.f32 %v1462, %v759
  %v1484 = vmul.f32 %v1462, %v760
  %v1485 = vmul.f32 %v1462, %v761
  %v1486 = vmul.f32 %v1462, %v762
  %v1487 = vmul.f32 %v1462, %v763
  %v1488 = vmul.f32 %v1462, %v764
  %v1489 = vmul.f32 %v1462, %v765
  %v1490 = vmul.f32 %v1462, %v766
  %v1491 = vmul.f32 %v1462, %v767
  %v1492 = vmul.f32 %v1462, %v768
  %v1493 = vmul.f32 %v1462, %v769
  %v1494 = vmul.f32 %v1462, %v772
  %v1495 = vmul.f32 %v1462, %v773
  %v1496 = vmul.f32 %v1462, %v774
  %v1497 = vmul.f32 %v1462, %v775
  %v1498 = vmul.f32 %v1462, %v776
  %v1499 = vmul.f32 %v1462, %v777
  %v1500 = vmul.f32 %v1462, %v778
  %v1501 = vmul.f32 %v1462, %v779
  %v1502 = vmul.f32 %v1462, %v780
  %v1503 = vmul.f32 %v1462, %v781
  %v1504 = vmul.f32 %v1462, %v782
  %v1505 = vmul.f32 %v1462, %v783
  %v1506 = vmul.f32 %v1462, %v784
  %v1507 = vmul.f32 %v1462, %v785
  %v1508 = vmul.f32 %v1462, %v786
  %v1509 = vmul.f32 %v1462, %v787
  %v1510 = vmul.f32 %v1462, %v788
  %v1511 = vmul.f32 %v1462, %v789
  %v1512 = vmul.f32 %v1462, %v790
  %v1513 = vmul.f32 %v1462, %v791
  %v1514 = vmul.f32 %v1462, %v792
  %v1515 = vmul.f32 %v1462, %v793
  %v1516 = vmul.f32 %v1462, %v794
  %v1517 = vmul.f32 %v1462, %v795
  %v1518 = vmul.f32 %v1462, %v796
  %v1519 = vmul.f32 %v1462, %v797
  %v1520 = vmul.f32 %v1462, %v798
  %v1521 = vmul.f32 %v1462, %v799
  %v1522 = vmul.f32 %v1462, %v800
  %v1523 = vmul.f32 %v1462, %v801
  %v1524 = vlaneseq
  %v1525 = vshrl.u32 %v1524, 7
  %v1526 = vsub.s32 2, %v1525
  %v1527 = vrot.slane %v805, %v1526
  %v1528 = vmul.f32 %v1527, %v740
  %v1529 = vmul.f32 %v1527, %v741
  %v1530 = vmul.f32 %v1527, %v742
  %v1531 = vmul.f32 %v1527, %v743
  %v1532 = vmul.f32 %v1527, %v744
  %v1533 = vmul.f32 %v1527, %v745
  %v1534 = vmul.f32 %v1527, %v746
  %v1535 = vmul.f32 %v1527, %v747
  %v1536 = vmul.f32 %v1527, %v748
  %v1537 = vmul.f32 %v1527, %v749
  %v1538 = vmul.f32 %v1527, %v750
  %v1539 = vmul.f32 %v1527, %v751
  %v1540 = vmul.f32 %v1527, %v752
  %v1541 = vmul.f32 %v1527, %v753
  %v1542 = vmul.f32 %v1527, %v754
  %v1543 = vmul.f32 %v1527, %v755
  %v1544 = vmul.f32 %v1527, %v756
  %v1545 = vmul.f32 %v1527, %v757
  %v1546 = vmul.f32 %v1527, %v758
  %v1547 = vmul.f32 %v1527, %v759
  %v1548 = vmul.f32 %v1527, %v760
  %v1549 = vmul.f32 %v1527, %v761
  %v1550 = vmul.f32 %v1527, %v762
  %v1551 = vmul.f32 %v1527, %v763
  %v1552 = vmul.f32 %v1527, %v764
  %v1553 = vmul.f32 %v1527, %v765
  %v1554 = vmul.f32 %v1527, %v766
  %v1555 = vmul.f32 %v1527, %v767
  %v1556 = vmul.f32 %v1527, %v768
  %v1557 = vmul.f32 %v1527, %v769
  %v1558 = vmul.f32 %v1527, %v770
  %v1559 = vmul.f32 %v1527, %v771
  %v1560 = vmul.f32 %v1527, %v772
  %v1561 = vmul.f32 %v1527, %v773
  %v1562 = vmul.f32 %v1527, %v774
  %v1563 = vmul.f32 %v1527, %v775
  %v1564 = vmul.f32 %v1527, %v776
  %v1565 = vmul.f32 %v1527, %v777
  %v1566 = vmul.f32 %v1527, %v778
  %v1567 = vmul.f32 %v1527, %v779
  %v1568 = vmul.f32 %v1527, %v780
  %v1569 = vmul.f32 %v1527, %v781
  %v1570 = vmul.f32 %v1527, %v782
  %v1571 = vmul.f32 %v1527, %v783
  %v1572 = vmul.f32 %v1527, %v784
  %v1573 = vmul.f32 %v1527, %v785
  %v1574 = vmul.f32 %v1527, %v786
  %v1575 = vmul.f32 %v1527, %v787
  %v1576 = vmul.f32 %v1527, %v788
  %v1577 = vmul.f32 %v1527, %v789
  %v1578 = vmul.f32 %v1527, %v790
  %v1579 = vmul.f32 %v1527, %v791
  %v1580 = vmul.f32 %v1527, %v792
  %v1581 = vmul.f32 %v1527, %v793
  %v1582 = vmul.f32 %v1527, %v794
  %v1583 = vmul.f32 %v1527, %v795
  %v1584 = vmul.f32 %v1527, %v796
  %v1585 = vmul.f32 %v1527, %v797
  %v1586 = vmul.f32 %v1527, %v798
  %v1587 = vmul.f32 %v1527, %v799
  %v1588 = vmul.f32 %v1527, %v800
  %v1589 = vmul.f32 %v1527, %v801
  %v1590 = vmul.f32 %v1527, %v802
  %v1591 = vmul.f32 %v1527, %v803
  %v1592 = vadd.f32 %v1463, %v1528
  %v1593 = vadd.f32 %v1463, %v1529
  %v1594 = vadd.f32 %v1464, %v1530
  %v1595 = vadd.f32 %v1465, %v1531
  %v1596 = vadd.f32 %v1466, %v1532
  %v1597 = vadd.f32 %v1467, %v1533
  %v1598 = vadd.f32 %v1468, %v1534
  %v1599 = vadd.f32 %v1469, %v1535
  %v1600 = vadd.f32 %v1470, %v1536
  %v1601 = vadd.f32 %v1471, %v1537
  %v1602 = vadd.f32 %v1472, %v1538
  %v1603 = vadd.f32 %v1473, %v1539
  %v1604 = vadd.f32 %v1474, %v1540
  %v1605 = vadd.f32 %v1475, %v1541
  %v1606 = vadd.f32 %v1476, %v1542
  %v1607 = vadd.f32 %v1477, %v1543
  %v1608 = vadd.f32 %v1478, %v1544
  %v1609 = vadd.f32 %v1479, %v1545
  %v1610 = vadd.f32 %v1480, %v1546
  %v1611 = vadd.f32 %v1481, %v1547
  %v1612 = vadd.f32 %v1482, %v1548
  %v1613 = vadd.f32 %v1483, %v1549
  %v1614 = vadd.f32 %v1484, %v1550
  %v1615 = vadd.f32 %v1485, %v1551
  %v1616 = vadd.f32 %v1486, %v1552
  %v1617 = vadd.f32 %v1487, %v1553
  %v1618 = vadd.f32 %v1488, %v1554
  %v1619 = vadd.f32 %v1489, %v1555
  %v1620 = vadd.f32 %v1490, %v1556
  %v1621 = vadd.f32 %v1491, %v1557
  %v1622 = vadd.f32 %v1492, %v1558
  %v1623 = vadd.f32 %v1493, %v1559
  %v1624 = vadd.f32 %v1463, %v1560
  %v1625 = vadd.f32 %v1463, %v1561
  %v1626 = vadd.f32 %v1494, %v1562
  %v1627 = vadd.f32 %v1495, %v1563
  %v1628 = vadd.f32 %v1496, %v1564
  %v1629 = vadd.f32 %v1497, %v1565
  %v1630 = vadd.f32 %v1498, %v1566
  %v1631 = vadd.f32 %v1499, %v1567
  %v1632 = vadd.f32 %v1500, %v1568
  %v1633 = vadd.f32 %v1501, %v1569
  %v1634 = vadd.f32 %v1502, %v1570
  %v1635 = vadd.f32 %v1503, %v1571
  %v1636 = vadd.f32 %v1504, %v1572
  %v1637 = vadd.f32 %v1505, %v1573
  %v1638 = vadd.f32 %v1506, %v1574
  %v1639 = vadd.f32 %v1507, %v1575
  %v1640 = vadd.f32 %v1508, %v1576
  %v1641 = vadd.f32 %v1509, %v1577
  %v1642 = vadd.f32 %v1510, %v1578
  %v1643 = vadd.f32 %v1511, %v1579
  %v1644 = vadd.f32 %v1512, %v1580
  %v1645 = vadd.f32 %v1513, %v1581
  %v1646 = vadd.f32 %v1514, %v1582
  %v1647 = vadd.f32 %v1515, %v1583
  %v1648 = vadd.f32 %v1516, %v1584
  %v1649 = vadd.f32 %v1517, %v1585
  %v1650 = vadd.f32 %v1518, %v1586
  %v1651 = vadd.f32 %v1519, %v1587
  %v1652 = vadd.f32 %v1520, %v1588
  %v1653 = vadd.f32 %v1521, %v1589
  %v1654 = vadd.f32 %v1522, %v1590
  %v1655 = vadd.f32 %v1523, %v1591
  %v1656 = vlaneseq
  %v1657 = vshrl.u32 %v1656, 7
  %v1658 = vsub.s32 2, %v1657
  %v1659 = vrot.slane %v806, %v1658
  %v1660 = vmul.f32 %v1659, %v742
  %v1661 = vmul.f32 %v1659, %v743
  %v1662 = vmul.f32 %v1659, %v744
  %v1663 = vmul.f32 %v1659, %v745
  %v1664 = vmul.f32 %v1659, %v746
  %v1665 = vmul.f32 %v1659, %v747
  %v1666 = vmul.f32 %v1659, %v748
  %v1667 = vmul.f32 %v1659, %v749
  %v1668 = vmul.f32 %v1659, %v750
  %v1669 = vmul.f32 %v1659, %v751
  %v1670 = vmul.f32 %v1659, %v752
  %v1671 = vmul.f32 %v1659, %v753
  %v1672 = vmul.f32 %v1659, %v754
  %v1673 = vmul.f32 %v1659, %v755
  %v1674 = vmul.f32 %v1659, %v756
  %v1675 = vmul.f32 %v1659, %v757
  %v1676 = vmul.f32 %v1659, %v758
  %v1677 = vmul.f32 %v1659, %v759
  %v1678 = vmul.f32 %v1659, %v760
  %v1679 = vmul.f32 %v1659, %v761
  %v1680 = vmul.f32 %v1659, %v762
  %v1681 = vmul.f32 %v1659, %v763
  %v1682 = vmul.f32 %v1659, %v764
  %v1683 = vmul.f32 %v1659, %v765
  %v1684 = vmul.f32 %v1659, %v766
  %v1685 = vmul.f32 %v1659, %v767
  %v1686 = vmul.f32 %v1659, %v768
  %v1687 = vmul.f32 %v1659, %v769
  %v1688 = vmul.f32 %v1659, %v770
  %v1689 = vmul.f32 %v1659, %v771
  %v1690 = vmul.f32 %v1659, 0.0
  %v1691 = vmul.f32 %v1659, %v774
  %v1692 = vmul.f32 %v1659, %v775
  %v1693 = vmul.f32 %v1659, %v776
  %v1694 = vmul.f32 %v1659, %v777
  %v1695 = vmul.f32 %v1659, %v778
  %v1696 = vmul.f32 %v1659, %v779
  %v1697 = vmul.f32 %v1659, %v780
  %v1698 = vmul.f32 %v1659, %v781
  %v1699 = vmul.f32 %v1659, %v782
  %v1700 = vmul.f32 %v1659, %v783
  %v1701 = vmul.f32 %v1659, %v784
  %v1702 = vmul.f32 %v1659, %v785
  %v1703 = vmul.f32 %v1659, %v786
  %v1704 = vmul.f32 %v1659, %v787
  %v1705 = vmul.f32 %v1659, %v788
  %v1706 = vmul.f32 %v1659, %v789
  %v1707 = vmul.f32 %v1659, %v790
  %v1708 = vmul.f32 %v1659, %v791
  %v1709 = vmul.f32 %v1659, %v792
  %v1710 = vmul.f32 %v1659, %v793
  %v1711 = vmul.f32 %v1659, %v794
  %v1712 = vmul.f32 %v1659, %v795
  %v1713 = vmul.f32 %v1659, %v796
  %v1714 = vmul.f32 %v1659, %v797
  %v1715 = vmul.f32 %v1659, %v798
  %v1716 = vmul.f32 %v1659, %v799
  %v1717 = vmul.f32 %v1659, %v800
  %v1718 = vmul.f32 %v1659, %v801
  %v1719 = vmul.f32 %v1659, %v802
  %v1720 = vmul.f32 %v1659, %v803
  %v1721 = vadd.f32 %v1592, %v1660
  %v1722 = vadd.f32 %v1593, %v1661
  %v1723 = vadd.f32 %v1594, %v1662
  %v1724 = vadd.f32 %v1595, %v1663
  %v1725 = vadd.f32 %v1596, %v1664
  %v1726 = vadd.f32 %v1597, %v1665
  %v1727 = vadd.f32 %v1598, %v1666
  %v1728 = vadd.f32 %v1599, %v1667
  %v1729 = vadd.f32 %v1600, %v1668
  %v1730 = vadd.f32 %v1601, %v1669
  %v1731 = vadd.f32 %v1602, %v1670
  %v1732 = vadd.f32 %v1603, %v1671
  %v1733 = vadd.f32 %v1604, %v1672
  %v1734 = vadd.f32 %v1605, %v1673
  %v1735 = vadd.f32 %v1606, %v1674
  %v1736 = vadd.f32 %v1607, %v1675
  %v1737 = vadd.f32 %v1608, %v1676
  %v1738 = vadd.f32 %v1609, %v1677
  %v1739 = vadd.f32 %v1610, %v1678
  %v1740 = vadd.f32 %v1611, %v1679
  %v1741 = vadd.f32 %v1612, %v1680
  %v1742 = vadd.f32 %v1613, %v1681
  %v1743 = vadd.f32 %v1614, %v1682
  %v1744 = vadd.f32 %v1615, %v1683
  %v1745 = vadd.f32 %v1616, %v1684
  %v1746 = vadd.f32 %v1617, %v1685
  %v1747 = vadd.f32 %v1618, %v1686
  %v1748 = vadd.f32 %v1619, %v1687
  %v1749 = vadd.f32 %v1620, %v1688
  %v1750 = vadd.f32 %v1621, %v1689
  %v1751 = vadd.f32 %v1622, %v1690
  %v1752 = vadd.f32 %v1623, %v1690
  %v1753 = vadd.f32 %v1624, %v1691
  %v1754 = vadd.f32 %v1625, %v1692
  %v1755 = vadd.f32 %v1626, %v1693
  %v1756 = vadd.f32 %v1627, %v1694
  %v1757 = vadd.f32 %v1628, %v1695
  %v1758 = vadd.f32 %v1629, %v1696
  %v1759 = vadd.f32 %v1630, %v1697
  %v1760 = vadd.f32 %v1631, %v1698
  %v1761 = vadd.f32 %v1632, %v1699
  %v1762 = vadd.f32 %v1633, %v1700
  %v1763 = vadd.f32 %v1634, %v1701
  %v1764 = vadd.f32 %v1635, %v1702
  %v1765 = vadd.f32 %v1636, %v1703
  %v1766 = vadd.f32 %v1637, %v1704
  %v1767 = vadd.f32 %v1638, %v1705
  %v1768 = vadd.f32 %v1639, %v1706
  %v1769 = vadd.f32 %v1640, %v1707
  %v1770 = vadd.f32 %v1641, %v1708
  %v1771 = vadd.f32 %v1642, %v1709
  %v1772 = vadd.f32 %v1643, %v1710
  %v1773 = vadd.f32 %v1644, %v1711
  %v1774 = vadd.f32 %v1645, %v1712
  %v1775 = vadd.f32 %v1646, %v1713
  %v1776 = vadd.f32 %v1647, %v1714
  %v1777 = vadd.f32 %v1648, %v1715
  %v1778 = vadd.f32 %v1649, %v1716
  %v1779 = vadd.f32 %v1650, %v1717
  %v1780 = vadd.f32 %v1651, %v1718
  %v1781 = vadd.f32 %v1652, %v1719
  %v1782 = vadd.f32 %v1653, %v1720
  %v1783 = vadd.f32 %v1654, %v1690
  %v1784 = vadd.f32 %v1655, %v1690
  %vm1785 = vcmask 253952
  %1786 = vst.msk [vmem:[#allocation2] sm:$0x1] %vm1785, 0.0
  %1787 = vst.msk [vmem:[#allocation2 + $0x18] sm:$0x1] %vm1785, 0.0
  %1788 = vst.msk [vmem:[#allocation2 + $0x30] sm:$0x1] %vm1785, 0.0
  %1789 = vst.msk [vmem:[#allocation2 + $0x48] sm:$0x1] %vm1785, 0.0
  %1790 = vst.msk [vmem:[#allocation2 + $0x60] sm:$0x1] %vm1785, 0.0
  %1791 = vst.msk [vmem:[#allocation2 + $0x78] sm:$0x1] %vm1785, 0.0
  %1792 = vst.msk [vmem:[#allocation2 + $0x90] sm:$0x1] %vm1785, 0.0
  %1793 = vst.msk [vmem:[#allocation2 + $0xa8] sm:$0x1] %vm1785, 0.0
  %1794 = vst.msk [vmem:[#allocation2 + $0xc0] sm:$0x1] %vm1785, 0.0
  %1795 = vst.msk [vmem:[#allocation2 + $0xd8] sm:$0x1] %vm1785, 0.0
  %1796 = vst.msk [vmem:[#allocation2 + $0xf0] sm:$0x1] %vm1785, 0.0
  %1797 = vst.msk [vmem:[#allocation2 + $0x108] sm:$0x1] %vm1785, 0.0
  %1798 = vst.msk [vmem:[#allocation2 + $0x120] sm:$0x1] %vm1785, 0.0
  %1799 = vst.msk [vmem:[#allocation2 + $0x138] sm:$0x1] %vm1785, 0.0
  %1800 = vst.msk [vmem:[#allocation2 + $0x150] sm:$0x1] %vm1785, 0.0
  %1801 = vst.msk [vmem:[#allocation2 + $0x168] sm:$0x1] %vm1785, 0.0
  %1802 = vst.msk [vmem:[#allocation2 + $0x180] sm:$0x1] %vm1785, 0.0
  %1803 = vst.msk [vmem:[#allocation2 + $0x198] sm:$0x1] %vm1785, 0.0
  %1804 = vst.msk [vmem:[#allocation2 + $0x1b0] sm:$0x1] %vm1785, 0.0
  %1805 = vst.msk [vmem:[#allocation2 + $0x1c8] sm:$0x1] %vm1785, 0.0
  %1806 = vst.msk [vmem:[#allocation2 + $0x1e0] sm:$0x1] %vm1785, 0.0
  %1807 = vst.msk [vmem:[#allocation2 + $0x1f8] sm:$0x1] %vm1785, 0.0
  %1808 = vst.msk [vmem:[#allocation2 + $0x210] sm:$0x1] %vm1785, 0.0
  %1809 = vst.msk [vmem:[#allocation2 + $0x228] sm:$0x1] %vm1785, 0.0
  %1810 = vst.msk [vmem:[#allocation2 + $0x240] sm:$0x1] %vm1785, 0.0
  %1811 = vst.msk [vmem:[#allocation2 + $0x258] sm:$0x1] %vm1785, 0.0
  %1812 = vst.msk [vmem:[#allocation2 + $0x270] sm:$0x1] %vm1785, 0.0
  %1813 = vst.msk [vmem:[#allocation2 + $0x288] sm:$0x1] %vm1785, 0.0
  %1814 = vst.msk [vmem:[#allocation2 + $0x2a0] sm:$0x1] %vm1785, 0.0
  %1815 = vst.msk [vmem:[#allocation2 + $0x2b8] sm:$0x1] %vm1785, 0.0
  %1816 = vst.msk [vmem:[#allocation2 + $0x2d0] sm:$0x1] %vm1785, 0.0
  %1817 = vst.msk [vmem:[#allocation2 + $0x2e8] sm:$0x1] %vm1785, 0.0
  %1818 = vst.msk [vmem:[#allocation2 + $0x11] sm:$0x1] %vm1785, 0.0
  %1819 = vst.msk [vmem:[#allocation2 + $0x29] sm:$0x1] %vm1785, 0.0
  %1820 = vst.msk [vmem:[#allocation2 + $0x41] sm:$0x1] %vm1785, 0.0
  %1821 = vst.msk [vmem:[#allocation2 + $0x59] sm:$0x1] %vm1785, 0.0
  %1822 = vst.msk [vmem:[#allocation2 + $0x71] sm:$0x1] %vm1785, 0.0
  %1823 = vst.msk [vmem:[#allocation2 + $0x89] sm:$0x1] %vm1785, 0.0
  %1824 = vst.msk [vmem:[#allocation2 + $0xa1] sm:$0x1] %vm1785, 0.0
  %1825 = vst.msk [vmem:[#allocation2 + $0xb9] sm:$0x1] %vm1785, 0.0
  %1826 = vst.msk [vmem:[#allocation2 + $0xd1] sm:$0x1] %vm1785, 0.0
  %1827 = vst.msk [vmem:[#allocation2 + $0xe9] sm:$0x1] %vm1785, 0.0
  %1828 = vst.msk [vmem:[#allocation2 + $0x101] sm:$0x1] %vm1785, 0.0
  %1829 = vst.msk [vmem:[#allocation2 + $0x119] sm:$0x1] %vm1785, 0.0
  %1830 = vst.msk [vmem:[#allocation2 + $0x131] sm:$0x1] %vm1785, 0.0
  %1831 = vst.msk [vmem:[#allocation2 + $0x149] sm:$0x1] %vm1785, 0.0
  %1832 = vst.msk [vmem:[#allocation2 + $0x161] sm:$0x1] %vm1785, 0.0
  %1833 = vst.msk [vmem:[#allocation2 + $0x179] sm:$0x1] %vm1785, 0.0
  %1834 = vst.msk [vmem:[#allocation2 + $0x191] sm:$0x1] %vm1785, 0.0
  %1835 = vst.msk [vmem:[#allocation2 + $0x1a9] sm:$0x1] %vm1785, 0.0
  %1836 = vst.msk [vmem:[#allocation2 + $0x1c1] sm:$0x1] %vm1785, 0.0
  %1837 = vst.msk [vmem:[#allocation2 + $0x1d9] sm:$0x1] %vm1785, 0.0
  %1838 = vst.msk [vmem:[#allocation2 + $0x1f1] sm:$0x1] %vm1785, 0.0
  %1839 = vst.msk [vmem:[#allocation2 + $0x209] sm:$0x1] %vm1785, 0.0
  %1840 = vst.msk [vmem:[#allocation2 + $0x221] sm:$0x1] %vm1785, 0.0
  %1841 = vst.msk [vmem:[#allocation2 + $0x239] sm:$0x1] %vm1785, 0.0
  %1842 = vst.msk [vmem:[#allocation2 + $0x251] sm:$0x1] %vm1785, 0.0
  %1843 = vst.msk [vmem:[#allocation2 + $0x269] sm:$0x1] %vm1785, 0.0
  %1844 = vst.msk [vmem:[#allocation2 + $0x281] sm:$0x1] %vm1785, 0.0
  %1845 = vst.msk [vmem:[#allocation2 + $0x299] sm:$0x1] %vm1785, 0.0
  %1846 = vst.msk [vmem:[#allocation2 + $0x2b1] sm:$0x1] %vm1785, 0.0
  %1847 = vst.msk [vmem:[#allocation2 + $0x2c9] sm:$0x1] %vm1785, 0.0
  %1848 = vst.msk [vmem:[#allocation2 + $0x2e1] sm:$0x1] %vm1785, 0.0
  %1849 = vst.msk [vmem:[#allocation2 + $0x2f9] sm:$0x1] %vm1785, 0.0
  %vm1850 = vcmask 261120
  %1851 = vst.msk [vmem:[#allocation2 + $0x1] sm:$0xff] %vm1850, %v1069
  %1852 = vst.msk [vmem:[#allocation2 + $0x9] sm:$0xff] %vm1850, %v1070
  %1853 = vst.msk [vmem:[#allocation2 + $0x19] sm:$0xff] %vm1850, %v1071
  %1854 = vst.msk [vmem:[#allocation2 + $0x21] sm:$0xff] %vm1850, %v1072
  %1855 = vst.msk [vmem:[#allocation2 + $0x31] sm:$0xff] %vm1850, %v1073
  %1856 = vst.msk [vmem:[#allocation2 + $0x39] sm:$0xff] %vm1850, %v1074
  %1857 = vst.msk [vmem:[#allocation2 + $0x49] sm:$0xff] %vm1850, %v1075
  %1858 = vst.msk [vmem:[#allocation2 + $0x51] sm:$0xff] %vm1850, %v1076
  %1859 = vst.msk [vmem:[#allocation2 + $0x61] sm:$0xff] %vm1850, %v1077
  %1860 = vst.msk [vmem:[#allocation2 + $0x69] sm:$0xff] %vm1850, %v1078
  %1861 = vst.msk [vmem:[#allocation2 + $0x79] sm:$0xff] %vm1850, %v1079
  %1862 = vst.msk [vmem:[#allocation2 + $0x81] sm:$0xff] %vm1850, %v1080
  %1863 = vst.msk [vmem:[#allocation2 + $0x91] sm:$0xff] %vm1850, %v1081
  %1864 = vst.msk [vmem:[#allocation2 + $0x99] sm:$0xff] %vm1850, %v1082
  %1865 = vst.msk [vmem:[#allocation2 + $0xa9] sm:$0xff] %vm1850, %v1083
  %1866 = vst.msk [vmem:[#allocation2 + $0xb1] sm:$0xff] %vm1850, %v1084
  %1867 = vst.msk [vmem:[#allocation2 + $0xc1] sm:$0xff] %vm1850, %v1085
  %1868 = vst.msk [vmem:[#allocation2 + $0xc9] sm:$0xff] %vm1850, %v1086
  %1869 = vst.msk [vmem:[#allocation2 + $0xd9] sm:$0xff] %vm1850, %v1087
  %1870 = vst.msk [vmem:[#allocation2 + $0xe1] sm:$0xff] %vm1850, %v1088
  %1871 = vst.msk [vmem:[#allocation2 + $0xf1] sm:$0xff] %vm1850, %v1089
  %1872 = vst.msk [vmem:[#allocation2 + $0xf9] sm:$0xff] %vm1850, %v1090
  %1873 = vst.msk [vmem:[#allocation2 + $0x109] sm:$0xff] %vm1850, %v1091
  %1874 = vst.msk [vmem:[#allocation2 + $0x111] sm:$0xff] %vm1850, %v1092
  %1875 = vst.msk [vmem:[#allocation2 + $0x121] sm:$0xff] %vm1850, %v1093
  %1876 = vst.msk [vmem:[#allocation2 + $0x129] sm:$0xff] %vm1850, %v1094
  %1877 = vst.msk [vmem:[#allocation2 + $0x139] sm:$0xff] %vm1850, %v1095
  %1878 = vst.msk [vmem:[#allocation2 + $0x141] sm:$0xff] %vm1850, %v1096
  %1879 = vst.msk [vmem:[#allocation2 + $0x151] sm:$0xff] %vm1850, %v1097
  %1880 = vst.msk [vmem:[#allocation2 + $0x159] sm:$0xff] %vm1850, %v1098
  %1881 = vst.msk [vmem:[#allocation2 + $0x169] sm:$0xff] %vm1850, %v1099
  %1882 = vst.msk [vmem:[#allocation2 + $0x171] sm:$0xff] %vm1850, %v1100
  %1883 = vst.msk [vmem:[#allocation2 + $0x181] sm:$0xff] %vm1850, %v1101
  %1884 = vst.msk [vmem:[#allocation2 + $0x189] sm:$0xff] %vm1850, %v1102
  %1885 = vst.msk [vmem:[#allocation2 + $0x199] sm:$0xff] %vm1850, %v1103
  %1886 = vst.msk [vmem:[#allocation2 + $0x1a1] sm:$0xff] %vm1850, %v1104
  %1887 = vst.msk [vmem:[#allocation2 + $0x1b1] sm:$0xff] %vm1850, %v1105
  %1888 = vst.msk [vmem:[#allocation2 + $0x1b9] sm:$0xff] %vm1850, %v1106
  %1889 = vst.msk [vmem:[#allocation2 + $0x1c9] sm:$0xff] %vm1850, %v1107
  %1890 = vst.msk [vmem:[#allocation2 + $0x1d1] sm:$0xff] %vm1850, %v1108
  %1891 = vst.msk [vmem:[#allocation2 + $0x1e1] sm:$0xff] %vm1850, %v1109
  %1892 = vst.msk [vmem:[#allocation2 + $0x1e9] sm:$0xff] %vm1850, %v1110
  %1893 = vst.msk [vmem:[#allocation2 + $0x1f9] sm:$0xff] %vm1850, %v1111
  %1894 = vst.msk [vmem:[#allocation2 + $0x201] sm:$0xff] %vm1850, %v1112
  %1895 = vst.msk [vmem:[#allocation2 + $0x211] sm:$0xff] %vm1850, %v1113
  %1896 = vst.msk [vmem:[#allocation2 + $0x219] sm:$0xff] %vm1850, %v1114
  %1897 = vst.msk [vmem:[#allocation2 + $0x229] sm:$0xff] %vm1850, %v1115
  %1898 = vst.msk [vmem:[#allocation2 + $0x231] sm:$0xff] %vm1850, %v1116
  %1899 = vst.msk [vmem:[#allocation2 + $0x241] sm:$0xff] %vm1850, %v1117
  %1900 = vst.msk [vmem:[#allocation2 + $0x249] sm:$0xff] %vm1850, %v1118
  %1901 = vst.msk [vmem:[#allocation2 + $0x259] sm:$0xff] %vm1850, %v1119
  %1902 = vst.msk [vmem:[#allocation2 + $0x261] sm:$0xff] %vm1850, %v1120
  %1903 = vst.msk [vmem:[#allocation2 + $0x271] sm:$0xff] %vm1850, %v1121
  %1904 = vst.msk [vmem:[#allocation2 + $0x279] sm:$0xff] %vm1850, %v1122
  %1905 = vst.msk [vmem:[#allocation2 + $0x289] sm:$0xff] %vm1850, %v1123
  %1906 = vst.msk [vmem:[#allocation2 + $0x291] sm:$0xff] %vm1850, %v1124
  %1907 = vst.msk [vmem:[#allocation2 + $0x2a1] sm:$0xff] %vm1850, %v1125
  %1908 = vst.msk [vmem:[#allocation2 + $0x2a9] sm:$0xff] %vm1850, %v1126
  %1909 = vst.msk [vmem:[#allocation2 + $0x2b9] sm:$0xff] %vm1850, %v1127
  %1910 = vst.msk [vmem:[#allocation2 + $0x2c1] sm:$0xff] %vm1850, %v1128
  %1911 = vst.msk [vmem:[#allocation2 + $0x2d1] sm:$0xff] %vm1850, %v1129
  %1912 = vst.msk [vmem:[#allocation2 + $0x2d9] sm:$0xff] %vm1850, %v1130
  %1913 = vst.msk [vmem:[#allocation2 + $0x2e9] sm:$0xff] %vm1850, %v1131
  %1914 = vst.msk [vmem:[#allocation2 + $0x2f1] sm:$0xff] %vm1850, %v1132
  %v1915 = vld [vmem:[#allocation2] sm:$0xff]
  %v1916 = vld [vmem:[#allocation2 + $0x8] sm:$0xff]
  %v1917 = vld [vmem:[#allocation2 + $0x18] sm:$0xff]
  %v1918 = vld [vmem:[#allocation2 + $0x20] sm:$0xff]
  %v1919 = vld [vmem:[#allocation2 + $0x30] sm:$0xff]
  %v1920 = vld [vmem:[#allocation2 + $0x38] sm:$0xff]
  %v1921 = vld [vmem:[#allocation2 + $0x48] sm:$0xff]
  %v1922 = vld [vmem:[#allocation2 + $0x50] sm:$0xff]
  %v1923 = vld [vmem:[#allocation2 + $0x60] sm:$0xff]
  %v1924 = vld [vmem:[#allocation2 + $0x68] sm:$0xff]
  %v1925 = vld [vmem:[#allocation2 + $0x78] sm:$0xff]
  %v1926 = vld [vmem:[#allocation2 + $0x80] sm:$0xff]
  %v1927 = vld [vmem:[#allocation2 + $0x90] sm:$0xff]
  %v1928 = vld [vmem:[#allocation2 + $0x98] sm:$0xff]
  %v1929 = vld [vmem:[#allocation2 + $0xa8] sm:$0xff]
  %v1930 = vld [vmem:[#allocation2 + $0xb0] sm:$0xff]
  %v1931 = vld [vmem:[#allocation2 + $0xc0] sm:$0xff]
  %v1932 = vld [vmem:[#allocation2 + $0xc8] sm:$0xff]
  %v1933 = vld [vmem:[#allocation2 + $0xd8] sm:$0xff]
  %v1934 = vld [vmem:[#allocation2 + $0xe0] sm:$0xff]
  %v1935 = vld [vmem:[#allocation2 + $0xf0] sm:$0xff]
  %v1936 = vld [vmem:[#allocation2 + $0xf8] sm:$0xff]
  %v1937 = vld [vmem:[#allocation2 + $0x108] sm:$0xff]
  %v1938 = vld [vmem:[#allocation2 + $0x110] sm:$0xff]
  %v1939 = vld [vmem:[#allocation2 + $0x120] sm:$0xff]
  %v1940 = vld [vmem:[#allocation2 + $0x128] sm:$0xff]
  %v1941 = vld [vmem:[#allocation2 + $0x138] sm:$0xff]
  %v1942 = vld [vmem:[#allocation2 + $0x140] sm:$0xff]
  %v1943 = vld [vmem:[#allocation2 + $0x150] sm:$0xff]
  %v1944 = vld [vmem:[#allocation2 + $0x158] sm:$0xff]
  %v1945 = vld [vmem:[#allocation2 + $0x168] sm:$0xff]
  %v1946 = vld [vmem:[#allocation2 + $0x170] sm:$0xff]
  %v1947 = vld [vmem:[#allocation2 + $0x180] sm:$0xff]
  %v1948 = vld [vmem:[#allocation2 + $0x188] sm:$0xff]
  %v1949 = vld [vmem:[#allocation2 + $0x198] sm:$0xff]
  %v1950 = vld [vmem:[#allocation2 + $0x1a0] sm:$0xff]
  %v1951 = vld [vmem:[#allocation2 + $0x1b0] sm:$0xff]
  %v1952 = vld [vmem:[#allocation2 + $0x1b8] sm:$0xff]
  %v1953 = vld [vmem:[#allocation2 + $0x1c8] sm:$0xff]
  %v1954 = vld [vmem:[#allocation2 + $0x1d0] sm:$0xff]
  %v1955 = vld [vmem:[#allocation2 + $0x1e0] sm:$0xff]
  %v1956 = vld [vmem:[#allocation2 + $0x1e8] sm:$0xff]
  %v1957 = vld [vmem:[#allocation2 + $0x1f8] sm:$0xff]
  %v1958 = vld [vmem:[#allocation2 + $0x200] sm:$0xff]
  %v1959 = vld [vmem:[#allocation2 + $0x210] sm:$0xff]
  %v1960 = vld [vmem:[#allocation2 + $0x218] sm:$0xff]
  %v1961 = vld [vmem:[#allocation2 + $0x228] sm:$0xff]
  %v1962 = vld [vmem:[#allocation2 + $0x230] sm:$0xff]
  %v1963 = vld [vmem:[#allocation2 + $0x240] sm:$0xff]
  %v1964 = vld [vmem:[#allocation2 + $0x248] sm:$0xff]
  %v1965 = vld [vmem:[#allocation2 + $0x258] sm:$0xff]
  %v1966 = vld [vmem:[#allocation2 + $0x260] sm:$0xff]
  %v1967 = vld [vmem:[#allocation2 + $0x270] sm:$0xff]
  %v1968 = vld [vmem:[#allocation2 + $0x278] sm:$0xff]
  %v1969 = vld [vmem:[#allocation2 + $0x288] sm:$0xff]
  %v1970 = vld [vmem:[#allocation2 + $0x290] sm:$0xff]
  %v1971 = vld [vmem:[#allocation2 + $0x2a0] sm:$0xff]
  %v1972 = vld [vmem:[#allocation2 + $0x2a8] sm:$0xff]
  %v1973 = vld [vmem:[#allocation2 + $0x2b8] sm:$0xff]
  %v1974 = vld [vmem:[#allocation2 + $0x2c0] sm:$0xff]
  %v1975 = vld [vmem:[#allocation2 + $0x2d0] sm:$0xff]
  %v1976 = vld [vmem:[#allocation2 + $0x2d8] sm:$0xff]
  %v1977 = vld [vmem:[#allocation2 + $0x2e8] sm:$0xff]
  %v1978 = vld [vmem:[#allocation2 + $0x2f0] sm:$0xff]
  %v1979 = vadd.f32 %v1395, %v1915
  %v1980 = vadd.f32 %v1396, %v1916
  %v1981 = vadd.f32 %v1397, %v1917
  %v1982 = vadd.f32 %v1398, %v1918
  %v1983 = vadd.f32 %v1399, %v1919
  %v1984 = vadd.f32 %v1400, %v1920
  %v1985 = vadd.f32 %v1401, %v1921
  %v1986 = vadd.f32 %v1402, %v1922
  %v1987 = vadd.f32 %v1403, %v1923
  %v1988 = vadd.f32 %v1404, %v1924
  %v1989 = vadd.f32 %v1405, %v1925
  %v1990 = vadd.f32 %v1406, %v1926
  %v1991 = vadd.f32 %v1407, %v1927
  %v1992 = vadd.f32 %v1408, %v1928
  %v1993 = vadd.f32 %v1409, %v1929
  %v1994 = vadd.f32 %v1410, %v1930
  %v1995 = vadd.f32 %v1411, %v1931
  %v1996 = vadd.f32 %v1412, %v1932
  %v1997 = vadd.f32 %v1413, %v1933
  %v1998 = vadd.f32 %v1414, %v1934
  %v1999 = vadd.f32 %v1415, %v1935
  %v2000 = vadd.f32 %v1416, %v1936
  %v2001 = vadd.f32 %v1417, %v1937
  %v2002 = vadd.f32 %v1418, %v1938
  %v2003 = vadd.f32 %v1419, %v1939
  %v2004 = vadd.f32 %v1420, %v1940
  %v2005 = vadd.f32 %v1421, %v1941
  %v2006 = vadd.f32 %v1422, %v1942
  %v2007 = vadd.f32 %v1423, %v1943
  %v2008 = vadd.f32 %v1424, %v1944
  %v2009 = vadd.f32 %v1425, %v1945
  %v2010 = vadd.f32 %v1426, %v1946
  %v2011 = vadd.f32 %v1427, %v1947
  %v2012 = vadd.f32 %v1428, %v1948
  %v2013 = vadd.f32 %v1429, %v1949
  %v2014 = vadd.f32 %v1430, %v1950
  %v2015 = vadd.f32 %v1431, %v1951
  %v2016 = vadd.f32 %v1432, %v1952
  %v2017 = vadd.f32 %v1433, %v1953
  %v2018 = vadd.f32 %v1434, %v1954
  %v2019 = vadd.f32 %v1435, %v1955
  %v2020 = vadd.f32 %v1436, %v1956
  %v2021 = vadd.f32 %v1437, %v1957
  %v2022 = vadd.f32 %v1438, %v1958
  %v2023 = vadd.f32 %v1439, %v1959
  %v2024 = vadd.f32 %v1440, %v1960
  %v2025 = vadd.f32 %v1441, %v1961
  %v2026 = vadd.f32 %v1442, %v1962
  %v2027 = vadd.f32 %v1443, %v1963
  %v2028 = vadd.f32 %v1444, %v1964
  %v2029 = vadd.f32 %v1445, %v1965
  %v2030 = vadd.f32 %v1446, %v1966
  %v2031 = vadd.f32 %v1447, %v1967
  %v2032 = vadd.f32 %v1448, %v1968
  %v2033 = vadd.f32 %v1449, %v1969
  %v2034 = vadd.f32 %v1450, %v1970
  %v2035 = vadd.f32 %v1451, %v1971
  %v2036 = vadd.f32 %v1452, %v1972
  %v2037 = vadd.f32 %v1453, %v1973
  %v2038 = vadd.f32 %v1454, %v1974
  %v2039 = vadd.f32 %v1455, %v1975
  %v2040 = vadd.f32 %v1456, %v1976
  %v2041 = vadd.f32 %v1457, %v1977
  %v2042 = vadd.f32 %v1458, %v1978
  %2043 = vst.msk [vmem:[#allocation2 + $0x1] sm:$0xff] %vm1850, %v1721
  %2044 = vst.msk [vmem:[#allocation2 + $0x9] sm:$0xff] %vm1850, %v1722
  %2045 = vst.msk [vmem:[#allocation2 + $0x19] sm:$0xff] %vm1850, %v1723
  %2046 = vst.msk [vmem:[#allocation2 + $0x21] sm:$0xff] %vm1850, %v1724
  %2047 = vst.msk [vmem:[#allocation2 + $0x31] sm:$0xff] %vm1850, %v1725
  %2048 = vst.msk [vmem:[#allocation2 + $0x39] sm:$0xff] %vm1850, %v1726
  %2049 = vst.msk [vmem:[#allocation2 + $0x49] sm:$0xff] %vm1850, %v1727
  %2050 = vst.msk [vmem:[#allocation2 + $0x51] sm:$0xff] %vm1850, %v1728
  %2051 = vst.msk [vmem:[#allocation2 + $0x61] sm:$0xff] %vm1850, %v1729
  %2052 = vst.msk [vmem:[#allocation2 + $0x69] sm:$0xff] %vm1850, %v1730
  %2053 = vst.msk [vmem:[#allocation2 + $0x79] sm:$0xff] %vm1850, %v1731
  %2054 = vst.msk [vmem:[#allocation2 + $0x81] sm:$0xff] %vm1850, %v1732
  %2055 = vst.msk [vmem:[#allocation2 + $0x91] sm:$0xff] %vm1850, %v1733
  %2056 = vst.msk [vmem:[#allocation2 + $0x99] sm:$0xff] %vm1850, %v1734
  %2057 = vst.msk [vmem:[#allocation2 + $0xa9] sm:$0xff] %vm1850, %v1735
  %2058 = vst.msk [vmem:[#allocation2 + $0xb1] sm:$0xff] %vm1850, %v1736
  %2059 = vst.msk [vmem:[#allocation2 + $0xc1] sm:$0xff] %vm1850, %v1737
  %2060 = vst.msk [vmem:[#allocation2 + $0xc9] sm:$0xff] %vm1850, %v1738
  %2061 = vst.msk [vmem:[#allocation2 + $0xd9] sm:$0xff] %vm1850, %v1739
  %2062 = vst.msk [vmem:[#allocation2 + $0xe1] sm:$0xff] %vm1850, %v1740
  %2063 = vst.msk [vmem:[#allocation2 + $0xf1] sm:$0xff] %vm1850, %v1741
  %2064 = vst.msk [vmem:[#allocation2 + $0xf9] sm:$0xff] %vm1850, %v1742
  %2065 = vst.msk [vmem:[#allocation2 + $0x109] sm:$0xff] %vm1850, %v1743
  %2066 = vst.msk [vmem:[#allocation2 + $0x111] sm:$0xff] %vm1850, %v1744
  %2067 = vst.msk [vmem:[#allocation2 + $0x121] sm:$0xff] %vm1850, %v1745
  %2068 = vst.msk [vmem:[#allocation2 + $0x129] sm:$0xff] %vm1850, %v1746
  %2069 = vst.msk [vmem:[#allocation2 + $0x139] sm:$0xff] %vm1850, %v1747
  %2070 = vst.msk [vmem:[#allocation2 + $0x141] sm:$0xff] %vm1850, %v1748
  %2071 = vst.msk [vmem:[#allocation2 + $0x151] sm:$0xff] %vm1850, %v1749
  %2072 = vst.msk [vmem:[#allocation2 + $0x159] sm:$0xff] %vm1850, %v1750
  %2073 = vst.msk [vmem:[#allocation2 + $0x169] sm:$0xff] %vm1850, %v1751
  %2074 = vst.msk [vmem:[#allocation2 + $0x171] sm:$0xff] %vm1850, %v1752
  %2075 = vst.msk [vmem:[#allocation2 + $0x181] sm:$0xff] %vm1850, %v1753
  %2076 = vst.msk [vmem:[#allocation2 + $0x189] sm:$0xff] %vm1850, %v1754
  %2077 = vst.msk [vmem:[#allocation2 + $0x199] sm:$0xff] %vm1850, %v1755
  %2078 = vst.msk [vmem:[#allocation2 + $0x1a1] sm:$0xff] %vm1850, %v1756
  %2079 = vst.msk [vmem:[#allocation2 + $0x1b1] sm:$0xff] %vm1850, %v1757
  %2080 = vst.msk [vmem:[#allocation2 + $0x1b9] sm:$0xff] %vm1850, %v1758
  %2081 = vst.msk [vmem:[#allocation2 + $0x1c9] sm:$0xff] %vm1850, %v1759
  %2082 = vst.msk [vmem:[#allocation2 + $0x1d1] sm:$0xff] %vm1850, %v1760
  %2083 = vst.msk [vmem:[#allocation2 + $0x1e1] sm:$0xff] %vm1850, %v1761
  %2084 = vst.msk [vmem:[#allocation2 + $0x1e9] sm:$0xff] %vm1850, %v1762
  %2085 = vst.msk [vmem:[#allocation2 + $0x1f9] sm:$0xff] %vm1850, %v1763
  %2086 = vst.msk [vmem:[#allocation2 + $0x201] sm:$0xff] %vm1850, %v1764
  %2087 = vst.msk [vmem:[#allocation2 + $0x211] sm:$0xff] %vm1850, %v1765
  %2088 = vst.msk [vmem:[#allocation2 + $0x219] sm:$0xff] %vm1850, %v1766
  %2089 = vst.msk [vmem:[#allocation2 + $0x229] sm:$0xff] %vm1850, %v1767
  %2090 = vst.msk [vmem:[#allocation2 + $0x231] sm:$0xff] %vm1850, %v1768
  %2091 = vst.msk [vmem:[#allocation2 + $0x241] sm:$0xff] %vm1850, %v1769
  %2092 = vst.msk [vmem:[#allocation2 + $0x249] sm:$0xff] %vm1850, %v1770
  %2093 = vst.msk [vmem:[#allocation2 + $0x259] sm:$0xff] %vm1850, %v1771
  %2094 = vst.msk [vmem:[#allocation2 + $0x261] sm:$0xff] %vm1850, %v1772
  %2095 = vst.msk [vmem:[#allocation2 + $0x271] sm:$0xff] %vm1850, %v1773
  %2096 = vst.msk [vmem:[#allocation2 + $0x279] sm:$0xff] %vm1850, %v1774
  %2097 = vst.msk [vmem:[#allocation2 + $0x289] sm:$0xff] %vm1850, %v1775
  %2098 = vst.msk [vmem:[#allocation2 + $0x291] sm:$0xff] %vm1850, %v1776
  %2099 = vst.msk [vmem:[#allocation2 + $0x2a1] sm:$0xff] %vm1850, %v1777
  %2100 = vst.msk [vmem:[#allocation2 + $0x2a9] sm:$0xff] %vm1850, %v1778
  %2101 = vst.msk [vmem:[#allocation2 + $0x2b9] sm:$0xff] %vm1850, %v1779
  %2102 = vst.msk [vmem:[#allocation2 + $0x2c1] sm:$0xff] %vm1850, %v1780
  %2103 = vst.msk [vmem:[#allocation2 + $0x2d1] sm:$0xff] %vm1850, %v1781
  %2104 = vst.msk [vmem:[#allocation2 + $0x2d9] sm:$0xff] %vm1850, %v1782
  %2105 = vst.msk [vmem:[#allocation2 + $0x2e9] sm:$0xff] %vm1850, %v1783
  %2106 = vst.msk [vmem:[#allocation2 + $0x2f1] sm:$0xff] %vm1850, %v1784
  %v2107 = vld [vmem:[#allocation2 + $0x2] sm:$0xff]
  %v2108 = vld [vmem:[#allocation2 + $0xa] sm:$0xff]
  %v2109 = vld [vmem:[#allocation2 + $0x1a] sm:$0xff]
  %v2110 = vld [vmem:[#allocation2 + $0x22] sm:$0xff]
  %v2111 = vld [vmem:[#allocation2 + $0x32] sm:$0xff]
  %v2112 = vld [vmem:[#allocation2 + $0x3a] sm:$0xff]
  %v2113 = vld [vmem:[#allocation2 + $0x4a] sm:$0xff]
  %v2114 = vld [vmem:[#allocation2 + $0x52] sm:$0xff]
  %v2115 = vld [vmem:[#allocation2 + $0x62] sm:$0xff]
  %v2116 = vld [vmem:[#allocation2 + $0x6a] sm:$0xff]
  %v2117 = vld [vmem:[#allocation2 + $0x7a] sm:$0xff]
  %v2118 = vld [vmem:[#allocation2 + $0x82] sm:$0xff]
  %v2119 = vld [vmem:[#allocation2 + $0x92] sm:$0xff]
  %v2120 = vld [vmem:[#allocation2 + $0x9a] sm:$0xff]
  %v2121 = vld [vmem:[#allocation2 + $0xaa] sm:$0xff]
  %v2122 = vld [vmem:[#allocation2 + $0xb2] sm:$0xff]
  %v2123 = vld [vmem:[#allocation2 + $0xc2] sm:$0xff]
  %v2124 = vld [vmem:[#allocation2 + $0xca] sm:$0xff]
  %v2125 = vld [vmem:[#allocation2 + $0xda] sm:$0xff]
  %v2126 = vld [vmem:[#allocation2 + $0xe2] sm:$0xff]
  %v2127 = vld [vmem:[#allocation2 + $0xf2] sm:$0xff]
  %v2128 = vld [vmem:[#allocation2 + $0xfa] sm:$0xff]
  %v2129 = vld [vmem:[#allocation2 + $0x10a] sm:$0xff]
  %v2130 = vld [vmem:[#allocation2 + $0x112] sm:$0xff]
  %v2131 = vld [vmem:[#allocation2 + $0x122] sm:$0xff]
  %v2132 = vld [vmem:[#allocation2 + $0x12a] sm:$0xff]
  %v2133 = vld [vmem:[#allocation2 + $0x13a] sm:$0xff]
  %v2134 = vld [vmem:[#allocation2 + $0x142] sm:$0xff]
  %v2135 = vld [vmem:[#allocation2 + $0x152] sm:$0xff]
  %v2136 = vld [vmem:[#allocation2 + $0x15a] sm:$0xff]
  %v2137 = vld [vmem:[#allocation2 + $0x16a] sm:$0xff]
  %v2138 = vld [vmem:[#allocation2 + $0x172] sm:$0xff]
  %v2139 = vld [vmem:[#allocation2 + $0x182] sm:$0xff]
  %v2140 = vld [vmem:[#allocation2 + $0x18a] sm:$0xff]
  %v2141 = vld [vmem:[#allocation2 + $0x19a] sm:$0xff]
  %v2142 = vld [vmem:[#allocation2 + $0x1a2] sm:$0xff]
  %v2143 = vld [vmem:[#allocation2 + $0x1b2] sm:$0xff]
  %v2144 = vld [vmem:[#allocation2 + $0x1ba] sm:$0xff]
  %v2145 = vld [vmem:[#allocation2 + $0x1ca] sm:$0xff]
  %v2146 = vld [vmem:[#allocation2 + $0x1d2] sm:$0xff]
  %v2147 = vld [vmem:[#allocation2 + $0x1e2] sm:$0xff]
  %v2148 = vld [vmem:[#allocation2 + $0x1ea] sm:$0xff]
  %v2149 = vld [vmem:[#allocation2 + $0x1fa] sm:$0xff]
  %v2150 = vld [vmem:[#allocation2 + $0x202] sm:$0xff]
  %v2151 = vld [vmem:[#allocation2 + $0x212] sm:$0xff]
  %v2152 = vld [vmem:[#allocation2 + $0x21a] sm:$0xff]
  %v2153 = vld [vmem:[#allocation2 + $0x22a] sm:$0xff]
  %v2154 = vld [vmem:[#allocation2 + $0x232] sm:$0xff]
  %v2155 = vld [vmem:[#allocation2 + $0x242] sm:$0xff]
  %v2156 = vld [vmem:[#allocation2 + $0x24a] sm:$0xff]
  %v2157 = vld [vmem:[#allocation2 + $0x25a] sm:$0xff]
  %v2158 = vld [vmem:[#allocation2 + $0x262] sm:$0xff]
  %v2159 = vld [vmem:[#allocation2 + $0x272] sm:$0xff]
  %v2160 = vld [vmem:[#allocation2 + $0x27a] sm:$0xff]
  %v2161 = vld [vmem:[#allocation2 + $0x28a] sm:$0xff]
  %v2162 = vld [vmem:[#allocation2 + $0x292] sm:$0xff]
  %v2163 = vld [vmem:[#allocation2 + $0x2a2] sm:$0xff]
  %v2164 = vld [vmem:[#allocation2 + $0x2aa] sm:$0xff]
  %v2165 = vld [vmem:[#allocation2 + $0x2ba] sm:$0xff]
  %v2166 = vld [vmem:[#allocation2 + $0x2c2] sm:$0xff]
  %v2167 = vld [vmem:[#allocation2 + $0x2d2] sm:$0xff]
  %v2168 = vld [vmem:[#allocation2 + $0x2da] sm:$0xff]
  %v2169 = vld [vmem:[#allocation2 + $0x2ea] sm:$0xff]
  %v2170 = vld [vmem:[#allocation2 + $0x2f2] sm:$0xff]
  %v2171 = vadd.f32 %v1979, %v2107
  %v2172 = vadd.f32 %v1980, %v2108
  %v2173 = vadd.f32 %v1981, %v2109
  %v2174 = vadd.f32 %v1982, %v2110
  %v2175 = vadd.f32 %v1983, %v2111
  %v2176 = vadd.f32 %v1984, %v2112
  %v2177 = vadd.f32 %v1985, %v2113
  %v2178 = vadd.f32 %v1986, %v2114
  %v2179 = vadd.f32 %v1987, %v2115
  %v2180 = vadd.f32 %v1988, %v2116
  %v2181 = vadd.f32 %v1989, %v2117
  %v2182 = vadd.f32 %v1990, %v2118
  %v2183 = vadd.f32 %v1991, %v2119
  %v2184 = vadd.f32 %v1992, %v2120
  %v2185 = vadd.f32 %v1993, %v2121
  %v2186 = vadd.f32 %v1994, %v2122
  %v2187 = vadd.f32 %v1995, %v2123
  %v2188 = vadd.f32 %v1996, %v2124
  %v2189 = vadd.f32 %v1997, %v2125
  %v2190 = vadd.f32 %v1998, %v2126
  %v2191 = vadd.f32 %v1999, %v2127
  %v2192 = vadd.f32 %v2000, %v2128
  %v2193 = vadd.f32 %v2001, %v2129
  %v2194 = vadd.f32 %v2002, %v2130
  %v2195 = vadd.f32 %v2003, %v2131
  %v2196 = vadd.f32 %v2004, %v2132
  %v2197 = vadd.f32 %v2005, %v2133
  %v2198 = vadd.f32 %v2006, %v2134
  %v2199 = vadd.f32 %v2007, %v2135
  %v2200 = vadd.f32 %v2008, %v2136
  %v2201 = vadd.f32 %v2009, %v2137
  %v2202 = vadd.f32 %v2010, %v2138
  %v2203 = vadd.f32 %v2011, %v2139
  %v2204 = vadd.f32 %v2012, %v2140
  %v2205 = vadd.f32 %v2013, %v2141
  %v2206 = vadd.f32 %v2014, %v2142
  %v2207 = vadd.f32 %v2015, %v2143
  %v2208 = vadd.f32 %v2016, %v2144
  %v2209 = vadd.f32 %v2017, %v2145
  %v2210 = vadd.f32 %v2018, %v2146
  %v2211 = vadd.f32 %v2019, %v2147
  %v2212 = vadd.f32 %v2020, %v2148
  %v2213 = vadd.f32 %v2021, %v2149
  %v2214 = vadd.f32 %v2022, %v2150
  %v2215 = vadd.f32 %v2023, %v2151
  %v2216 = vadd.f32 %v2024, %v2152
  %v2217 = vadd.f32 %v2025, %v2153
  %v2218 = vadd.f32 %v2026, %v2154
  %v2219 = vadd.f32 %v2027, %v2155
  %v2220 = vadd.f32 %v2028, %v2156
  %v2221 = vadd.f32 %v2029, %v2157
  %v2222 = vadd.f32 %v2030, %v2158
  %v2223 = vadd.f32 %v2031, %v2159
  %v2224 = vadd.f32 %v2032, %v2160
  %v2225 = vadd.f32 %v2033, %v2161
  %v2226 = vadd.f32 %v2034, %v2162
  %v2227 = vadd.f32 %v2035, %v2163
  %v2228 = vadd.f32 %v2036, %v2164
  %v2229 = vadd.f32 %v2037, %v2165
  %v2230 = vadd.f32 %v2038, %v2166
  %v2231 = vadd.f32 %v2039, %v2167
  %v2232 = vadd.f32 %v2040, %v2168
  %v2233 = vadd.f32 %v2041, %v2169
  %v2234 = vadd.f32 %v2042, %v2170
  %v2235 = vld [vmem:[%s4] sm:$0x1]
  %v2237 = vlaneseq
  %v2238 = vshrl.u32 %v2237, 7
  %v2239 = vsub.s32 0, %v2238
  %v2240 = vrot.slane %v2235, %v2239
  %v2242 = vadd.f32 %v2171, %v2240
  %v2243 = vadd.f32 %v2172, %v2240
  %v2244 = vadd.f32 %v2173, %v2240
  %v2245 = vadd.f32 %v2174, %v2240
  %v2246 = vadd.f32 %v2175, %v2240
  %v2247 = vadd.f32 %v2176, %v2240
  %v2248 = vadd.f32 %v2177, %v2240
  %v2249 = vadd.f32 %v2178, %v2240
  %v2250 = vadd.f32 %v2179, %v2240
  %v2251 = vadd.f32 %v2180, %v2240
  %v2252 = vadd.f32 %v2181, %v2240
  %v2253 = vadd.f32 %v2182, %v2240
  %v2254 = vadd.f32 %v2183, %v2240
  %v2255 = vadd.f32 %v2184, %v2240
  %v2256 = vadd.f32 %v2185, %v2240
  %v2257 = vadd.f32 %v2186, %v2240
  %v2258 = vadd.f32 %v2187, %v2240
  %v2259 = vadd.f32 %v2188, %v2240
  %v2260 = vadd.f32 %v2189, %v2240
  %v2261 = vadd.f32 %v2190, %v2240
  %v2262 = vadd.f32 %v2191, %v2240
  %v2263 = vadd.f32 %v2192, %v2240
  %v2264 = vadd.f32 %v2193, %v2240
  %v2265 = vadd.f32 %v2194, %v2240
  %v2266 = vadd.f32 %v2195, %v2240
  %v2267 = vadd.f32 %v2196, %v2240
  %v2268 = vadd.f32 %v2197, %v2240
  %v2269 = vadd.f32 %v2198, %v2240
  %v2270 = vadd.f32 %v2199, %v2240
  %v2271 = vadd.f32 %v2200, %v2240
  %v2272 = vadd.f32 %v2201, %v2240
  %v2273 = vadd.f32 %v2202, %v2240
  %v2274 = vadd.f32 %v2203, %v2240
  %v2275 = vadd.f32 %v2204, %v2240
  %v2276 = vadd.f32 %v2205, %v2240
  %v2277 = vadd.f32 %v2206, %v2240
  %v2278 = vadd.f32 %v2207, %v2240
  %v2279 = vadd.f32 %v2208, %v2240
  %v2280 = vadd.f32 %v2209, %v2240
  %v2281 = vadd.f32 %v2210, %v2240
  %v2282 = vadd.f32 %v2211, %v2240
  %v2283 = vadd.f32 %v2212, %v2240
  %v2284 = vadd.f32 %v2213, %v2240
  %v2285 = vadd.f32 %v2214, %v2240
  %v2286 = vadd.f32 %v2215, %v2240
  %v2287 = vadd.f32 %v2216, %v2240
  %v2288 = vadd.f32 %v2217, %v2240
  %v2289 = vadd.f32 %v2218, %v2240
  %v2290 = vadd.f32 %v2219, %v2240
  %v2291 = vadd.f32 %v2220, %v2240
  %v2292 = vadd.f32 %v2221, %v2240
  %v2293 = vadd.f32 %v2222, %v2240
  %v2294 = vadd.f32 %v2223, %v2240
  %v2295 = vadd.f32 %v2224, %v2240
  %v2296 = vadd.f32 %v2225, %v2240
  %v2297 = vadd.f32 %v2226, %v2240
  %v2298 = vadd.f32 %v2227, %v2240
  %v2299 = vadd.f32 %v2228, %v2240
  %v2300 = vadd.f32 %v2229, %v2240
  %v2301 = vadd.f32 %v2230, %v2240
  %v2302 = vadd.f32 %v2231, %v2240
  %v2303 = vadd.f32 %v2232, %v2240
  %v2304 = vadd.f32 %v2233, %v2240
  %v2305 = vadd.f32 %v2234, %v2240
  %v2306 = vmax.f32 %v2242, 0.0
  %v2307 = vmax.f32 %v2243, 0.0
  %v2308 = vmax.f32 %v2244, 0.0
  %v2309 = vmax.f32 %v2245, 0.0
  %v2310 = vmax.f32 %v2246, 0.0
  %v2311 = vmax.f32 %v2247, 0.0
  %v2312 = vmax.f32 %v2248, 0.0
  %v2313 = vmax.f32 %v2249, 0.0
  %v2314 = vmax.f32 %v2250, 0.0
  %v2315 = vmax.f32 %v2251, 0.0
  %v2316 = vmax.f32 %v2252, 0.0
  %v2317 = vmax.f32 %v2253, 0.0
  %v2318 = vmax.f32 %v2254, 0.0
  %v2319 = vmax.f32 %v2255, 0.0
  %v2320 = vmax.f32 %v2256, 0.0
  %v2321 = vmax.f32 %v2257, 0.0
  %v2322 = vmax.f32 %v2258, 0.0
  %v2323 = vmax.f32 %v2259, 0.0
  %v2324 = vmax.f32 %v2260, 0.0
  %v2325 = vmax.f32 %v2261, 0.0
  %v2326 = vmax.f32 %v2262, 0.0
  %v2327 = vmax.f32 %v2263, 0.0
  %v2328 = vmax.f32 %v2264, 0.0
  %v2329 = vmax.f32 %v2265, 0.0
  %v2330 = vmax.f32 %v2266, 0.0
  %v2331 = vmax.f32 %v2267, 0.0
  %v2332 = vmax.f32 %v2268, 0.0
  %v2333 = vmax.f32 %v2269, 0.0
  %v2334 = vmax.f32 %v2270, 0.0
  %v2335 = vmax.f32 %v2271, 0.0
  %v2336 = vmax.f32 %v2272, 0.0
  %v2337 = vmax.f32 %v2273, 0.0
  %v2338 = vmax.f32 %v2274, 0.0
  %v2339 = vmax.f32 %v2275, 0.0
  %v2340 = vmax.f32 %v2276, 0.0
  %v2341 = vmax.f32 %v2277, 0.0
  %v2342 = vmax.f32 %v2278, 0.0
  %v2343 = vmax.f32 %v2279, 0.0
  %v2344 = vmax.f32 %v2280, 0.0
  %v2345 = vmax.f32 %v2281, 0.0
  %v2346 = vmax.f32 %v2282, 0.0
  %v2347 = vmax.f32 %v2283, 0.0
  %v2348 = vmax.f32 %v2284, 0.0
  %v2349 = vmax.f32 %v2285, 0.0
  %v2350 = vmax.f32 %v2286, 0.0
  %v2351 = vmax.f32 %v2287, 0.0
  %v2352 = vmax.f32 %v2288, 0.0
  %v2353 = vmax.f32 %v2289, 0.0
  %v2354 = vmax.f32 %v2290, 0.0
  %v2355 = vmax.f32 %v2291, 0.0
  %v2356 = vmax.f32 %v2292, 0.0
  %v2357 = vmax.f32 %v2293, 0.0
  %v2358 = vmax.f32 %v2294, 0.0
  %v2359 = vmax.f32 %v2295, 0.0
  %v2360 = vmax.f32 %v2296, 0.0
  %v2361 = vmax.f32 %v2297, 0.0
  %v2362 = vmax.f32 %v2298, 0.0
  %v2363 = vmax.f32 %v2299, 0.0
  %v2364 = vmax.f32 %v2300, 0.0
  %v2365 = vmax.f32 %v2301, 0.0
  %v2366 = vmax.f32 %v2302, 0.0
  %v2367 = vmax.f32 %v2303, 0.0
  %v2368 = vmax.f32 %v2304, 0.0
  %v2369 = vmax.f32 %v2305, 0.0
  %v2370 = vmin.f32 %v2306, 6.0
  %v2371 = vmin.f32 %v2307, 6.0
  %v2372 = vmin.f32 %v2308, 6.0
  %v2373 = vmin.f32 %v2309, 6.0
  %v2374 = vmin.f32 %v2310, 6.0
  %v2375 = vmin.f32 %v2311, 6.0
  %v2376 = vmin.f32 %v2312, 6.0
  %v2377 = vmin.f32 %v2313, 6.0
  %v2378 = vmin.f32 %v2314, 6.0
  %v2379 = vmin.f32 %v2315, 6.0
  %v2380 = vmin.f32 %v2316, 6.0
  %v2381 = vmin.f32 %v2317, 6.0
  %v2382 = vmin.f32 %v2318, 6.0
  %v2383 = vmin.f32 %v2319, 6.0
  %v2384 = vmin.f32 %v2320, 6.0
  %v2385 = vmin.f32 %v2321, 6.0
  %v2386 = vmin.f32 %v2322, 6.0
  %v2387 = vmin.f32 %v2323, 6.0
  %v2388 = vmin.f32 %v2324, 6.0
  %v2389 = vmin.f32 %v2325, 6.0
  %v2390 = vmin.f32 %v2326, 6.0
  %v2391 = vmin.f32 %v2327, 6.0
  %v2392 = vmin.f32 %v2328, 6.0
  %v2393 = vmin.f32 %v2329, 6.0
  %v2394 = vmin.f32 %v2330, 6.0
  %v2395 = vmin.f32 %v2331, 6.0
  %v2396 = vmin.f32 %v2332, 6.0
  %v2397 = vmin.f32 %v2333, 6.0
  %v2398 = vmin.f32 %v2334, 6.0
  %v2399 = vmin.f32 %v2335, 6.0
  %v2400 = vmin.f32 %v2336, 6.0
  %v2401 = vmin.f32 %v2337, 6.0
  %v2402 = vmin.f32 %v2338, 6.0
  %v2403 = vmin.f32 %v2339, 6.0
  %v2404 = vmin.f32 %v2340, 6.0
  %v2405 = vmin.f32 %v2341, 6.0
  %v2406 = vmin.f32 %v2342, 6.0
  %v2407 = vmin.f32 %v2343, 6.0
  %v2408 = vmin.f32 %v2344, 6.0
  %v2409 = vmin.f32 %v2345, 6.0
  %v2410 = vmin.f32 %v2346, 6.0
  %v2411 = vmin.f32 %v2347, 6.0
  %v2412 = vmin.f32 %v2348, 6.0
  %v2413 = vmin.f32 %v2349, 6.0
  %v2414 = vmin.f32 %v2350, 6.0
  %v2415 = vmin.f32 %v2351, 6.0
  %v2416 = vmin.f32 %v2352, 6.0
  %v2417 = vmin.f32 %v2353, 6.0
  %v2418 = vmin.f32 %v2354, 6.0
  %v2419 = vmin.f32 %v2355, 6.0
  %v2420 = vmin.f32 %v2356, 6.0
  %v2421 = vmin.f32 %v2357, 6.0
  %v2422 = vmin.f32 %v2358, 6.0
  %v2423 = vmin.f32 %v2359, 6.0
  %v2424 = vmin.f32 %v2360, 6.0
  %v2425 = vmin.f32 %v2361, 6.0
  %v2426 = vmin.f32 %v2362, 6.0
  %v2427 = vmin.f32 %v2363, 6.0
  %v2428 = vmin.f32 %v2364, 6.0
  %v2429 = vmin.f32 %v2365, 6.0
  %v2430 = vmin.f32 %v2366, 6.0
  %v2431 = vmin.f32 %v2367, 6.0
  %v2432 = vmin.f32 %v2368, 6.0
  %v2433 = vmin.f32 %v2369, 6.0
  %v2434 = vld [vmem:[%s5] sm:$0xff]
  %v2435 = vld [vmem:[%s5 + $0x8] sm:$0xff]
  %v2436 = vld [vmem:[%s5 + $0x10] sm:$0xff]
  %v2437 = vld [vmem:[%s5 + $0x18] sm:$0xff]
  %v2438 = vld [vmem:[%s6] sm:$0x1]
  %v2440 = vlaneseq
  %v2441 = vshrl.u32 %v2440, 7
  %v2442 = vsub.s32 0, %v2441
  %v2443 = vrot.slane %v2438, %v2442
  %v2446 = vsel %vm1850, %v2370, 0
  %v2449 = vsel %vm1850, %v2371, 0
  %v2452 = vsel %vm1850, %v2372, 0
  %v2455 = vsel %vm1850, %v2373, 0
  %v2458 = vsel %vm1850, %v2374, 0
  %v2461 = vsel %vm1850, %v2375, 0
  %v2464 = vsel %vm1850, %v2376, 0
  %v2467 = vsel %vm1850, %v2377, 0
  %v2470 = vsel %vm1850, %v2378, 0
  %v2473 = vsel %vm1850, %v2379, 0
  %v2476 = vsel %vm1850, %v2380, 0
  %v2479 = vsel %vm1850, %v2381, 0
  %v2482 = vsel %vm1850, %v2382, 0
  %v2485 = vsel %vm1850, %v2383, 0
  %v2488 = vsel %vm1850, %v2384, 0
  %v2491 = vsel %vm1850, %v2385, 0
  %v2494 = vsel %vm1850, %v2386, 0
  %v2497 = vsel %vm1850, %v2387, 0
  %v2500 = vsel %vm1850, %v2388, 0
  %v2503 = vsel %vm1850, %v2389, 0
  %v2506 = vsel %vm1850, %v2390, 0
  %v2509 = vsel %vm1850, %v2391, 0
  %v2512 = vsel %vm1850, %v2392, 0
  %v2515 = vsel %vm1850, %v2393, 0
  %v2518 = vsel %vm1850, %v2394, 0
  %v2521 = vsel %vm1850, %v2395, 0
  %v2524 = vsel %vm1850, %v2396, 0
  %v2527 = vsel %vm1850, %v2397, 0
  %v2530 = vsel %vm1850, %v2398, 0
  %v2533 = vsel %vm1850, %v2399, 0
  %v2536 = vsel %vm1850, %v2400, 0
  %v2539 = vsel %vm1850, %v2401, 0
  %v2542 = vsel %vm1850, %v2402, 0
  %v2545 = vsel %vm1850, %v2403, 0
  %v2548 = vsel %vm1850, %v2404, 0
  %v2551 = vsel %vm1850, %v2405, 0
  %v2554 = vsel %vm1850, %v2406, 0
  %v2557 = vsel %vm1850, %v2407, 0
  %v2560 = vsel %vm1850, %v2408, 0
  %v2563 = vsel %vm1850, %v2409, 0
  %v2566 = vsel %vm1850, %v2410, 0
  %v2569 = vsel %vm1850, %v2411, 0
  %v2572 = vsel %vm1850, %v2412, 0
  %v2575 = vsel %vm1850, %v2413, 0
  %v2578 = vsel %vm1850, %v2414, 0
  %v2581 = vsel %vm1850, %v2415, 0
  %v2584 = vsel %vm1850, %v2416, 0
  %v2587 = vsel %vm1850, %v2417, 0
  %v2590 = vsel %vm1850, %v2418, 0
  %v2593 = vsel %vm1850, %v2419, 0
  %v2596 = vsel %vm1850, %v2420, 0
  %v2599 = vsel %vm1850, %v2421, 0
  %v2602 = vsel %vm1850, %v2422, 0
  %v2605 = vsel %vm1850, %v2423, 0
  %v2608 = vsel %vm1850, %v2424, 0
  %v2611 = vsel %vm1850, %v2425, 0
  %v2614 = vsel %vm1850, %v2426, 0
  %v2617 = vsel %vm1850, %v2427, 0
  %v2620 = vsel %vm1850, %v2428, 0
  %v2623 = vsel %vm1850, %v2429, 0
  %v2626 = vsel %vm1850, %v2430, 0
  %v2629 = vsel %vm1850, %v2431, 0
  %v2632 = vsel %vm1850, %v2432, 0
  %v2635 = vsel %vm1850, %v2433, 0
  %2637 = vmatprep.subr.mxu0 0.0
  %2638 = vmatpush1.msra.mxu0 %v2434
  %2639 = vmatprep.subr.mxu0 0.0
  %2640 = vmatpush1.msra.mxu0 %v2435
  %2641 = vmatprep.subr.mxu0 0.0
  %2642 = vmatpush1.msra.mxu0 %v2436
  %2643 = vmatprep.subr.mxu0 0.0
  %2644 = vmatpush1.msra.mxu0 %v2437
  %2645 = vmatprep.subr.mxu0 0.0
  %2646 = vmatpush1.msra.mxu0 0.0
  %2647 = vmatprep.subr.mxu0 0.0
  %2648 = vmatpush1.msra.mxu0 0.0
  %2649 = vmatprep.subr.mxu0 0.0
  %2650 = vmatpush1.msra.mxu0 0.0
  %2651 = vmatprep.subr.mxu0 0.0
  %2652 = vmatpush1.msra.mxu0 0.0
  %2653 = vmatprep.subr.mxu0 0.0
  %2654 = vmatpush1.msra.mxu0 0.0
  %2655 = vmatprep.subr.mxu0 0.0
  %2656 = vmatpush1.msra.mxu0 0.0
  %2657 = vmatprep.subr.mxu0 0.0
  %2658 = vmatpush1.msra.mxu0 0.0
  %2659 = vmatprep.subr.mxu0 0.0
  %2660 = vmatpush1.msra.mxu0 0.0
  %2661 = vmatprep.subr.mxu0 0.0
  %2662 = vmatpush1.msra.mxu0 0.0
  %2663 = vmatprep.subr.mxu0 0.0
  %2664 = vmatpush1.msra.mxu0 0.0
  %2665 = vmatprep.subr.mxu0 0.0
  %2666 = vmatpush1.msra.mxu0 0.0
  %2667 = vmatprep.subr.mxu0 0.0
  %2668 = vmatpush1.msra.mxu0 0.0
  %2669 = vmatprep.subr.mxu0 0.0
  %2670 = vmatpush1.msra.mxu0 0.0
  %2671 = vmatprep.subr.mxu0 0.0
  %2672 = vmatpush1.msra.mxu0 0.0
  %2673 = vmatprep.subr.mxu0 0.0
  %2674 = vmatpush1.msra.mxu0 0.0
  %2675 = vmatprep.subr.mxu0 0.0
  %2676 = vmatpush1.msra.mxu0 0.0
  %2677 = vmatprep.subr.mxu0 0.0
  %2678 = vmatpush1.msra.mxu0 0.0
  %2679 = vmatprep.subr.mxu0 0.0
  %2680 = vmatpush1.msra.mxu0 0.0
  %2681 = vmatprep.subr.mxu0 0.0
  %2682 = vmatpush1.msra.mxu0 0.0
  %2683 = vmatprep.subr.mxu0 0.0
  %2684 = vmatpush1.msra.mxu0 0.0
  %2685 = vmatprep.subr.mxu0 0.0
  %2686 = vmatpush1.msra.mxu0 0.0
  %2687 = vmatprep.subr.mxu0 0.0
  %2688 = vmatpush1.msra.mxu0 0.0
  %2689 = vmatprep.subr.mxu0 0.0
  %2690 = vmatpush1.msra.mxu0 0.0
  %2691 = vmatprep.subr.mxu0 0.0
  %2692 = vmatpush1.msra.mxu0 0.0
  %2693 = vmatprep.subr.mxu0 0.0
  %2694 = vmatpush1.msra.mxu0 0.0
  %2695 = vmatprep.subr.mxu0 0.0
  %2696 = vmatpush1.msra.mxu0 0.0
  %2697 = vmatprep.subr.mxu0 0.0
  %2698 = vmatpush1.msra.mxu0 0.0
  %2699 = vmatprep.subr.mxu0 0.0
  %2700 = vmatpush1.msra.mxu0 0.0
  %2701 = vmatprep.mubr.f32.mxu0 0.0
  %2702 = vmatmul.mubr.f32.gmra.mrb[0].mxu0 %v2446
  %v2703 = vpop.f32.mrb[0].mxu0
  %v2704 = vadd.f32 %v2443, %v2703
  %v2705 = vpop.f32.mrb[0].mxu0
  %2706 = vmatprep.mubr.f32.mxu0 0.0
  %2707 = vmatmul.mubr.f32.gmra.mrb[0].mxu0 %v2449
  %v2708 = vpop.f32.mrb[0].mxu0
  %v2709 = vadd.f32 %v2443, %v2708
  %v2710 = vpop.f32.mrb[0].mxu0
  %2711 = vmatprep.mubr.f32.mxu0 0.0
  %2712 = vmatmul.mubr.f32.gmra.mrb[0].mxu0 %v2452
  %v2713 = vpop.f32.mrb[0].mxu0
  %v2714 = vadd.f32 %v2443, %v2713
  %v2715 = vpop.f32.mrb[0].mxu0
  %2716 = vmatprep.mubr.f32.mxu0 0.0
  %2717 = vmatmul.mubr.f32.gmra.mrb[0].mxu0 %v2455
  %v2718 = vpop.f32.mrb[0].mxu0
  %v2719 = vadd.f32 %v2443, %v2718
  %v2720 = vpop.f32.mrb[0].mxu0
  %2721 = vmatprep.mubr.f32.mxu0 0.0
  %2722 = vmatmul.mubr.f32.gmra.mrb[0].mxu0 %v2458
  %v2723 = vpop.f32.mrb[0].mxu0
  %v2724 = vadd.f32 %v2443, %v2723
  %v2725 = vpop.f32.mrb[0].mxu0
  %2726 = vmatprep.mubr.f32.mxu0 0.0
  %2727 = vmatmul.mubr.f32.gmra.mrb[0].mxu0 %v2461
  %v2728 = vpop.f32.mrb[0].mxu0
  %v2729 = vadd.f32 %v2443, %v2728
  %v2730 = vpop.f32.mrb[0].mxu0
  %2731 = vmatprep.mubr.f32.mxu0 0.0
  %2732 = vmatmul.mubr.f32.gmra.mrb[0].mxu0 %v2464
  %v2733 = vpop.f32.mrb[0].mxu0
  %v2734 = vadd.f32 %v2443, %v2733
  %v2735 = vpop.f32.mrb[0].mxu0
  %2736 = vmatprep.mubr.f32.mxu0 0.0
  %2737 = vmatmul.mubr.f32.gmra.mrb[0].mxu0 %v2467
  %v2738 = vpop.f32.mrb[0].mxu0
  %v2739 = vadd.f32 %v2443, %v2738
  %v2740 = vpop.f32.mrb[0].mxu0
  %2741 = vmatprep.mubr.f32.mxu0 0.0
  %2742 = vmatmul.mubr.f32.gmra.mrb[0].mxu0 %v2470
  %v2743 = vpop.f32.mrb[0].mxu0
  %v2744 = vadd.f32 %v2443, %v2743
  %v2745 = vpop.f32.mrb[0].mxu0
  %2746 = vmatprep.mubr.f32.mxu0 0.0
  %2747 = vmatmul.mubr.f32.gmra.mrb[0].mxu0 %v2473
  %v2748 = vpop.f32.mrb[0].mxu0
  %v2749 = vadd.f32 %v2443, %v2748
  %v2750 = vpop.f32.mrb[0].mxu0
  %2751 = vmatprep.mubr.f32.mxu0 0.0
  %2752 = vmatmul.mubr.f32.gmra.mrb[0].mxu0 %v2476
  %v2753 = vpop.f32.mrb[0].mxu0
  %v2754 = vadd.f32 %v2443, %v2753
  %v2755 = vpop.f32.mrb[0].mxu0
  %2756 = vmatprep.mubr.f32.mxu0 0.0
  %2757 = vmatmul.mubr.f32.gmra.mrb[0].mxu0 %v2479
  %v2758 = vpop.f32.mrb[0].mxu0
  %v2759 = vadd.f32 %v2443, %v2758
  %v2760 = vpop.f32.mrb[0].mxu0
  %2761 = vmatprep.mubr.f32.mxu0 0.0
  %2762 = vmatmul.mubr.f32.gmra.mrb[0].mxu0 %v2482
  %v2763 = vpop.f32.mrb[0].mxu0
  %v2764 = vadd.f32 %v2443, %v2763
  %v2765 = vpop.f32.mrb[0].mxu0
  %2766 = vmatprep.mubr.f32.mxu0 0.0
  %2767 = vmatmul.mubr.f32.gmra.mrb[0].mxu0 %v2485
  %v2768 = vpop.f32.mrb[0].mxu0
  %v2769 = vadd.f32 %v2443, %v2768
  %v2770 = vpop.f32.mrb[0].mxu0
  %2771 = vmatprep.mubr.f32.mxu0 0.0
  %2772 = vmatmul.mubr.f32.gmra.mrb[0].mxu0 %v2488
  %v2773 = vpop.f32.mrb[0].mxu0
  %v2774 = vadd.f32 %v2443, %v2773
  %v2775 = vpop.f32.mrb[0].mxu0
  %2776 = vmatprep.mubr.f32.mxu0 0.0
  %2777 = vmatmul.mubr.f32.gmra.mrb[0].mxu0 %v2491
  %v2778 = vpop.f32.mrb[0].mxu0
  %v2779 = vadd.f32 %v2443, %v2778
  %v2780 = vpop.f32.mrb[0].mxu0
  %2781 = vmatprep.mubr.f32.mxu0 0.0
  %2782 = vmatmul.mubr.f32.gmra.mrb[0].mxu0 %v2494
  %v2783 = vpop.f32.mrb[0].mxu0
  %v2784 = vadd.f32 %v2443, %v2783
  %v2785 = vpop.f32.mrb[0].mxu0
  %2786 = vmatprep.mubr.f32.mxu0 0.0
  %2787 = vmatmul.mubr.f32.gmra.mrb[0].mxu0 %v2497
  %v2788 = vpop.f32.mrb[0].mxu0
  %v2789 = vadd.f32 %v2443, %v2788
  %v2790 = vpop.f32.mrb[0].mxu0
  %2791 = vmatprep.mubr.f32.mxu0 0.0
  %2792 = vmatmul.mubr.f32.gmra.mrb[0].mxu0 %v2500
  %v2793 = vpop.f32.mrb[0].mxu0
  %v2794 = vadd.f32 %v2443, %v2793
  %v2795 = vpop.f32.mrb[0].mxu0
  %2796 = vmatprep.mubr.f32.mxu0 0.0
  %2797 = vmatmul.mubr.f32.gmra.mrb[0].mxu0 %v2503
  %v2798 = vpop.f32.mrb[0].mxu0
  %v2799 = vadd.f32 %v2443, %v2798
  %v2800 = vpop.f32.mrb[0].mxu0
  %2801 = vmatprep.mubr.f32.mxu0 0.0
  %2802 = vmatmul.mubr.f32.gmra.mrb[0].mxu0 %v2506
  %v2803 = vpop.f32.mrb[0].mxu0
  %v2804 = vadd.f32 %v2443, %v2803
  %v2805 = vpop.f32.mrb[0].mxu0
  %2806 = vmatprep.mubr.f32.mxu0 0.0
  %2807 = vmatmul.mubr.f32.gmra.mrb[0].mxu0 %v2509
  %v2808 = vpop.f32.mrb[0].mxu0
  %v2809 = vadd.f32 %v2443, %v2808
  %v2810 = vpop.f32.mrb[0].mxu0
  %2811 = vmatprep.mubr.f32.mxu0 0.0
  %2812 = vmatmul.mubr.f32.gmra.mrb[0].mxu0 %v2512
  %v2813 = vpop.f32.mrb[0].mxu0
  %v2814 = vadd.f32 %v2443, %v2813
  %v2815 = vpop.f32.mrb[0].mxu0
  %2816 = vmatprep.mubr.f32.mxu0 0.0
  %2817 = vmatmul.mubr.f32.gmra.mrb[0].mxu0 %v2515
  %v2818 = vpop.f32.mrb[0].mxu0
  %v2819 = vadd.f32 %v2443, %v2818
  %v2820 = vpop.f32.mrb[0].mxu0
  %2821 = vmatprep.mubr.f32.mxu0 0.0
  %2822 = vmatmul.mubr.f32.gmra.mrb[0].mxu0 %v2518
  %v2823 = vpop.f32.mrb[0].mxu0
  %v2824 = vadd.f32 %v2443, %v2823
  %v2825 = vpop.f32.mrb[0].mxu0
  %2826 = vmatprep.mubr.f32.mxu0 0.0
  %2827 = vmatmul.mubr.f32.gmra.mrb[0].mxu0 %v2521
  %v2828 = vpop.f32.mrb[0].mxu0
  %v2829 = vadd.f32 %v2443, %v2828
  %v2830 = vpop.f32.mrb[0].mxu0
  %2831 = vmatprep.mubr.f32.mxu0 0.0
  %2832 = vmatmul.mubr.f32.gmra.mrb[0].mxu0 %v2524
  %v2833 = vpop.f32.mrb[0].mxu0
  %v2834 = vadd.f32 %v2443, %v2833
  %v2835 = vpop.f32.mrb[0].mxu0
  %2836 = vmatprep.mubr.f32.mxu0 0.0
  %2837 = vmatmul.mubr.f32.gmra.mrb[0].mxu0 %v2527
  %v2838 = vpop.f32.mrb[0].mxu0
  %v2839 = vadd.f32 %v2443, %v2838
  %v2840 = vpop.f32.mrb[0].mxu0
  %2841 = vmatprep.mubr.f32.mxu0 0.0
  %2842 = vmatmul.mubr.f32.gmra.mrb[0].mxu0 %v2530
  %v2843 = vpop.f32.mrb[0].mxu0
  %v2844 = vadd.f32 %v2443, %v2843
  %v2845 = vpop.f32.mrb[0].mxu0
  %2846 = vmatprep.mubr.f32.mxu0 0.0
  %2847 = vmatmul.mubr.f32.gmra.mrb[0].mxu0 %v2533
  %v2848 = vpop.f32.mrb[0].mxu0
  %v2849 = vadd.f32 %v2443, %v2848
  %v2850 = vpop.f32.mrb[0].mxu0
  %2851 = vmatprep.mubr.f32.mxu0 0.0
  %2852 = vmatmul.mubr.f32.gmra.mrb[0].mxu0 %v2536
  %v2853 = vpop.f32.mrb[0].mxu0
  %v2854 = vadd.f32 %v2443, %v2853
  %v2855 = vpop.f32.mrb[0].mxu0
  %2856 = vmatprep.mubr.f32.mxu0 0.0
  %2857 = vmatmul.mubr.f32.gmra.mrb[0].mxu0 %v2539
  %v2858 = vpop.f32.mrb[0].mxu0
  %v2859 = vadd.f32 %v2443, %v2858
  %v2860 = vpop.f32.mrb[0].mxu0
  %2861 = vmatprep.mubr.f32.mxu0 0.0
  %2862 = vmatmul.mubr.f32.gmra.mrb[0].mxu0 %v2542
  %v2863 = vpop.f32.mrb[0].mxu0
  %v2864 = vadd.f32 %v2443, %v2863
  %v2865 = vpop.f32.mrb[0].mxu0
  %2866 = vmatprep.mubr.f32.mxu0 0.0
  %2867 = vmatmul.mubr.f32.gmra.mrb[0].mxu0 %v2545
  %v2868 = vpop.f32.mrb[0].mxu0
  %v2869 = vadd.f32 %v2443, %v2868
  %v2870 = vpop.f32.mrb[0].mxu0
  %2871 = vmatprep.mubr.f32.mxu0 0.0
  %2872 = vmatmul.mubr.f32.gmra.mrb[0].mxu0 %v2548
  %v2873 = vpop.f32.mrb[0].mxu0
  %v2874 = vadd.f32 %v2443, %v2873
  %v2875 = vpop.f32.mrb[0].mxu0
  %2876 = vmatprep.mubr.f32.mxu0 0.0
  %2877 = vmatmul.mubr.f32.gmra.mrb[0].mxu0 %v2551
  %v2878 = vpop.f32.mrb[0].mxu0
  %v2879 = vadd.f32 %v2443, %v2878
  %v2880 = vpop.f32.mrb[0].mxu0
  %2881 = vmatprep.mubr.f32.mxu0 0.0
  %2882 = vmatmul.mubr.f32.gmra.mrb[0].mxu0 %v2554
  %v2883 = vpop.f32.mrb[0].mxu0
  %v2884 = vadd.f32 %v2443, %v2883
  %v2885 = vpop.f32.mrb[0].mxu0
  %2886 = vmatprep.mubr.f32.mxu0 0.0
  %2887 = vmatmul.mubr.f32.gmra.mrb[0].mxu0 %v2557
  %v2888 = vpop.f32.mrb[0].mxu0
  %v2889 = vadd.f32 %v2443, %v2888
  %v2890 = vpop.f32.mrb[0].mxu0
  %2891 = vmatprep.mubr.f32.mxu0 0.0
  %2892 = vmatmul.mubr.f32.gmra.mrb[0].mxu0 %v2560
  %v2893 = vpop.f32.mrb[0].mxu0
  %v2894 = vadd.f32 %v2443, %v2893
  %v2895 = vpop.f32.mrb[0].mxu0
  %2896 = vmatprep.mubr.f32.mxu0 0.0
  %2897 = vmatmul.mubr.f32.gmra.mrb[0].mxu0 %v2563
  %v2898 = vpop.f32.mrb[0].mxu0
  %v2899 = vadd.f32 %v2443, %v2898
  %v2900 = vpop.f32.mrb[0].mxu0
  %2901 = vmatprep.mubr.f32.mxu0 0.0
  %2902 = vmatmul.mubr.f32.gmra.mrb[0].mxu0 %v2566
  %v2903 = vpop.f32.mrb[0].mxu0
  %v2904 = vadd.f32 %v2443, %v2903
  %v2905 = vpop.f32.mrb[0].mxu0
  %2906 = vmatprep.mubr.f32.mxu0 0.0
  %2907 = vmatmul.mubr.f32.gmra.mrb[0].mxu0 %v2569
  %v2908 = vpop.f32.mrb[0].mxu0
  %v2909 = vadd.f32 %v2443, %v2908
  %v2910 = vpop.f32.mrb[0].mxu0
  %2911 = vmatprep.mubr.f32.mxu0 0.0
  %2912 = vmatmul.mubr.f32.gmra.mrb[0].mxu0 %v2572
  %v2913 = vpop.f32.mrb[0].mxu0
  %v2914 = vadd.f32 %v2443, %v2913
  %v2915 = vpop.f32.mrb[0].mxu0
  %2916 = vmatprep.mubr.f32.mxu0 0.0
  %2917 = vmatmul.mubr.f32.gmra.mrb[0].mxu0 %v2575
  %v2918 = vpop.f32.mrb[0].mxu0
  %v2919 = vadd.f32 %v2443, %v2918
  %v2920 = vpop.f32.mrb[0].mxu0
  %2921 = vmatprep.mubr.f32.mxu0 0.0
  %2922 = vmatmul.mubr.f32.gmra.mrb[0].mxu0 %v2578
  %v2923 = vpop.f32.mrb[0].mxu0
  %v2924 = vadd.f32 %v2443, %v2923
  %v2925 = vpop.f32.mrb[0].mxu0
  %2926 = vmatprep.mubr.f32.mxu0 0.0
  %2927 = vmatmul.mubr.f32.gmra.mrb[0].mxu0 %v2581
  %v2928 = vpop.f32.mrb[0].mxu0
  %v2929 = vadd.f32 %v2443, %v2928
  %v2930 = vpop.f32.mrb[0].mxu0
  %2931 = vmatprep.mubr.f32.mxu0 0.0
  %2932 = vmatmul.mubr.f32.gmra.mrb[0].mxu0 %v2584
  %v2933 = vpop.f32.mrb[0].mxu0
  %v2934 = vadd.f32 %v2443, %v2933
  %v2935 = vpop.f32.mrb[0].mxu0
  %2936 = vmatprep.mubr.f32.mxu0 0.0
  %2937 = vmatmul.mubr.f32.gmra.mrb[0].mxu0 %v2587
  %v2938 = vpop.f32.mrb[0].mxu0
  %v2939 = vadd.f32 %v2443, %v2938
  %v2940 = vpop.f32.mrb[0].mxu0
  %2941 = vmatprep.mubr.f32.mxu0 0.0
  %2942 = vmatmul.mubr.f32.gmra.mrb[0].mxu0 %v2590
  %v2943 = vpop.f32.mrb[0].mxu0
  %v2944 = vadd.f32 %v2443, %v2943
  %v2945 = vpop.f32.mrb[0].mxu0
  %2946 = vmatprep.mubr.f32.mxu0 0.0
  %2947 = vmatmul.mubr.f32.gmra.mrb[0].mxu0 %v2593
  %v2948 = vpop.f32.mrb[0].mxu0
  %v2949 = vadd.f32 %v2443, %v2948
  %v2950 = vpop.f32.mrb[0].mxu0
  %2951 = vmatprep.mubr.f32.mxu0 0.0
  %2952 = vmatmul.mubr.f32.gmra.mrb[0].mxu0 %v2596
  %v2953 = vpop.f32.mrb[0].mxu0
  %v2954 = vadd.f32 %v2443, %v2953
  %v2955 = vpop.f32.mrb[0].mxu0
  %2956 = vmatprep.mubr.f32.mxu0 0.0
  %2957 = vmatmul.mubr.f32.gmra.mrb[0].mxu0 %v2599
  %v2958 = vpop.f32.mrb[0].mxu0
  %v2959 = vadd.f32 %v2443, %v2958
  %v2960 = vpop.f32.mrb[0].mxu0
  %2961 = vmatprep.mubr.f32.mxu0 0.0
  %2962 = vmatmul.mubr.f32.gmra.mrb[0].mxu0 %v2602
  %v2963 = vpop.f32.mrb[0].mxu0
  %v2964 = vadd.f32 %v2443, %v2963
  %v2965 = vpop.f32.mrb[0].mxu0
  %2966 = vmatprep.mubr.f32.mxu0 0.0
  %2967 = vmatmul.mubr.f32.gmra.mrb[0].mxu0 %v2605
  %v2968 = vpop.f32.mrb[0].mxu0
  %v2969 = vadd.f32 %v2443, %v2968
  %v2970 = vpop.f32.mrb[0].mxu0
  %2971 = vmatprep.mubr.f32.mxu0 0.0
  %2972 = vmatmul.mubr.f32.gmra.mrb[0].mxu0 %v2608
  %v2973 = vpop.f32.mrb[0].mxu0
  %v2974 = vadd.f32 %v2443, %v2973
  %v2975 = vpop.f32.mrb[0].mxu0
  %2976 = vmatprep.mubr.f32.mxu0 0.0
  %2977 = vmatmul.mubr.f32.gmra.mrb[0].mxu0 %v2611
  %v2978 = vpop.f32.mrb[0].mxu0
  %v2979 = vadd.f32 %v2443, %v2978
  %v2980 = vpop.f32.mrb[0].mxu0
  %2981 = vmatprep.mubr.f32.mxu0 0.0
  %2982 = vmatmul.mubr.f32.gmra.mrb[0].mxu0 %v2614
  %v2983 = vpop.f32.mrb[0].mxu0
  %v2984 = vadd.f32 %v2443, %v2983
  %v2985 = vpop.f32.mrb[0].mxu0
  %2986 = vmatprep.mubr.f32.mxu0 0.0
  %2987 = vmatmul.mubr.f32.gmra.mrb[0].mxu0 %v2617
  %v2988 = vpop.f32.mrb[0].mxu0
  %v2989 = vadd.f32 %v2443, %v2988
  %v2990 = vpop.f32.mrb[0].mxu0
  %2991 = vmatprep.mubr.f32.mxu0 0.0
  %2992 = vmatmul.mubr.f32.gmra.mrb[0].mxu0 %v2620
  %v2993 = vpop.f32.mrb[0].mxu0
  %v2994 = vadd.f32 %v2443, %v2993
  %v2995 = vpop.f32.mrb[0].mxu0
  %2996 = vmatprep.mubr.f32.mxu0 0.0
  %2997 = vmatmul.mubr.f32.gmra.mrb[0].mxu0 %v2623
  %v2998 = vpop.f32.mrb[0].mxu0
  %v2999 = vadd.f32 %v2443, %v2998
  %v3000 = vpop.f32.mrb[0].mxu0
  %3001 = vmatprep.mubr.f32.mxu0 0.0
  %3002 = vmatmul.mubr.f32.gmra.mrb[0].mxu0 %v2626
  %v3003 = vpop.f32.mrb[0].mxu0
  %v3004 = vadd.f32 %v2443, %v3003
  %v3005 = vpop.f32.mrb[0].mxu0
  %3006 = vmatprep.mubr.f32.mxu0 0.0
  %3007 = vmatmul.mubr.f32.gmra.mrb[0].mxu0 %v2629
  %v3008 = vpop.f32.mrb[0].mxu0
  %v3009 = vadd.f32 %v2443, %v3008
  %v3010 = vpop.f32.mrb[0].mxu0
  %3011 = vmatprep.mubr.f32.mxu0 0.0
  %3012 = vmatmul.mubr.f32.gmra.mrb[0].mxu0 %v2632
  %v3013 = vpop.f32.mrb[0].mxu0
  %v3014 = vadd.f32 %v2443, %v3013
  %v3015 = vpop.f32.mrb[0].mxu0
  %3016 = vmatprep.mubr.f32.mxu0 0.0
  %3017 = vmatmul.mubr.f32.gmra.mrb[0].mxu0 %v2635
  %v3018 = vpop.f32.mrb[0].mxu0
  %v3019 = vadd.f32 %v2443, %v3018
  %v3020 = vpop.f32.mrb[0].mxu0
  %3021 = vdwg.mxu0
  %v3022 = vadd.f32 %v2704, %v26
  %v3023 = vadd.f32 %v2709, %v27
  %v3024 = vadd.f32 %v2714, %v28
  %v3025 = vadd.f32 %v2719, %v29
  %v3026 = vadd.f32 %v2724, %v30
  %v3027 = vadd.f32 %v2729, %v31
  %v3028 = vadd.f32 %v2734, %v32
  %v3029 = vadd.f32 %v2739, %v33
  %v3030 = vadd.f32 %v2744, %v34
  %v3031 = vadd.f32 %v2749, %v35
  %v3032 = vadd.f32 %v2754, %v36
  %v3033 = vadd.f32 %v2759, %v37
  %v3034 = vadd.f32 %v2764, %v38
  %v3035 = vadd.f32 %v2769, %v39
  %v3036 = vadd.f32 %v2774, %v40
  %v3037 = vadd.f32 %v2779, %v41
  %v3038 = vadd.f32 %v2784, %v42
  %v3039 = vadd.f32 %v2789, %v43
  %v3040 = vadd.f32 %v2794, %v44
  %v3041 = vadd.f32 %v2799, %v45
  %v3042 = vadd.f32 %v2804, %v46
  %v3043 = vadd.f32 %v2809, %v47
  %v3044 = vadd.f32 %v2814, %v48
  %v3045 = vadd.f32 %v2819, %v49
  %v3046 = vadd.f32 %v2824, %v50
  %v3047 = vadd.f32 %v2829, %v51
  %v3048 = vadd.f32 %v2834, %v52
  %v3049 = vadd.f32 %v2839, %v53
  %v3050 = vadd.f32 %v2844, %v54
  %v3051 = vadd.f32 %v2849, %v55
  %v3052 = vadd.f32 %v2854, %v56
  %v3053 = vadd.f32 %v2859, %v57
  %v3054 = vadd.f32 %v2864, %v58
  %v3055 = vadd.f32 %v2869, %v59
  %v3056 = vadd.f32 %v2874, %v60
  %v3057 = vadd.f32 %v2879, %v61
  %v3058 = vadd.f32 %v2884, %v62
  %v3059 = vadd.f32 %v2889, %v63
  %v3060 = vadd.f32 %v2894, %v64
  %v3061 = vadd.f32 %v2899, %v65
  %v3062 = vadd.f32 %v2904, %v66
  %v3063 = vadd.f32 %v2909, %v67
  %v3064 = vadd.f32 %v2914, %v68
  %v3065 = vadd.f32 %v2919, %v69
  %v3066 = vadd.f32 %v2924, %v70
  %v3067 = vadd.f32 %v2929, %v71
  %v3068 = vadd.f32 %v2934, %v72
  %v3069 = vadd.f32 %v2939, %v73
  %v3070 = vadd.f32 %v2944, %v74
  %v3071 = vadd.f32 %v2949, %v75
  %v3072 = vadd.f32 %v2954, %v76
  %v3073 = vadd.f32 %v2959, %v77
  %v3074 = vadd.f32 %v2964, %v78
  %v3075 = vadd.f32 %v2969, %v79
  %v3076 = vadd.f32 %v2974, %v80
  %v3077 = vadd.f32 %v2979, %v81
  %v3078 = vadd.f32 %v2984, %v82
  %v3079 = vadd.f32 %v2989, %v83
  %v3080 = vadd.f32 %v2994, %v84
  %v3081 = vadd.f32 %v2999, %v85
  %v3082 = vadd.f32 %v3004, %v86
  %v3083 = vadd.f32 %v3009, %v87
  %v3084 = vadd.f32 %v3014, %v88
  %v3085 = vadd.f32 %v3019, %v89
  %3086 = vst.msk [vmem:[%s7] sm:$0xff] %vm98, %v3022
  %3087 = vst.msk [vmem:[%s7 + $0x8] sm:$0xff] %vm98, %v3023
  %3088 = vst.msk [vmem:[%s7 + $0x10] sm:$0xff] %vm98, %v3024
  %3089 = vst.msk [vmem:[%s7 + $0x18] sm:$0xff] %vm98, %v3025
  %3090 = vst.msk [vmem:[%s7 + $0x20] sm:$0xff] %vm98, %v3026
  %3091 = vst.msk [vmem:[%s7 + $0x28] sm:$0xff] %vm98, %v3027
  %3092 = vst.msk [vmem:[%s7 + $0x30] sm:$0xff] %vm98, %v3028
  %3093 = vst.msk [vmem:[%s7 + $0x38] sm:$0xff] %vm98, %v3029
  %3094 = vst.msk [vmem:[%s7 + $0x40] sm:$0xff] %vm98, %v3030
  %3095 = vst.msk [vmem:[%s7 + $0x48] sm:$0xff] %vm98, %v3031
  %3096 = vst.msk [vmem:[%s7 + $0x50] sm:$0xff] %vm98, %v3032
  %3097 = vst.msk [vmem:[%s7 + $0x58] sm:$0xff] %vm98, %v3033
  %3098 = vst.msk [vmem:[%s7 + $0x60] sm:$0xff] %vm98, %v3034
  %3099 = vst.msk [vmem:[%s7 + $0x68] sm:$0xff] %vm98, %v3035
  %3100 = vst.msk [vmem:[%s7 + $0x70] sm:$0xff] %vm98, %v3036
  %3101 = vst.msk [vmem:[%s7 + $0x78] sm:$0xff] %vm98, %v3037
  %3102 = vst.msk [vmem:[%s7 + $0x80] sm:$0xff] %vm98, %v3038
  %3103 = vst.msk [vmem:[%s7 + $0x88] sm:$0xff] %vm98, %v3039
  %3104 = vst.msk [vmem:[%s7 + $0x90] sm:$0xff] %vm98, %v3040
  %3105 = vst.msk [vmem:[%s7 + $0x98] sm:$0xff] %vm98, %v3041
  %3106 = vst.msk [vmem:[%s7 + $0xa0] sm:$0xff] %vm98, %v3042
  %3107 = vst.msk [vmem:[%s7 + $0xa8] sm:$0xff] %vm98, %v3043
  %3108 = vst.msk [vmem:[%s7 + $0xb0] sm:$0xff] %vm98, %v3044
  %3109 = vst.msk [vmem:[%s7 + $0xb8] sm:$0xff] %vm98, %v3045
  %3110 = vst.msk [vmem:[%s7 + $0xc0] sm:$0xff] %vm98, %v3046
  %3111 = vst.msk [vmem:[%s7 + $0xc8] sm:$0xff] %vm98, %v3047
  %3112 = vst.msk [vmem:[%s7 + $0xd0] sm:$0xff] %vm98, %v3048
  %3113 = vst.msk [vmem:[%s7 + $0xd8] sm:$0xff] %vm98, %v3049
  %3114 = vst.msk [vmem:[%s7 + $0xe0] sm:$0xff] %vm98, %v3050
  %3115 = vst.msk [vmem:[%s7 + $0xe8] sm:$0xff] %vm98, %v3051
  %3116 = vst.msk [vmem:[%s7 + $0xf0] sm:$0xff] %vm98, %v3052
  %3117 = vst.msk [vmem:[%s7 + $0xf8] sm:$0xff] %vm98, %v3053
  %3118 = vst.msk [vmem:[%s7 + $0x100] sm:$0xff] %vm98, %v3054
  %3119 = vst.msk [vmem:[%s7 + $0x108] sm:$0xff] %vm98, %v3055
  %3120 = vst.msk [vmem:[%s7 + $0x110] sm:$0xff] %vm98, %v3056
  %3121 = vst.msk [vmem:[%s7 + $0x118] sm:$0xff] %vm98, %v3057
  %3122 = vst.msk [vmem:[%s7 + $0x120] sm:$0xff] %vm98, %v3058
  %3123 = vst.msk [vmem:[%s7 + $0x128] sm:$0xff] %vm98, %v3059
  %3124 = vst.msk [vmem:[%s7 + $0x130] sm:$0xff] %vm98, %v3060
  %3125 = vst.msk [vmem:[%s7 + $0x138] sm:$0xff] %vm98, %v3061
  %3126 = vst.msk [vmem:[%s7 + $0x140] sm:$0xff] %vm98, %v3062
  %3127 = vst.msk [vmem:[%s7 + $0x148] sm:$0xff] %vm98, %v3063
  %3128 = vst.msk [vmem:[%s7 + $0x150] sm:$0xff] %vm98, %v3064
  %3129 = vst.msk [vmem:[%s7 + $0x158] sm:$0xff] %vm98, %v3065
  %3130 = vst.msk [vmem:[%s7 + $0x160] sm:$0xff] %vm98, %v3066
  %3131 = vst.msk [vmem:[%s7 + $0x168] sm:$0xff] %vm98, %v3067
  %3132 = vst.msk [vmem:[%s7 + $0x170] sm:$0xff] %vm98, %v3068
  %3133 = vst.msk [vmem:[%s7 + $0x178] sm:$0xff] %vm98, %v3069
  %3134 = vst.msk [vmem:[%s7 + $0x180] sm:$0xff] %vm98, %v3070
  %3135 = vst.msk [vmem:[%s7 + $0x188] sm:$0xff] %vm98, %v3071
  %3136 = vst.msk [vmem:[%s7 + $0x190] sm:$0xff] %vm98, %v3072
  %3137 = vst.msk [vmem:[%s7 + $0x198] sm:$0xff] %vm98, %v3073
  %3138 = vst.msk [vmem:[%s7 + $0x1a0] sm:$0xff] %vm98, %v3074
  %3139 = vst.msk [vmem:[%s7 + $0x1a8] sm:$0xff] %vm98, %v3075
  %3140 = vst.msk [vmem:[%s7 + $0x1b0] sm:$0xff] %vm98, %v3076
  %3141 = vst.msk [vmem:[%s7 + $0x1b8] sm:$0xff] %vm98, %v3077
  %3142 = vst.msk [vmem:[%s7 + $0x1c0] sm:$0xff] %vm98, %v3078
  %3143 = vst.msk [vmem:[%s7 + $0x1c8] sm:$0xff] %vm98, %v3079
  %3144 = vst.msk [vmem:[%s7 + $0x1d0] sm:$0xff] %vm98, %v3080
  %3145 = vst.msk [vmem:[%s7 + $0x1d8] sm:$0xff] %vm98, %v3081
  %3146 = vst.msk [vmem:[%s7 + $0x1e0] sm:$0xff] %vm98, %v3082
  %3147 = vst.msk [vmem:[%s7 + $0x1e8] sm:$0xff] %vm98, %v3083
  %3148 = vst.msk [vmem:[%s7 + $0x1f0] sm:$0xff] %vm98, %v3084
  %3149 = vst.msk [vmem:[%s7 + $0x1f8] sm:$0xff] %vm98, %v3085
  // Predicated region
  $region30: #{tpu_custom_call.1} parent=0 // pred_check
    _
  $region31: #{tpu_custom_call.1} parent=0 // pred_check_branch
    %3151 = sbr.rel (0) target = $region33
  $region32: #{tpu_custom_call.1} parent=0 // pred_region
    _
  $region33: #{tpu_custom_call.1} parent=0 // pred_fallthru
    _
  // Predicated region
  $region34: #{tpu_custom_call.1} parent=0 // pred_check
    _
  $region35: #{tpu_custom_call.1} parent=0 // pred_check_branch
    %3153 = sbr.rel (0) target = $region37
  $region36: #{tpu_custom_call.1} parent=0 // pred_region
    _
  $region37: #{tpu_custom_call.1} parent=0 // pred_fallthru
    _

</llo_original>
